<compile_context>
chip_gen: v5e
topology: v5e:2x2
jax: 0.10.0
libtpu: 0.0.40
codegen_flags: <defaults>
</compile_context>

<pallas_src>
import math

import jax
import jax.numpy as jnp
from jax.experimental import pallas as pl
from jax.experimental.pallas import tpu as pltpu

EMB = 64        # emb_size
HID = 32        # ConvLSTM hidden dim  (4*HID = 128 gate channels, lane-dense)
KW = 3          # ConvLSTM temporal kernel width (kernel_size=(1,3))
KP = 8          # taps padded 3 -> 8; column KW carries the folded bias (== 1.0)
KH = 9          # globalnet kernel/stride along the electrode axis
EPS = 1e-5
MAX_LEN = 500


# ------------------------------ fused kernel ---------------------------------
def _patch_embed_kernel(p_ref, wc_ref, wg_ref, sh_ref, pe_ref, out_ref, h1_sc):
    # p_ref : (1, Bt*H*W, KP)  im2col gate patches, rows ordered (r, bt, hp, w);
    #                          tap column KW is 1.0 so the gate bias rides the matmul
    # wc_ref: (KP, 128)        ConvLSTM gate weights (+ bias row KW)
    # wg_ref: (KH*HID, EMB)    globalnet conv weights * BN scale, K = r*HID + c
    # sh_ref: (1, EMB)         folded BatchNorm shift
    # pe_ref: (Bt*seq, EMB)    positional encoding, tiled per batch element
    # out_ref: (1, Bt*seq, EMB)
    # h1_sc : (Bt*seq, KH*HID) VMEM scratch: lane-dense K=288 globalnet operand

    # ConvLSTM gate pre-activations: one lane-dense (M, 8) @ (8, 128) matmul,
    # bias folded into the contraction.
    cc = jnp.dot(p_ref[0], wc_ref[...], preferred_element_type=jnp.float32)

    # EUP sigmoid: exp and approximate reciprocal both use the EUP slot.
    sig = lambda v: pl.reciprocal(1.0 + jnp.exp(-v), approx=True)
    gi = sig(cc[:, 0 * HID:1 * HID])           # input gate
    go = sig(cc[:, 2 * HID:3 * HID])           # output gate
    gg = jnp.tanh(cc[:, 3 * HID:4 * HID])      # candidate
    # h0 = c0 = 0  =>  forget-gate term vanishes exactly.
    h1 = go * jnp.tanh(gi * gg)                # (KH*Bt*seq, HID), rows (r, bt, hp, w)

    # Regroup the 9 kernel-row blocks along lanes so the (9,1)/stride-9 conv is
    # ONE (Bt*seq, 288) @ (288, 64) MXU matmul instead of 9 fill/drain-bound
    # K=32 dots.  Only static contiguous sublane slices + lane-range stores.
    m = h1_sc.shape[0]                         # Bt*seq
    for r in range(KH):
        h1_sc[:, r * HID:(r + 1) * HID] = h1[r * m:(r + 1) * m, :]

    y = jnp.dot(h1_sc[...], wg_ref[...],
                preferred_element_type=jnp.float32) + sh_ref[...]
    y = jnp.where(y > 0.0, y, jnp.exp(jnp.minimum(y, 0.0)) - 1.0)   # ELU
    # projection ('b e h w -> b (h w) e') is the layout itself; add PE.
    out_ref[0] = y + pe_ref[...]


# ------------------------------ params / glue ---------------------------------
def positional_encoding(max_len, d_model):
    pos = jnp.arange(max_len, dtype=jnp.float32)[:, None]
    div = jnp.exp(jnp.arange(0, d_model, 2, dtype=jnp.float32)
                  * (-(math.log(10000.0) / d_model)))
    pe = jnp.zeros((max_len, d_model), jnp.float32)
    pe = pe.at[:, 0::2].set(jnp.sin(pos * div))
    pe = pe.at[:, 1::2].set(jnp.cos(pos * div))
    return pe


def init_params(key):
    ks = jax.random.split(key, 8)
    n = lambda k, shape, s=0.1: s * jax.random.normal(k, shape, dtype=jnp.float32)
    u = lambda k, shape: jax.random.uniform(k, shape, jnp.float32, 0.5, 1.5)
    return {
        "Wc": n(ks[0], (4 * HID, 1 + HID, 1, KW)),   # ConvLSTM cell conv weight
        "bc": n(ks[1], (4 * HID,)),                  # ConvLSTM cell conv bias
        "Wg": n(ks[2], (EMB, HID, KH, 1)),           # globalnet conv (bias=False)
        "gamma": 1.0 + n(ks[3], (EMB,)),             # BatchNorm2d(64) params
        "beta": n(ks[4], (EMB,)),
        "mean": n(ks[5], (EMB,)),
        "var": u(ks[6], (EMB,)),
    }


def fuse_params(p):
    # Only the input-channel slice of the ConvLSTM conv matters (h0 == 0);
    # the conv bias is folded into an extra matmul row (ones tap column).
    Wc_in = p["Wc"][:, 0, 0, :]                                     # (128, KW)
    WcT = (jnp.zeros((KP, 4 * HID), jnp.float32)
           .at[:KW, :].set(Wc_in.T)
           .at[KW, :].set(p["bc"]))
    # Fold BatchNorm scale into the globalnet weights; keep only the shift.
    sc = p["gamma"] * jax.lax.rsqrt(p["var"] + EPS)
    sh = p["beta"] - p["mean"] * sc
    Wg_rce = jnp.transpose(p["Wg"][:, :, :, 0], (2, 1, 0))          # (KH, HID, EMB)
    WgMat = (Wg_rce * sc[None, None, :]).reshape(KH * HID, EMB)     # (288, EMB)
    return dict(WcT=WcT, WgMat=WgMat, sh=sh.reshape(1, EMB),
                pe=positional_encoding(MAX_LEN, EMB))


def _choose_bt(B):
    # Keep >= 2 grid steps when possible (both v7x TensorCores stay busy) while
    # folding as many batch elements per step as evenly divide.
    if B >= 2 and B % 2 == 0:
        return B // 2
    return 1


@jax.jit
def patch_embedding_forward(x, fp):
    B, cin, H, W = x.shape
    assert cin == 1 and H % KH == 0
    HP = H // KH
    seq = HP * W
    assert seq <= MAX_LEN, f"seq={seq} exceeds PositionalEncoding max_len={MAX_LEN}"
    Bt = _choose_bt(B)
    G = B // Bt

    # im2col for the (1,3) gate conv via static slices (no gather); spare tap
    # column KW is 1.0 so the gate bias is folded into the matmul.
    xs = x[:, 0]                                              # (B, H, W)
    xp = jnp.pad(xs, ((0, 0), (0, 0), (1, 1)))                # same-pad time
    taps = jnp.stack([xp[:, :, 0:W], xp[:, :, 1:W + 1], xp[:, :, 2:W + 2]],
                     axis=-1)                                 # (B, H, W, KW)
    P = jnp.concatenate(
        [taps,
         jnp.ones((B, H, W, 1), jnp.float32),
         jnp.zeros((B, H, W, KP - KW - 1), jnp.float32)], axis=-1)  # (B,H,W,KP)
    # Row order per grid step: (r, bt, hp, w) so the kernel-side regroup of h1
    # into the K=288 globalnet operand is 9 contiguous sublane slices.
    P = P.reshape(G, Bt, HP, KH, W, KP).transpose(0, 3, 1, 2, 4, 5)
    patches = P.reshape(G, Bt * H * W, KP)

    pe = jnp.tile(fp["pe"][:seq], (Bt, 1))                    # (Bt*seq, EMB)

    out = pl.pallas_call(
        _patch_embed_kernel,
        out_shape=jax.ShapeDtypeStruct((G, Bt * seq, EMB), jnp.float32),
        grid=(G,),
        in_specs=[
            pl.BlockSpec((1, Bt * H * W, KP), lambda g: (g, 0, 0)),
            pl.BlockSpec((KP, 4 * HID), lambda g: (0, 0)),
            pl.BlockSpec((KH * HID, EMB), lambda g: (0, 0)),
            pl.BlockSpec((1, EMB), lambda g: (0, 0)),
            pl.BlockSpec((Bt * seq, EMB), lambda g: (0, 0)),
        ],
        out_specs=pl.BlockSpec((1, Bt * seq, EMB), lambda g: (g, 0, 0)),
        scratch_shapes=[pltpu.VMEM((Bt * seq, KH * HID), jnp.float32)],
        compiler_params=pltpu.CompilerParams(dimension_semantics=("parallel",)),
    )(patches, fp["WcT"], fp["WgMat"], fp["sh"], pe)
    # Un-fold the per-step batch packing: (G, Bt*seq, E) -> (B, seq, E).
    return out.reshape(B, seq, EMB)


# ------------------------------ pure-JAX reference ----------------------------
def reference_forward(x, p):
    B, _, H, W = x.shape
    HP = H // KH
    xs = x[:, 0]
    xpad = jnp.pad(xs, ((0, 0), (0, 0), (1, 1)))
    Wc_in = p["Wc"][:, 0, 0, :]                                   # (128, 3)
    cc = (Wc_in[:, 0][None, :, None, None] * xpad[:, None, :, :-2]
          + Wc_in[:, 1][None, :, None, None] * xpad[:, None, :, 1:-1]
          + Wc_in[:, 2][None, :, None, None] * xpad[:, None, :, 2:]
          + p["bc"][None, :, None, None])                         # (B, 128, H, W)
    sig = lambda v: 1.0 / (1.0 + jnp.exp(-v))
    gi = sig(cc[:, 0 * HID:1 * HID])
    go = sig(cc[:, 2 * HID:3 * HID])
    gg = jnp.tanh(cc[:, 3 * HID:4 * HID])
    h1 = go * jnp.tanh(gi * gg)                                   # (B, 32, H, W)
    h1r = h1.reshape(B, HID, HP, KH, W)
    y = jnp.einsum('bchrw,ecr->behw', h1r, p["Wg"][:, :, :, 0])   # (B, 64, HP, W)
    sc = p["gamma"] * jax.lax.rsqrt(p["var"] + EPS)
    sh = p["beta"] - p["mean"] * sc
    y = y * sc[None, :, None, None] + sh[None, :, None, None]
    y = jnp.where(y > 0.0, y, jnp.exp(jnp.minimum(y, 0.0)) - 1.0)
    y = y.reshape(B, EMB, HP * W).transpose(0, 2, 1)              # b (h w) e
    return y + positional_encoding(MAX_LEN, EMB)[None, :HP * W, :]


if __name__ == "__main__":
    key = jax.random.PRNGKey(0)
    kx, kp = jax.random.split(key)
    # Small shapes consistent with the module: the (9,1)/stride-9 globalnet
    # conv needs H a multiple of 9; seq = (H//9)*W must be <= 500.
    # B=4 exercises the Bt=2-batch-elements-per-grid-step path (grid stays 2).
    B, H, W = 4, 18, 32
    x = jax.random.normal(kx, (B, 1, H, W), dtype=jnp.float32)
    params = init_params(kp)
    fp = fuse_params(params)

    out = jax.block_until_ready(patch_embedding_forward(x, fp))

    assert out.shape == (B, (H // KH) * W, EMB), out.shape
    assert bool(jnp.all(jnp.isfinite(out)))
    ref = reference_forward(x, params)
    err = float(jnp.max(jnp.abs(out - ref)))
    assert err < 1e-3, err
    print("KERNEL_OK")
</pallas_src>

<mosaic_0001>
module attributes {stable_mosaic.version = 11 : i64} {
  func.func @_patch_embed_kernel(%arg0: i32, %arg1: memref<1x1152x8xf32, #tpu.memory_space<vmem>>, %arg2: memref<8x128xf32, #tpu.memory_space<vmem>>, %arg3: memref<288x64xf32, #tpu.memory_space<vmem>>, %arg4: memref<1x64xf32, #tpu.memory_space<vmem>>, %arg5: memref<128x64xf32, #tpu.memory_space<vmem>>, %arg6: memref<1x128x64xf32, #tpu.memory_space<vmem>>, %arg7: memref<128x288xf32, #tpu.memory_space<vmem>>) attributes {dimension_semantics = [#tpu.dimension_semantics<parallel>], iteration_bounds = array<i64: 2>, scalar_prefetch = 0 : i64, scratch_operands = 1 : i64, tpu.core_type = #tpu.core_type<tc>, window_params = [{transform_indices = @transform_0, window_bounds = array<i64: 1, 1152, 8>}, {pipeline_mode = #tpu.pipeline_mode<synchronous>, transform_indices = @transform_1, window_bounds = array<i64: 8, 128>}, {pipeline_mode = #tpu.pipeline_mode<synchronous>, transform_indices = @transform_2, window_bounds = array<i64: 288, 64>}, {pipeline_mode = #tpu.pipeline_mode<synchronous>, transform_indices = @transform_3, window_bounds = array<i64: 1, 64>}, {pipeline_mode = #tpu.pipeline_mode<synchronous>, transform_indices = @transform_4, window_bounds = array<i64: 128, 64>}, {transform_indices = @transform_5, window_bounds = array<i64: 1, 128, 64>}]} {
    %c0 = arith.constant 0 : index
    %c0_0 = arith.constant 0 : index
    %c0_1 = arith.constant 0 : index
    %0 = vector.load %arg1[%c0, %c0_0, %c0_1] : memref<1x1152x8xf32, #tpu.memory_space<vmem>>, vector<1x1152x8xf32>
    %1 = vector.shape_cast %0 : vector<1x1152x8xf32> to vector<1152x8xf32>
    %c0_2 = arith.constant 0 : index
    %c0_3 = arith.constant 0 : index
    %2 = vector.load %arg2[%c0_2, %c0_3] : memref<8x128xf32, #tpu.memory_space<vmem>>, vector<8x128xf32>
    %cst = arith.constant dense<0.000000e+00> : vector<1152x128xf32>
    %3 = tpu.matmul %1, %2, %cst {dimension_numbers = #tpu.dot_dimension_numbers<[1], [0], [0], [1], [0, 0, 1, 1], [], []>} : vector<1152x8xf32>, vector<8x128xf32>, vector<1152x128xf32> -> vector<1152x128xf32>
    %4 = vector.extract_strided_slice %3 {offsets = [0, 0], sizes = [1152, 32], strides = [1, 1]} : vector<1152x128xf32> to vector<1152x32xf32>
    %cst_4 = arith.constant 0.000000e+00 : f32
    %5 = vector.broadcast %cst_4 : f32 to vector<1152x32xf32>
    %6 = arith.subf %5, %4 : vector<1152x32xf32>
    %7 = math.exp %6 : vector<1152x32xf32>
    %cst_5 = arith.constant 1.000000e+00 : f32
    %8 = vector.broadcast %cst_5 : f32 to vector<1152x32xf32>
    %9 = arith.addf %8, %7 : vector<1152x32xf32>
    %10 = tpu.reciprocal %9 {approx = true} : vector<1152x32xf32> -> vector<1152x32xf32>
    %11 = vector.extract_strided_slice %3 {offsets = [0, 64], sizes = [1152, 32], strides = [1, 1]} : vector<1152x128xf32> to vector<1152x32xf32>
    %cst_6 = arith.constant 0.000000e+00 : f32
    %12 = vector.broadcast %cst_6 : f32 to vector<1152x32xf32>
    %13 = arith.subf %12, %11 : vector<1152x32xf32>
    %14 = math.exp %13 : vector<1152x32xf32>
    %cst_7 = arith.constant 1.000000e+00 : f32
    %15 = vector.broadcast %cst_7 : f32 to vector<1152x32xf32>
    %16 = arith.addf %15, %14 : vector<1152x32xf32>
    %17 = tpu.reciprocal %16 {approx = true} : vector<1152x32xf32> -> vector<1152x32xf32>
    %18 = vector.extract_strided_slice %3 {offsets = [0, 96], sizes = [1152, 32], strides = [1, 1]} : vector<1152x128xf32> to vector<1152x32xf32>
    %19 = math.tanh %18 : vector<1152x32xf32>
    %20 = arith.mulf %10, %19 : vector<1152x32xf32>
    %21 = math.tanh %20 : vector<1152x32xf32>
    %22 = arith.mulf %17, %21 : vector<1152x32xf32>
    %23 = vector.extract_strided_slice %22 {offsets = [0, 0], sizes = [128, 32], strides = [1, 1]} : vector<1152x32xf32> to vector<128x32xf32>
    %c0_8 = arith.constant 0 : index
    %c0_9 = arith.constant 0 : index
    %24 = vector.load %arg7[%c0_8, %c0_9] : memref<128x288xf32, #tpu.memory_space<vmem>>, vector<128x32xf32>
    tpu.vector_store %arg7[%c0_8, %c0_9], %23 {strides = array<i32>} : memref<128x288xf32, #tpu.memory_space<vmem>>, vector<128x32xf32>,
    %25 = vector.extract_strided_slice %22 {offsets = [128, 0], sizes = [128, 32], strides = [1, 1]} : vector<1152x32xf32> to vector<128x32xf32>
    %c0_10 = arith.constant 0 : index
    %c32 = arith.constant 32 : index
    %26 = vector.load %arg7[%c0_10, %c32] : memref<128x288xf32, #tpu.memory_space<vmem>>, vector<128x32xf32>
    tpu.vector_store %arg7[%c0_10, %c32], %25 {strides = array<i32>} : memref<128x288xf32, #tpu.memory_space<vmem>>, vector<128x32xf32>,
    %27 = vector.extract_strided_slice %22 {offsets = [256, 0], sizes = [128, 32], strides = [1, 1]} : vector<1152x32xf32> to vector<128x32xf32>
    %c0_11 = arith.constant 0 : index
    %c64 = arith.constant 64 : index
    %28 = vector.load %arg7[%c0_11, %c64] : memref<128x288xf32, #tpu.memory_space<vmem>>, vector<128x32xf32>
    tpu.vector_store %arg7[%c0_11, %c64], %27 {strides = array<i32>} : memref<128x288xf32, #tpu.memory_space<vmem>>, vector<128x32xf32>,
    %29 = vector.extract_strided_slice %22 {offsets = [384, 0], sizes = [128, 32], strides = [1, 1]} : vector<1152x32xf32> to vector<128x32xf32>
    %c0_12 = arith.constant 0 : index
    %c96 = arith.constant 96 : index
    %30 = vector.load %arg7[%c0_12, %c96] : memref<128x288xf32, #tpu.memory_space<vmem>>, vector<128x32xf32>
    tpu.vector_store %arg7[%c0_12, %c96], %29 {strides = array<i32>} : memref<128x288xf32, #tpu.memory_space<vmem>>, vector<128x32xf32>,
    %31 = vector.extract_strided_slice %22 {offsets = [512, 0], sizes = [128, 32], strides = [1, 1]} : vector<1152x32xf32> to vector<128x32xf32>
    %c0_13 = arith.constant 0 : index
    %c128 = arith.constant 128 : index
    %32 = vector.load %arg7[%c0_13, %c128] : memref<128x288xf32, #tpu.memory_space<vmem>>, vector<128x32xf32>
    tpu.vector_store %arg7[%c0_13, %c128], %31 {strides = array<i32>} : memref<128x288xf32, #tpu.memory_space<vmem>>, vector<128x32xf32>,
    %33 = vector.extract_strided_slice %22 {offsets = [640, 0], sizes = [128, 32], strides = [1, 1]} : vector<1152x32xf32> to vector<128x32xf32>
    %c0_14 = arith.constant 0 : index
    %c160 = arith.constant 160 : index
    %34 = vector.load %arg7[%c0_14, %c160] : memref<128x288xf32, #tpu.memory_space<vmem>>, vector<128x32xf32>
    tpu.vector_store %arg7[%c0_14, %c160], %33 {strides = array<i32>} : memref<128x288xf32, #tpu.memory_space<vmem>>, vector<128x32xf32>,
    %35 = vector.extract_strided_slice %22 {offsets = [768, 0], sizes = [128, 32], strides = [1, 1]} : vector<1152x32xf32> to vector<128x32xf32>
    %c0_15 = arith.constant 0 : index
    %c192 = arith.constant 192 : index
    %36 = vector.load %arg7[%c0_15, %c192] : memref<128x288xf32, #tpu.memory_space<vmem>>, vector<128x32xf32>
    tpu.vector_store %arg7[%c0_15, %c192], %35 {strides = array<i32>} : memref<128x288xf32, #tpu.memory_space<vmem>>, vector<128x32xf32>,
    %37 = vector.extract_strided_slice %22 {offsets = [896, 0], sizes = [128, 32], strides = [1, 1]} : vector<1152x32xf32> to vector<128x32xf32>
    %c0_16 = arith.constant 0 : index
    %c224 = arith.constant 224 : index
    %38 = vector.load %arg7[%c0_16, %c224] : memref<128x288xf32, #tpu.memory_space<vmem>>, vector<128x32xf32>
    tpu.vector_store %arg7[%c0_16, %c224], %37 {strides = array<i32>} : memref<128x288xf32, #tpu.memory_space<vmem>>, vector<128x32xf32>,
    %39 = vector.extract_strided_slice %22 {offsets = [1024, 0], sizes = [128, 32], strides = [1, 1]} : vector<1152x32xf32> to vector<128x32xf32>
    %c0_17 = arith.constant 0 : index
    %c256 = arith.constant 256 : index
    %40 = vector.load %arg7[%c0_17, %c256] : memref<128x288xf32, #tpu.memory_space<vmem>>, vector<128x32xf32>
    tpu.vector_store %arg7[%c0_17, %c256], %39 {strides = array<i32>} : memref<128x288xf32, #tpu.memory_space<vmem>>, vector<128x32xf32>,
    %c0_18 = arith.constant 0 : index
    %c0_19 = arith.constant 0 : index
    %41 = vector.load %arg7[%c0_18, %c0_19] : memref<128x288xf32, #tpu.memory_space<vmem>>, vector<128x288xf32>
    %c0_20 = arith.constant 0 : index
    %c0_21 = arith.constant 0 : index
    %42 = vector.load %arg3[%c0_20, %c0_21] : memref<288x64xf32, #tpu.memory_space<vmem>>, vector<288x64xf32>
    %cst_22 = arith.constant dense<0.000000e+00> : vector<128x64xf32>
    %43 = tpu.matmul %41, %42, %cst_22 {dimension_numbers = #tpu.dot_dimension_numbers<[1], [0], [0], [1], [0, 0, 1, 1], [], []>} : vector<128x288xf32>, vector<288x64xf32>, vector<128x64xf32> -> vector<128x64xf32>
    %c0_23 = arith.constant 0 : index
    %c0_24 = arith.constant 0 : index
    %44 = vector.load %arg4[%c0_23, %c0_24] : memref<1x64xf32, #tpu.memory_space<vmem>>, vector<1x64xf32>
    %45 = vector.broadcast %44 : vector<1x64xf32> to vector<128x64xf32>
    %46 = arith.addf %43, %45 : vector<128x64xf32>
    %cst_25 = arith.constant 0.000000e+00 : f32
    %47 = vector.broadcast %cst_25 : f32 to vector<128x64xf32>
    %48 = arith.cmpf ogt, %46, %47 : vector<128x64xf32>
    %cst_26 = arith.constant 0.000000e+00 : f32
    %49 = vector.broadcast %cst_26 : f32 to vector<128x64xf32>
    %50 = arith.minimumf %46, %49 : vector<128x64xf32>
    %51 = math.exp %50 : vector<128x64xf32>
    %cst_27 = arith.constant 1.000000e+00 : f32
    %52 = vector.broadcast %cst_27 : f32 to vector<128x64xf32>
    %53 = arith.subf %51, %52 : vector<128x64xf32>
    %54 = arith.select %48, %46, %53 : vector<128x64xi1>, vector<128x64xf32>
    %c0_28 = arith.constant 0 : index
    %c0_29 = arith.constant 0 : index
    %55 = vector.load %arg5[%c0_28, %c0_29] : memref<128x64xf32, #tpu.memory_space<vmem>>, vector<128x64xf32>
    %56 = arith.addf %54, %55 : vector<128x64xf32>
    %c0_30 = arith.constant 0 : index
    %c0_31 = arith.constant 0 : index
    %c0_32 = arith.constant 0 : index
    %57 = vector.load %arg6[%c0_30, %c0_31, %c0_32] : memref<1x128x64xf32, #tpu.memory_space<vmem>>, vector<1x128x64xf32>
    %58 = vector.shape_cast %57 : vector<1x128x64xf32> to vector<128x64xf32>
    %59 = vector.shape_cast %56 : vector<128x64xf32> to vector<1x128x64xf32>
    tpu.vector_store %arg6[%c0_30, %c0_31, %c0_32], %59 {strides = array<i32>} : memref<1x128x64xf32, #tpu.memory_space<vmem>>, vector<1x128x64xf32>,
    return
  }
  func.func @transform_0(%arg0: i32) -> (i32, i32, i32) {
    %c0_i32 = arith.constant 0 : i32
    %c0_i32_0 = arith.constant 0 : i32
    %c0_i32_1 = arith.constant 0 : i32
    return %arg0, %c0_i32, %c0_i32_0 : i32, i32, i32
  }
  func.func @transform_1(%arg0: i32) -> (i32, i32) {
    %c0_i32 = arith.constant 0 : i32
    %c0_i32_0 = arith.constant 0 : i32
    %c0_i32_1 = arith.constant 0 : i32
    return %c0_i32, %c0_i32_0 : i32, i32
  }
  func.func @transform_2(%arg0: i32) -> (i32, i32) {
    %c0_i32 = arith.constant 0 : i32
    %c0_i32_0 = arith.constant 0 : i32
    %c0_i32_1 = arith.constant 0 : i32
    return %c0_i32, %c0_i32_0 : i32, i32
  }
  func.func @transform_3(%arg0: i32) -> (i32, i32) {
    %c0_i32 = arith.constant 0 : i32
    %c0_i32_0 = arith.constant 0 : i32
    %c0_i32_1 = arith.constant 0 : i32
    return %c0_i32, %c0_i32_0 : i32, i32
  }
  func.func @transform_4(%arg0: i32) -> (i32, i32) {
    %c0_i32 = arith.constant 0 : i32
    %c0_i32_0 = arith.constant 0 : i32
    %c0_i32_1 = arith.constant 0 : i32
    return %c0_i32, %c0_i32_0 : i32, i32
  }
  func.func @transform_5(%arg0: i32) -> (i32, i32, i32) {
    %c0_i32 = arith.constant 0 : i32
    %c0_i32_0 = arith.constant 0 : i32
    %c0_i32_1 = arith.constant 0 : i32
    return %arg0, %c0_i32, %c0_i32_0 : i32, i32, i32
  }
}

</mosaic_0001>

<llo_original>
// kernel: patch_embedding_forward.1
$region0: #{patch_embedding_forward.1}
  #allocation0 [shape = 'u32[]', space=smem, size = 0x4, offset = 0x4, fixed_abs, tag = 'smem constant byte address 0x4 - core index']
  #allocation1 [shape = 'u32[72,128]{1,0:T(1,128)}', space=vmem, size = 0x9000, scoped, tag = 'internal scratch']
  #allocation2 [shape = 'f32[128,288]{1,0:T(8,128)}', space=vmem, size = 0x30000, scoped, tag = 'scratch operand']
  %s0 = inlined_call_operand.vmem [shape: f32[2,1152,8], index: 0, kind: input, shape index: {}]
  %s1 = inlined_call_operand.vmem [shape: f32[8,128], index: 1, kind: input, shape index: {}]
  %s2 = inlined_call_operand.vmem [shape: f32[288,64], index: 2, kind: input, shape index: {}]
  %s3 = inlined_call_operand.vmem [shape: f32[1,64], index: 3, kind: input, shape index: {}]
  %s4 = inlined_call_operand.vmem [shape: f32[128,64], index: 4, kind: input, shape index: {}]
  %s5 = inlined_call_operand.hbm [shape: f32[2,128,64], index: 5, kind: output, shape index: {}]
  %s6 = sld [smem:[#allocation0]]
  $region53: #{patch_embedding_forward.1} parent=0
    _
  %s8 = ssub.s32 1, %s6
  %s9 = scalar_select 0, %s8, %s6
  $region1: #{patch_embedding_forward.1} parent=0
    #allocation3 [shape = 'u8[131072]{0}', space=vmem, size = 0x20000, scoped, tag = 'output window, operand 0']
    #allocation4 [shape = 's32[2]{0}', space=sflag, size = 0x8, scoped, tag = 'scoped memory for patch_embedding_forward.1']
    %10 = vsyncpa [#allocation4], 0
    %s11 = scalar_lea.sflag [#allocation4], 1
    %12 = vsyncpa %s11, 0
    loop: start=0, step=1, limit=4
    $region2: #{patch_embedding_forward.1} parent=1 // loop_pre_header
      _
    $region3: #{patch_embedding_forward.1} parent=1 // loop_header
      %s14 = sphi 0, %s18
      %p15 = scmp.ge.s32.totalorder %s14, 4
      %s24 = sphi 0, %s26
      %s27 = sphi 0, %s24
      %s28 = sphi 0, %s27
      %s44 = sphi 0, %s28
      %s48 = sphi 0, %s48
      %s50 = sphi 0, %s48
      %s51 = sphi 0, %s50
      %s65 = sphi 0, %s51
      %s69 = sphi 0, %s69
      %s71 = sphi 0, %s69
      %s72 = sphi 0, %s71
      %s86 = sphi 0, %s72
      %s90 = sphi 0, %s90
      %s92 = sphi 0, %s90
      %s93 = sphi 0, %s92
      %s107 = sphi 0, %s93
      %s111 = sphi 0, %s111
      %s113 = sphi 0, %s111
      %s114 = sphi 0, %s113
      %s128 = sphi 0, %s114
      %s134 = sphi 0, %s136
      %s137 = sphi 0, %s134
      %s138 = sphi 0, %s137
      %s154 = sphi 0, %s138
    $region4: #{patch_embedding_forward.1} parent=1 // loop_header_branch
      %17 = sbr.rel (%p15) target = $region8
    $region5: #{patch_embedding_forward.1} parent=1 // loop_body
      %s19 = ssub.s32 %s14, 1
      %s20 = ssub.s32 %s14, 2
      %s21 = sadd.s32 %s14, 1
      %s22 = ssub.s32 %s14, %s21
      %p23 = scmp.eq.s32.totalorder %s22, 0
      %s25 = sadd.s32 %s24, 1
      %s26 = scalar_select %p23, %s24, %s25
      %p29 = pneg %p23
      %p30 = scmp.eq.s32.totalorder %s14, 1
      %p31 = por %p29, %p30
      %p32 = scmp.ne.s32.totalorder %s24, %s27
      %p33 = scmp.eq.s32.totalorder %s14, 0
      %p34 = por %p32, %p33
      %p35 = scmp.ne.s32.totalorder %s24, %s27
      %p36 = scmp.eq.s32.totalorder %s19, 1
      %p37 = por %p35, %p36
      %p38 = scmp.ne.s32.totalorder %s27, %s28
      %p39 = scmp.eq.s32.totalorder %s19, 0
      %p40 = por %p38, %p39
      %p41 = scmp.ne.s32.totalorder %s27, %s28
      %p42 = scmp.eq.s32.totalorder %s20, 1
      %p43 = por %p41, %p42
      %p45 = scmp.ne.s32.totalorder %s28, %s44
      %p46 = scmp.eq.s32.totalorder %s20, 0
      %p47 = por %p45, %p46
      %s49 = sadd.s32 %s48, 1
      %p52 = scmp.eq.s32.totalorder %s14, 1
      %p53 = scmp.ne.s32.totalorder %s48, %s50
      %p54 = scmp.eq.s32.totalorder %s14, 0
      %p55 = por %p53, %p54
      %p56 = scmp.ne.s32.totalorder %s48, %s50
      %p57 = scmp.eq.s32.totalorder %s19, 1
      %p58 = por %p56, %p57
      %p59 = scmp.ne.s32.totalorder %s50, %s51
      %p60 = scmp.eq.s32.totalorder %s19, 0
      %p61 = por %p59, %p60
      %p62 = scmp.ne.s32.totalorder %s50, %s51
      %p63 = scmp.eq.s32.totalorder %s20, 1
      %p64 = por %p62, %p63
      %p66 = scmp.ne.s32.totalorder %s51, %s65
      %p67 = scmp.eq.s32.totalorder %s20, 0
      %p68 = por %p66, %p67
      %s70 = sadd.s32 %s69, 1
      %p73 = scmp.eq.s32.totalorder %s14, 1
      %p74 = scmp.ne.s32.totalorder %s69, %s71
      %p75 = scmp.eq.s32.totalorder %s14, 0
      %p76 = por %p74, %p75
      %p77 = scmp.ne.s32.totalorder %s69, %s71
      %p78 = scmp.eq.s32.totalorder %s19, 1
      %p79 = por %p77, %p78
      %p80 = scmp.ne.s32.totalorder %s71, %s72
      %p81 = scmp.eq.s32.totalorder %s19, 0
      %p82 = por %p80, %p81
      %p83 = scmp.ne.s32.totalorder %s71, %s72
      %p84 = scmp.eq.s32.totalorder %s20, 1
      %p85 = por %p83, %p84
      %p87 = scmp.ne.s32.totalorder %s72, %s86
      %p88 = scmp.eq.s32.totalorder %s20, 0
      %p89 = por %p87, %p88
      %s91 = sadd.s32 %s90, 1
      %p94 = scmp.eq.s32.totalorder %s14, 1
      %p95 = scmp.ne.s32.totalorder %s90, %s92
      %p96 = scmp.eq.s32.totalorder %s14, 0
      %p97 = por %p95, %p96
      %p98 = scmp.ne.s32.totalorder %s90, %s92
      %p99 = scmp.eq.s32.totalorder %s19, 1
      %p100 = por %p98, %p99
      %p101 = scmp.ne.s32.totalorder %s92, %s93
      %p102 = scmp.eq.s32.totalorder %s19, 0
      %p103 = por %p101, %p102
      %p104 = scmp.ne.s32.totalorder %s92, %s93
      %p105 = scmp.eq.s32.totalorder %s20, 1
      %p106 = por %p104, %p105
      %p108 = scmp.ne.s32.totalorder %s93, %s107
      %p109 = scmp.eq.s32.totalorder %s20, 0
      %p110 = por %p108, %p109
      %s112 = sadd.s32 %s111, 1
      %p115 = scmp.eq.s32.totalorder %s14, 1
      %p116 = scmp.ne.s32.totalorder %s111, %s113
      %p117 = scmp.eq.s32.totalorder %s14, 0
      %p118 = por %p116, %p117
      %p119 = scmp.ne.s32.totalorder %s111, %s113
      %p120 = scmp.eq.s32.totalorder %s19, 1
      %p121 = por %p119, %p120
      %p122 = scmp.ne.s32.totalorder %s113, %s114
      %p123 = scmp.eq.s32.totalorder %s19, 0
      %p124 = por %p122, %p123
      %p125 = scmp.ne.s32.totalorder %s113, %s114
      %p126 = scmp.eq.s32.totalorder %s20, 1
      %p127 = por %p125, %p126
      %p129 = scmp.ne.s32.totalorder %s114, %s128
      %p130 = scmp.eq.s32.totalorder %s20, 0
      %p131 = por %p129, %p130
      %s132 = ssub.s32 %s14, %s21
      %p133 = scmp.eq.s32.totalorder %s132, 0
      %s135 = sadd.s32 %s134, 1
      %s136 = scalar_select %p133, %s134, %s135
      %p139 = pneg %p133
      %p140 = scmp.eq.s32.totalorder %s14, 1
      %p141 = por %p139, %p140
      %p142 = scmp.ne.s32.totalorder %s134, %s137
      %p143 = scmp.eq.s32.totalorder %s14, 0
      %p144 = por %p142, %p143
      %p145 = scmp.ne.s32.totalorder %s134, %s137
      %p146 = scmp.eq.s32.totalorder %s19, 1
      %p147 = por %p145, %p146
      %p148 = scmp.ne.s32.totalorder %s137, %s138
      %p149 = scmp.eq.s32.totalorder %s19, 0
      %p150 = por %p148, %p149
      %p151 = scmp.ne.s32.totalorder %s137, %s138
      %p152 = scmp.eq.s32.totalorder %s20, 1
      %p153 = por %p151, %p152
      %p155 = scmp.ne.s32.totalorder %s138, %s154
      %p156 = scmp.eq.s32.totalorder %s20, 0
      %p157 = por %p155, %p156
      %p158 = scmp.le.s32.totalorder 1, %s14
      %p159 = scmp.lt.s32.totalorder %s14, 3
      %p160 = pnand %p158, %p159
      %p161 = pneg %p160
      // Predicated region
      $region9: #{patch_embedding_forward.1} parent=5 // pred_check
        _
      $region10: #{patch_embedding_forward.1} parent=5 // pred_check_branch
        %163 = sbr.rel (%p160) target = $region12
      $region11: #{patch_embedding_forward.1} parent=5 // pred_region
        %s164 = ssub.s32 %s14, 1
        // Predicated region
        $region13: #{patch_embedding_forward.1} parent=11 // pred_check
          %p165 = pneg %p61
        $region14: #{patch_embedding_forward.1} parent=11 // pred_check_branch
          %167 = sbr.rel (%p165) target = $region16
        $region15: #{patch_embedding_forward.1} parent=11 // pred_region
          _
        $region16: #{patch_embedding_forward.1} parent=11 // pred_fallthru
          _
        // Predicated region
        $region17: #{patch_embedding_forward.1} parent=11 // pred_check
          %p168 = pneg %p82
        $region18: #{patch_embedding_forward.1} parent=11 // pred_check_branch
          %170 = sbr.rel (%p168) target = $region20
        $region19: #{patch_embedding_forward.1} parent=11 // pred_region
          _
        $region20: #{patch_embedding_forward.1} parent=11 // pred_fallthru
          _
        // Predicated region
        $region21: #{patch_embedding_forward.1} parent=11 // pred_check
          %p171 = pneg %p103
        $region22: #{patch_embedding_forward.1} parent=11 // pred_check_branch
          %173 = sbr.rel (%p171) target = $region24
        $region23: #{patch_embedding_forward.1} parent=11 // pred_region
          _
        $region24: #{patch_embedding_forward.1} parent=11 // pred_fallthru
          _
        // Predicated region
        $region25: #{patch_embedding_forward.1} parent=11 // pred_check
          %p174 = pneg %p124
        $region26: #{patch_embedding_forward.1} parent=11 // pred_check_branch
          %176 = sbr.rel (%p174) target = $region28
        $region27: #{patch_embedding_forward.1} parent=11 // pred_region
          _
        $region28: #{patch_embedding_forward.1} parent=11 // pred_fallthru
          _
      $region12: #{patch_embedding_forward.1} parent=5 // pred_fallthru
        _
      %p177 = scmp.lt.s32.totalorder %s14, 2
      // Predicated region
      $region29: #{patch_embedding_forward.1} parent=5 // pred_check
        %p178 = pneg %p177
      $region30: #{patch_embedding_forward.1} parent=5 // pred_check_branch
        %180 = sbr.rel (%p178) target = $region32
      $region31: #{patch_embedding_forward.1} parent=5 // pred_region
        // Predicated region
        $region33: #{patch_embedding_forward.1} parent=31 // pred_check
          %p181 = pneg %p34
        $region34: #{patch_embedding_forward.1} parent=31 // pred_check_branch
          %183 = sbr.rel (%p181) target = $region36
        $region35: #{patch_embedding_forward.1} parent=31 // pred_region
          %p184 = scmp.lt.s32.totalorder %s14, 1
          %s185 = scalar_select %p184, %s14, 1
          %s186 = smul.addr %s185, 144
          %s187 = smul.addr %s186, 8
          %s188 = scalar_lea.vmem %s0, %s187
        $region36: #{patch_embedding_forward.1} parent=31 // pred_fallthru
          _
      $region32: #{patch_embedding_forward.1} parent=5 // pred_fallthru
        _
      %p189 = scmp.le.s32.totalorder 1, %s14
      %p190 = scmp.lt.s32.totalorder %s14, 3
      %p191 = pnand %p189, %p190
      %p192 = pneg %p191
      // Predicated region
      $region37: #{patch_embedding_forward.1} parent=5 // pred_check
        _
      $region38: #{patch_embedding_forward.1} parent=5 // pred_check_branch
        %194 = sbr.rel (%p191) target = $region40
      $region39: #{patch_embedding_forward.1} parent=5 // pred_region
        %s195 = ssub.s32 %s14, 1
        %p196 = scmp.lt.s32.totalorder %s19, 1
        %s197 = scalar_select %p196, %s19, 1
        %s198 = smul.addr %s197, 144
        %s199 = smul.addr %s198, 8
        %s200 = scalar_lea.vmem %s0, %s199
        %p201 = pneg %p40
        %p202 = pneg %p37
        %p203 = pneg %p61
        %p204 = pneg %p58
        %p205 = pneg %p82
        %p206 = pneg %p79
        %p207 = pneg %p103
        %p208 = pneg %p100
        %p209 = pneg %p124
        %p210 = pneg %p121
        %p211 = pneg %p150
        %p212 = pneg %p147
        %s213 = sand.u32 %s137, 1
        %s214 = scalar_lea.sflag [#allocation4], %s213
        %s215 = sand.u32 %s137, 1
        %s216 = smul.addr %s215, 128
        %s217 = scalar_lea.vmem [#allocation3], %s216
        %p218 = scmp.lt.s32.totalorder %s19, 1
        %s219 = scalar_select %p218, %s19, 1
        %s220 = smul.addr %s219, 144
        %s221 = smul.addr %s220, 8
        %s222 = scalar_lea.vmem %s0, %s221
        %v223 = vld [vmem:[%s222] sm:$0xff]
        %v224 = vld [vmem:[%s222 + $0x8] sm:$0xff]
        %v225 = vld [vmem:[%s222 + $0x10] sm:$0xff]
        %v226 = vld [vmem:[%s222 + $0x18] sm:$0xff]
        %v227 = vld [vmem:[%s222 + $0x20] sm:$0xff]
        %v228 = vld [vmem:[%s222 + $0x28] sm:$0xff]
        %v229 = vld [vmem:[%s222 + $0x30] sm:$0xff]
        %v230 = vld [vmem:[%s222 + $0x38] sm:$0xff]
        %v231 = vld [vmem:[%s222 + $0x40] sm:$0xff]
        %v232 = vld [vmem:[%s222 + $0x48] sm:$0xff]
        %v233 = vld [vmem:[%s222 + $0x50] sm:$0xff]
        %v234 = vld [vmem:[%s222 + $0x58] sm:$0xff]
        %v235 = vld [vmem:[%s222 + $0x60] sm:$0xff]
        %v236 = vld [vmem:[%s222 + $0x68] sm:$0xff]
        %v237 = vld [vmem:[%s222 + $0x70] sm:$0xff]
        %v238 = vld [vmem:[%s222 + $0x78] sm:$0xff]
        %v239 = vld [vmem:[%s222 + $0x80] sm:$0xff]
        %v240 = vld [vmem:[%s222 + $0x88] sm:$0xff]
        %v241 = vld [vmem:[%s222 + $0x90] sm:$0xff]
        %v242 = vld [vmem:[%s222 + $0x98] sm:$0xff]
        %v243 = vld [vmem:[%s222 + $0xa0] sm:$0xff]
        %v244 = vld [vmem:[%s222 + $0xa8] sm:$0xff]
        %v245 = vld [vmem:[%s222 + $0xb0] sm:$0xff]
        %v246 = vld [vmem:[%s222 + $0xb8] sm:$0xff]
        %v247 = vld [vmem:[%s222 + $0xc0] sm:$0xff]
        %v248 = vld [vmem:[%s222 + $0xc8] sm:$0xff]
        %v249 = vld [vmem:[%s222 + $0xd0] sm:$0xff]
        %v250 = vld [vmem:[%s222 + $0xd8] sm:$0xff]
        %v251 = vld [vmem:[%s222 + $0xe0] sm:$0xff]
        %v252 = vld [vmem:[%s222 + $0xe8] sm:$0xff]
        %v253 = vld [vmem:[%s222 + $0xf0] sm:$0xff]
        %v254 = vld [vmem:[%s222 + $0xf8] sm:$0xff]
        %v255 = vld [vmem:[%s222 + $0x100] sm:$0xff]
        %v256 = vld [vmem:[%s222 + $0x108] sm:$0xff]
        %v257 = vld [vmem:[%s222 + $0x110] sm:$0xff]
        %v258 = vld [vmem:[%s222 + $0x118] sm:$0xff]
        %v259 = vld [vmem:[%s222 + $0x120] sm:$0xff]
        %v260 = vld [vmem:[%s222 + $0x128] sm:$0xff]
        %v261 = vld [vmem:[%s222 + $0x130] sm:$0xff]
        %v262 = vld [vmem:[%s222 + $0x138] sm:$0xff]
        %v263 = vld [vmem:[%s222 + $0x140] sm:$0xff]
        %v264 = vld [vmem:[%s222 + $0x148] sm:$0xff]
        %v265 = vld [vmem:[%s222 + $0x150] sm:$0xff]
        %v266 = vld [vmem:[%s222 + $0x158] sm:$0xff]
        %v267 = vld [vmem:[%s222 + $0x160] sm:$0xff]
        %v268 = vld [vmem:[%s222 + $0x168] sm:$0xff]
        %v269 = vld [vmem:[%s222 + $0x170] sm:$0xff]
        %v270 = vld [vmem:[%s222 + $0x178] sm:$0xff]
        %v271 = vld [vmem:[%s222 + $0x180] sm:$0xff]
        %v272 = vld [vmem:[%s222 + $0x188] sm:$0xff]
        %v273 = vld [vmem:[%s222 + $0x190] sm:$0xff]
        %v274 = vld [vmem:[%s222 + $0x198] sm:$0xff]
        %v275 = vld [vmem:[%s222 + $0x1a0] sm:$0xff]
        %v276 = vld [vmem:[%s222 + $0x1a8] sm:$0xff]
        %v277 = vld [vmem:[%s222 + $0x1b0] sm:$0xff]
        %v278 = vld [vmem:[%s222 + $0x1b8] sm:$0xff]
        %v279 = vld [vmem:[%s222 + $0x1c0] sm:$0xff]
        %v280 = vld [vmem:[%s222 + $0x1c8] sm:$0xff]
        %v281 = vld [vmem:[%s222 + $0x1d0] sm:$0xff]
        %v282 = vld [vmem:[%s222 + $0x1d8] sm:$0xff]
        %v283 = vld [vmem:[%s222 + $0x1e0] sm:$0xff]
        %v284 = vld [vmem:[%s222 + $0x1e8] sm:$0xff]
        %v285 = vld [vmem:[%s222 + $0x1f0] sm:$0xff]
        %v286 = vld [vmem:[%s222 + $0x1f8] sm:$0xff]
        %v287 = vld [vmem:[%s222 + $0x200] sm:$0xff]
        %v288 = vld [vmem:[%s222 + $0x208] sm:$0xff]
        %v289 = vld [vmem:[%s222 + $0x210] sm:$0xff]
        %v290 = vld [vmem:[%s222 + $0x218] sm:$0xff]
        %v291 = vld [vmem:[%s222 + $0x220] sm:$0xff]
        %v292 = vld [vmem:[%s222 + $0x228] sm:$0xff]
        %v293 = vld [vmem:[%s222 + $0x230] sm:$0xff]
        %v294 = vld [vmem:[%s222 + $0x238] sm:$0xff]
        %v295 = vld [vmem:[%s222 + $0x240] sm:$0xff]
        %v296 = vld [vmem:[%s222 + $0x248] sm:$0xff]
        %v297 = vld [vmem:[%s222 + $0x250] sm:$0xff]
        %v298 = vld [vmem:[%s222 + $0x258] sm:$0xff]
        %v299 = vld [vmem:[%s222 + $0x260] sm:$0xff]
        %v300 = vld [vmem:[%s222 + $0x268] sm:$0xff]
        %v301 = vld [vmem:[%s222 + $0x270] sm:$0xff]
        %v302 = vld [vmem:[%s222 + $0x278] sm:$0xff]
        %v303 = vld [vmem:[%s222 + $0x280] sm:$0xff]
        %v304 = vld [vmem:[%s222 + $0x288] sm:$0xff]
        %v305 = vld [vmem:[%s222 + $0x290] sm:$0xff]
        %v306 = vld [vmem:[%s222 + $0x298] sm:$0xff]
        %v307 = vld [vmem:[%s222 + $0x2a0] sm:$0xff]
        %v308 = vld [vmem:[%s222 + $0x2a8] sm:$0xff]
        %v309 = vld [vmem:[%s222 + $0x2b0] sm:$0xff]
        %v310 = vld [vmem:[%s222 + $0x2b8] sm:$0xff]
        %v311 = vld [vmem:[%s222 + $0x2c0] sm:$0xff]
        %v312 = vld [vmem:[%s222 + $0x2c8] sm:$0xff]
        %v313 = vld [vmem:[%s222 + $0x2d0] sm:$0xff]
        %v314 = vld [vmem:[%s222 + $0x2d8] sm:$0xff]
        %v315 = vld [vmem:[%s222 + $0x2e0] sm:$0xff]
        %v316 = vld [vmem:[%s222 + $0x2e8] sm:$0xff]
        %v317 = vld [vmem:[%s222 + $0x2f0] sm:$0xff]
        %v318 = vld [vmem:[%s222 + $0x2f8] sm:$0xff]
        %v319 = vld [vmem:[%s222 + $0x300] sm:$0xff]
        %v320 = vld [vmem:[%s222 + $0x308] sm:$0xff]
        %v321 = vld [vmem:[%s222 + $0x310] sm:$0xff]
        %v322 = vld [vmem:[%s222 + $0x318] sm:$0xff]
        %v323 = vld [vmem:[%s222 + $0x320] sm:$0xff]
        %v324 = vld [vmem:[%s222 + $0x328] sm:$0xff]
        %v325 = vld [vmem:[%s222 + $0x330] sm:$0xff]
        %v326 = vld [vmem:[%s222 + $0x338] sm:$0xff]
        %v327 = vld [vmem:[%s222 + $0x340] sm:$0xff]
        %v328 = vld [vmem:[%s222 + $0x348] sm:$0xff]
        %v329 = vld [vmem:[%s222 + $0x350] sm:$0xff]
        %v330 = vld [vmem:[%s222 + $0x358] sm:$0xff]
        %v331 = vld [vmem:[%s222 + $0x360] sm:$0xff]
        %v332 = vld [vmem:[%s222 + $0x368] sm:$0xff]
        %v333 = vld [vmem:[%s222 + $0x370] sm:$0xff]
        %v334 = vld [vmem:[%s222 + $0x378] sm:$0xff]
        %v335 = vld [vmem:[%s222 + $0x380] sm:$0xff]
        %v336 = vld [vmem:[%s222 + $0x388] sm:$0xff]
        %v337 = vld [vmem:[%s222 + $0x390] sm:$0xff]
        %v338 = vld [vmem:[%s222 + $0x398] sm:$0xff]
        %v339 = vld [vmem:[%s222 + $0x3a0] sm:$0xff]
        %v340 = vld [vmem:[%s222 + $0x3a8] sm:$0xff]
        %v341 = vld [vmem:[%s222 + $0x3b0] sm:$0xff]
        %v342 = vld [vmem:[%s222 + $0x3b8] sm:$0xff]
        %v343 = vld [vmem:[%s222 + $0x3c0] sm:$0xff]
        %v344 = vld [vmem:[%s222 + $0x3c8] sm:$0xff]
        %v345 = vld [vmem:[%s222 + $0x3d0] sm:$0xff]
        %v346 = vld [vmem:[%s222 + $0x3d8] sm:$0xff]
        %v347 = vld [vmem:[%s222 + $0x3e0] sm:$0xff]
        %v348 = vld [vmem:[%s222 + $0x3e8] sm:$0xff]
        %v349 = vld [vmem:[%s222 + $0x3f0] sm:$0xff]
        %v350 = vld [vmem:[%s222 + $0x3f8] sm:$0xff]
        %v351 = vld [vmem:[%s222 + $0x400] sm:$0xff]
        %v352 = vld [vmem:[%s222 + $0x408] sm:$0xff]
        %v353 = vld [vmem:[%s222 + $0x410] sm:$0xff]
        %v354 = vld [vmem:[%s222 + $0x418] sm:$0xff]
        %v355 = vld [vmem:[%s222 + $0x420] sm:$0xff]
        %v356 = vld [vmem:[%s222 + $0x428] sm:$0xff]
        %v357 = vld [vmem:[%s222 + $0x430] sm:$0xff]
        %v358 = vld [vmem:[%s222 + $0x438] sm:$0xff]
        %v359 = vld [vmem:[%s222 + $0x440] sm:$0xff]
        %v360 = vld [vmem:[%s222 + $0x448] sm:$0xff]
        %v361 = vld [vmem:[%s222 + $0x450] sm:$0xff]
        %v362 = vld [vmem:[%s222 + $0x458] sm:$0xff]
        %v363 = vld [vmem:[%s222 + $0x460] sm:$0xff]
        %v364 = vld [vmem:[%s222 + $0x468] sm:$0xff]
        %v365 = vld [vmem:[%s222 + $0x470] sm:$0xff]
        %v366 = vld [vmem:[%s222 + $0x478] sm:$0xff]
        %v367 = vld [vmem:[%s1] sm:$0xff]
        %vm368 = vcmask 64512
        %v370 = vsel %vm368, %v223, 0
        %v373 = vsel %vm368, %v224, 0
        %v376 = vsel %vm368, %v225, 0
        %v379 = vsel %vm368, %v226, 0
        %v382 = vsel %vm368, %v227, 0
        %v385 = vsel %vm368, %v228, 0
        %v388 = vsel %vm368, %v229, 0
        %v391 = vsel %vm368, %v230, 0
        %v394 = vsel %vm368, %v231, 0
        %v397 = vsel %vm368, %v232, 0
        %v400 = vsel %vm368, %v233, 0
        %v403 = vsel %vm368, %v234, 0
        %v406 = vsel %vm368, %v235, 0
        %v409 = vsel %vm368, %v236, 0
        %v412 = vsel %vm368, %v237, 0
        %v415 = vsel %vm368, %v238, 0
        %v418 = vsel %vm368, %v239, 0
        %v421 = vsel %vm368, %v240, 0
        %v424 = vsel %vm368, %v241, 0
        %v427 = vsel %vm368, %v242, 0
        %v430 = vsel %vm368, %v243, 0
        %v433 = vsel %vm368, %v244, 0
        %v436 = vsel %vm368, %v245, 0
        %v439 = vsel %vm368, %v246, 0
        %v442 = vsel %vm368, %v247, 0
        %v445 = vsel %vm368, %v248, 0
        %v448 = vsel %vm368, %v249, 0
        %v451 = vsel %vm368, %v250, 0
        %v454 = vsel %vm368, %v251, 0
        %v457 = vsel %vm368, %v252, 0
        %v460 = vsel %vm368, %v253, 0
        %v463 = vsel %vm368, %v254, 0
        %v466 = vsel %vm368, %v255, 0
        %v469 = vsel %vm368, %v256, 0
        %v472 = vsel %vm368, %v257, 0
        %v475 = vsel %vm368, %v258, 0
        %v478 = vsel %vm368, %v259, 0
        %v481 = vsel %vm368, %v260, 0
        %v484 = vsel %vm368, %v261, 0
        %v487 = vsel %vm368, %v262, 0
        %v490 = vsel %vm368, %v263, 0
        %v493 = vsel %vm368, %v264, 0
        %v496 = vsel %vm368, %v265, 0
        %v499 = vsel %vm368, %v266, 0
        %v502 = vsel %vm368, %v267, 0
        %v505 = vsel %vm368, %v268, 0
        %v508 = vsel %vm368, %v269, 0
        %v511 = vsel %vm368, %v270, 0
        %v514 = vsel %vm368, %v271, 0
        %v517 = vsel %vm368, %v272, 0
        %v520 = vsel %vm368, %v273, 0
        %v523 = vsel %vm368, %v274, 0
        %v526 = vsel %vm368, %v275, 0
        %v529 = vsel %vm368, %v276, 0
        %v532 = vsel %vm368, %v277, 0
        %v535 = vsel %vm368, %v278, 0
        %v538 = vsel %vm368, %v279, 0
        %v541 = vsel %vm368, %v280, 0
        %v544 = vsel %vm368, %v281, 0
        %v547 = vsel %vm368, %v282, 0
        %v550 = vsel %vm368, %v283, 0
        %v553 = vsel %vm368, %v284, 0
        %v556 = vsel %vm368, %v285, 0
        %v559 = vsel %vm368, %v286, 0
        %v562 = vsel %vm368, %v287, 0
        %v565 = vsel %vm368, %v288, 0
        %v568 = vsel %vm368, %v289, 0
        %v571 = vsel %vm368, %v290, 0
        %v574 = vsel %vm368, %v291, 0
        %v577 = vsel %vm368, %v292, 0
        %v580 = vsel %vm368, %v293, 0
        %v583 = vsel %vm368, %v294, 0
        %v586 = vsel %vm368, %v295, 0
        %v589 = vsel %vm368, %v296, 0
        %v592 = vsel %vm368, %v297, 0
        %v595 = vsel %vm368, %v298, 0
        %v598 = vsel %vm368, %v299, 0
        %v601 = vsel %vm368, %v300, 0
        %v604 = vsel %vm368, %v301, 0
        %v607 = vsel %vm368, %v302, 0
        %v610 = vsel %vm368, %v303, 0
        %v613 = vsel %vm368, %v304, 0
        %v616 = vsel %vm368, %v305, 0
        %v619 = vsel %vm368, %v306, 0
        %v622 = vsel %vm368, %v307, 0
        %v625 = vsel %vm368, %v308, 0
        %v628 = vsel %vm368, %v309, 0
        %v631 = vsel %vm368, %v310, 0
        %v634 = vsel %vm368, %v311, 0
        %v637 = vsel %vm368, %v312, 0
        %v640 = vsel %vm368, %v313, 0
        %v643 = vsel %vm368, %v314, 0
        %v646 = vsel %vm368, %v315, 0
        %v649 = vsel %vm368, %v316, 0
        %v652 = vsel %vm368, %v317, 0
        %v655 = vsel %vm368, %v318, 0
        %v658 = vsel %vm368, %v319, 0
        %v661 = vsel %vm368, %v320, 0
        %v664 = vsel %vm368, %v321, 0
        %v667 = vsel %vm368, %v322, 0
        %v670 = vsel %vm368, %v323, 0
        %v673 = vsel %vm368, %v324, 0
        %v676 = vsel %vm368, %v325, 0
        %v679 = vsel %vm368, %v326, 0
        %v682 = vsel %vm368, %v327, 0
        %v685 = vsel %vm368, %v328, 0
        %v688 = vsel %vm368, %v329, 0
        %v691 = vsel %vm368, %v330, 0
        %v694 = vsel %vm368, %v331, 0
        %v697 = vsel %vm368, %v332, 0
        %v700 = vsel %vm368, %v333, 0
        %v703 = vsel %vm368, %v334, 0
        %v706 = vsel %vm368, %v335, 0
        %v709 = vsel %vm368, %v336, 0
        %v712 = vsel %vm368, %v337, 0
        %v715 = vsel %vm368, %v338, 0
        %v718 = vsel %vm368, %v339, 0
        %v721 = vsel %vm368, %v340, 0
        %v724 = vsel %vm368, %v341, 0
        %v727 = vsel %vm368, %v342, 0
        %v730 = vsel %vm368, %v343, 0
        %v733 = vsel %vm368, %v344, 0
        %v736 = vsel %vm368, %v345, 0
        %v739 = vsel %vm368, %v346, 0
        %v742 = vsel %vm368, %v347, 0
        %v745 = vsel %vm368, %v348, 0
        %v748 = vsel %vm368, %v349, 0
        %v751 = vsel %vm368, %v350, 0
        %v754 = vsel %vm368, %v351, 0
        %v757 = vsel %vm368, %v352, 0
        %v760 = vsel %vm368, %v353, 0
        %v763 = vsel %vm368, %v354, 0
        %v766 = vsel %vm368, %v355, 0
        %v769 = vsel %vm368, %v356, 0
        %v772 = vsel %vm368, %v357, 0
        %v775 = vsel %vm368, %v358, 0
        %v778 = vsel %vm368, %v359, 0
        %v781 = vsel %vm368, %v360, 0
        %v784 = vsel %vm368, %v361, 0
        %v787 = vsel %vm368, %v362, 0
        %v790 = vsel %vm368, %v363, 0
        %v793 = vsel %vm368, %v364, 0
        %v796 = vsel %vm368, %v365, 0
        %v799 = vsel %vm368, %v366, 0
        %801 = vmatpush.msra.mxu0 0.0
        %802 = vmatpush.msra.mxu0 0.0
        %803 = vmatpush.msra.mxu0 0.0
        %804 = vmatpush.msra.mxu0 0.0
        %805 = vmatpush.msra.mxu0 0.0
        %806 = vmatpush.msra.mxu0 0.0
        %807 = vmatpush.msra.mxu0 0.0
        %808 = vmatpush.msra.mxu0 0.0
        %809 = vmatpush.msra.mxu0 0.0
        %810 = vmatpush.msra.mxu0 0.0
        %811 = vmatpush.msra.mxu0 0.0
        %812 = vmatpush.msra.mxu0 0.0
        %813 = vmatpush.msra.mxu0 0.0
        %814 = vmatpush.msra.mxu0 0.0
        %815 = vmatpush.msra.mxu0 0.0
        %816 = vmatpush.msra.mxu0 %v367
        %817 = vmatmul.f32.gmra.mxu0 %v370
        %v818 = vpop.f32.mrf.mxu0
        %v819 = vadd.f32 0.0, %v818
        %820 = vmatmul.f32.gmra.mxu0 %v373
        %v821 = vpop.f32.mrf.mxu0
        %v822 = vadd.f32 0.0, %v821
        %823 = vmatmul.f32.gmra.mxu0 %v376
        %v824 = vpop.f32.mrf.mxu0
        %v825 = vadd.f32 0.0, %v824
        %826 = vmatmul.f32.gmra.mxu0 %v379
        %v827 = vpop.f32.mrf.mxu0
        %v828 = vadd.f32 0.0, %v827
        %829 = vmatmul.f32.gmra.mxu0 %v382
        %v830 = vpop.f32.mrf.mxu0
        %v831 = vadd.f32 0.0, %v830
        %832 = vmatmul.f32.gmra.mxu0 %v385
        %v833 = vpop.f32.mrf.mxu0
        %v834 = vadd.f32 0.0, %v833
        %835 = vmatmul.f32.gmra.mxu0 %v388
        %v836 = vpop.f32.mrf.mxu0
        %v837 = vadd.f32 0.0, %v836
        %838 = vmatmul.f32.gmra.mxu0 %v391
        %v839 = vpop.f32.mrf.mxu0
        %v840 = vadd.f32 0.0, %v839
        %841 = vmatmul.f32.gmra.mxu0 %v394
        %v842 = vpop.f32.mrf.mxu0
        %v843 = vadd.f32 0.0, %v842
        %844 = vmatmul.f32.gmra.mxu0 %v397
        %v845 = vpop.f32.mrf.mxu0
        %v846 = vadd.f32 0.0, %v845
        %847 = vmatmul.f32.gmra.mxu0 %v400
        %v848 = vpop.f32.mrf.mxu0
        %v849 = vadd.f32 0.0, %v848
        %850 = vmatmul.f32.gmra.mxu0 %v403
        %v851 = vpop.f32.mrf.mxu0
        %v852 = vadd.f32 0.0, %v851
        %853 = vmatmul.f32.gmra.mxu0 %v406
        %v854 = vpop.f32.mrf.mxu0
        %v855 = vadd.f32 0.0, %v854
        %856 = vmatmul.f32.gmra.mxu0 %v409
        %v857 = vpop.f32.mrf.mxu0
        %v858 = vadd.f32 0.0, %v857
        %859 = vmatmul.f32.gmra.mxu0 %v412
        %v860 = vpop.f32.mrf.mxu0
        %v861 = vadd.f32 0.0, %v860
        %862 = vmatmul.f32.gmra.mxu0 %v415
        %v863 = vpop.f32.mrf.mxu0
        %v864 = vadd.f32 0.0, %v863
        %865 = vmatmul.f32.gmra.mxu0 %v418
        %v866 = vpop.f32.mrf.mxu0
        %v867 = vadd.f32 0.0, %v866
        %868 = vmatmul.f32.gmra.mxu0 %v421
        %v869 = vpop.f32.mrf.mxu0
        %v870 = vadd.f32 0.0, %v869
        %871 = vmatmul.f32.gmra.mxu0 %v424
        %v872 = vpop.f32.mrf.mxu0
        %v873 = vadd.f32 0.0, %v872
        %874 = vmatmul.f32.gmra.mxu0 %v427
        %v875 = vpop.f32.mrf.mxu0
        %v876 = vadd.f32 0.0, %v875
        %877 = vmatmul.f32.gmra.mxu0 %v430
        %v878 = vpop.f32.mrf.mxu0
        %v879 = vadd.f32 0.0, %v878
        %880 = vmatmul.f32.gmra.mxu0 %v433
        %v881 = vpop.f32.mrf.mxu0
        %v882 = vadd.f32 0.0, %v881
        %883 = vmatmul.f32.gmra.mxu0 %v436
        %v884 = vpop.f32.mrf.mxu0
        %v885 = vadd.f32 0.0, %v884
        %886 = vmatmul.f32.gmra.mxu0 %v439
        %v887 = vpop.f32.mrf.mxu0
        %v888 = vadd.f32 0.0, %v887
        %889 = vmatmul.f32.gmra.mxu0 %v442
        %v890 = vpop.f32.mrf.mxu0
        %v891 = vadd.f32 0.0, %v890
        %892 = vmatmul.f32.gmra.mxu0 %v445
        %v893 = vpop.f32.mrf.mxu0
        %v894 = vadd.f32 0.0, %v893
        %895 = vmatmul.f32.gmra.mxu0 %v448
        %v896 = vpop.f32.mrf.mxu0
        %v897 = vadd.f32 0.0, %v896
        %898 = vmatmul.f32.gmra.mxu0 %v451
        %v899 = vpop.f32.mrf.mxu0
        %v900 = vadd.f32 0.0, %v899
        %901 = vmatmul.f32.gmra.mxu0 %v454
        %v902 = vpop.f32.mrf.mxu0
        %v903 = vadd.f32 0.0, %v902
        %904 = vmatmul.f32.gmra.mxu0 %v457
        %v905 = vpop.f32.mrf.mxu0
        %v906 = vadd.f32 0.0, %v905
        %907 = vmatmul.f32.gmra.mxu0 %v460
        %v908 = vpop.f32.mrf.mxu0
        %v909 = vadd.f32 0.0, %v908
        %910 = vmatmul.f32.gmra.mxu0 %v463
        %v911 = vpop.f32.mrf.mxu0
        %v912 = vadd.f32 0.0, %v911
        %913 = vmatmul.f32.gmra.mxu0 %v466
        %v914 = vpop.f32.mrf.mxu0
        %v915 = vadd.f32 0.0, %v914
        %916 = vmatmul.f32.gmra.mxu0 %v469
        %v917 = vpop.f32.mrf.mxu0
        %v918 = vadd.f32 0.0, %v917
        %919 = vmatmul.f32.gmra.mxu0 %v472
        %v920 = vpop.f32.mrf.mxu0
        %v921 = vadd.f32 0.0, %v920
        %922 = vmatmul.f32.gmra.mxu0 %v475
        %v923 = vpop.f32.mrf.mxu0
        %v924 = vadd.f32 0.0, %v923
        %925 = vmatmul.f32.gmra.mxu0 %v478
        %v926 = vpop.f32.mrf.mxu0
        %v927 = vadd.f32 0.0, %v926
        %928 = vmatmul.f32.gmra.mxu0 %v481
        %v929 = vpop.f32.mrf.mxu0
        %v930 = vadd.f32 0.0, %v929
        %931 = vmatmul.f32.gmra.mxu0 %v484
        %v932 = vpop.f32.mrf.mxu0
        %v933 = vadd.f32 0.0, %v932
        %934 = vmatmul.f32.gmra.mxu0 %v487
        %v935 = vpop.f32.mrf.mxu0
        %v936 = vadd.f32 0.0, %v935
        %937 = vmatmul.f32.gmra.mxu0 %v490
        %v938 = vpop.f32.mrf.mxu0
        %v939 = vadd.f32 0.0, %v938
        %940 = vmatmul.f32.gmra.mxu0 %v493
        %v941 = vpop.f32.mrf.mxu0
        %v942 = vadd.f32 0.0, %v941
        %943 = vmatmul.f32.gmra.mxu0 %v496
        %v944 = vpop.f32.mrf.mxu0
        %v945 = vadd.f32 0.0, %v944
        %946 = vmatmul.f32.gmra.mxu0 %v499
        %v947 = vpop.f32.mrf.mxu0
        %v948 = vadd.f32 0.0, %v947
        %949 = vmatmul.f32.gmra.mxu0 %v502
        %v950 = vpop.f32.mrf.mxu0
        %v951 = vadd.f32 0.0, %v950
        %952 = vmatmul.f32.gmra.mxu0 %v505
        %v953 = vpop.f32.mrf.mxu0
        %v954 = vadd.f32 0.0, %v953
        %955 = vmatmul.f32.gmra.mxu0 %v508
        %v956 = vpop.f32.mrf.mxu0
        %v957 = vadd.f32 0.0, %v956
        %958 = vmatmul.f32.gmra.mxu0 %v511
        %v959 = vpop.f32.mrf.mxu0
        %v960 = vadd.f32 0.0, %v959
        %961 = vmatmul.f32.gmra.mxu0 %v514
        %v962 = vpop.f32.mrf.mxu0
        %v963 = vadd.f32 0.0, %v962
        %964 = vmatmul.f32.gmra.mxu0 %v517
        %v965 = vpop.f32.mrf.mxu0
        %v966 = vadd.f32 0.0, %v965
        %967 = vmatmul.f32.gmra.mxu0 %v520
        %v968 = vpop.f32.mrf.mxu0
        %v969 = vadd.f32 0.0, %v968
        %970 = vmatmul.f32.gmra.mxu0 %v523
        %v971 = vpop.f32.mrf.mxu0
        %v972 = vadd.f32 0.0, %v971
        %973 = vmatmul.f32.gmra.mxu0 %v526
        %v974 = vpop.f32.mrf.mxu0
        %v975 = vadd.f32 0.0, %v974
        %976 = vmatmul.f32.gmra.mxu0 %v529
        %v977 = vpop.f32.mrf.mxu0
        %v978 = vadd.f32 0.0, %v977
        %979 = vmatmul.f32.gmra.mxu0 %v532
        %v980 = vpop.f32.mrf.mxu0
        %v981 = vadd.f32 0.0, %v980
        %982 = vmatmul.f32.gmra.mxu0 %v535
        %v983 = vpop.f32.mrf.mxu0
        %v984 = vadd.f32 0.0, %v983
        %985 = vmatmul.f32.gmra.mxu0 %v538
        %v986 = vpop.f32.mrf.mxu0
        %v987 = vadd.f32 0.0, %v986
        %988 = vmatmul.f32.gmra.mxu0 %v541
        %v989 = vpop.f32.mrf.mxu0
        %v990 = vadd.f32 0.0, %v989
        %991 = vmatmul.f32.gmra.mxu0 %v544
        %v992 = vpop.f32.mrf.mxu0
        %v993 = vadd.f32 0.0, %v992
        %994 = vmatmul.f32.gmra.mxu0 %v547
        %v995 = vpop.f32.mrf.mxu0
        %v996 = vadd.f32 0.0, %v995
        %997 = vmatmul.f32.gmra.mxu0 %v550
        %v998 = vpop.f32.mrf.mxu0
        %v999 = vadd.f32 0.0, %v998
        %1000 = vmatmul.f32.gmra.mxu0 %v553
        %v1001 = vpop.f32.mrf.mxu0
        %v1002 = vadd.f32 0.0, %v1001
        %1003 = vmatmul.f32.gmra.mxu0 %v556
        %v1004 = vpop.f32.mrf.mxu0
        %v1005 = vadd.f32 0.0, %v1004
        %1006 = vmatmul.f32.gmra.mxu0 %v559
        %v1007 = vpop.f32.mrf.mxu0
        %v1008 = vadd.f32 0.0, %v1007
        %1009 = vmatmul.f32.gmra.mxu0 %v562
        %v1010 = vpop.f32.mrf.mxu0
        %v1011 = vadd.f32 0.0, %v1010
        %1012 = vmatmul.f32.gmra.mxu0 %v565
        %v1013 = vpop.f32.mrf.mxu0
        %v1014 = vadd.f32 0.0, %v1013
        %1015 = vmatmul.f32.gmra.mxu0 %v568
        %v1016 = vpop.f32.mrf.mxu0
        %v1017 = vadd.f32 0.0, %v1016
        %1018 = vmatmul.f32.gmra.mxu0 %v571
        %v1019 = vpop.f32.mrf.mxu0
        %v1020 = vadd.f32 0.0, %v1019
        %1021 = vmatmul.f32.gmra.mxu0 %v574
        %v1022 = vpop.f32.mrf.mxu0
        %v1023 = vadd.f32 0.0, %v1022
        %1024 = vmatmul.f32.gmra.mxu0 %v577
        %v1025 = vpop.f32.mrf.mxu0
        %v1026 = vadd.f32 0.0, %v1025
        %1027 = vmatmul.f32.gmra.mxu0 %v580
        %v1028 = vpop.f32.mrf.mxu0
        %v1029 = vadd.f32 0.0, %v1028
        %1030 = vmatmul.f32.gmra.mxu0 %v583
        %v1031 = vpop.f32.mrf.mxu0
        %v1032 = vadd.f32 0.0, %v1031
        %1033 = vmatmul.f32.gmra.mxu0 %v586
        %v1034 = vpop.f32.mrf.mxu0
        %v1035 = vadd.f32 0.0, %v1034
        %1036 = vmatmul.f32.gmra.mxu0 %v589
        %v1037 = vpop.f32.mrf.mxu0
        %v1038 = vadd.f32 0.0, %v1037
        %1039 = vmatmul.f32.gmra.mxu0 %v592
        %v1040 = vpop.f32.mrf.mxu0
        %v1041 = vadd.f32 0.0, %v1040
        %1042 = vmatmul.f32.gmra.mxu0 %v595
        %v1043 = vpop.f32.mrf.mxu0
        %v1044 = vadd.f32 0.0, %v1043
        %1045 = vmatmul.f32.gmra.mxu0 %v598
        %v1046 = vpop.f32.mrf.mxu0
        %v1047 = vadd.f32 0.0, %v1046
        %1048 = vmatmul.f32.gmra.mxu0 %v601
        %v1049 = vpop.f32.mrf.mxu0
        %v1050 = vadd.f32 0.0, %v1049
        %1051 = vmatmul.f32.gmra.mxu0 %v604
        %v1052 = vpop.f32.mrf.mxu0
        %v1053 = vadd.f32 0.0, %v1052
        %1054 = vmatmul.f32.gmra.mxu0 %v607
        %v1055 = vpop.f32.mrf.mxu0
        %v1056 = vadd.f32 0.0, %v1055
        %1057 = vmatmul.f32.gmra.mxu0 %v610
        %v1058 = vpop.f32.mrf.mxu0
        %v1059 = vadd.f32 0.0, %v1058
        %1060 = vmatmul.f32.gmra.mxu0 %v613
        %v1061 = vpop.f32.mrf.mxu0
        %v1062 = vadd.f32 0.0, %v1061
        %1063 = vmatmul.f32.gmra.mxu0 %v616
        %v1064 = vpop.f32.mrf.mxu0
        %v1065 = vadd.f32 0.0, %v1064
        %1066 = vmatmul.f32.gmra.mxu0 %v619
        %v1067 = vpop.f32.mrf.mxu0
        %v1068 = vadd.f32 0.0, %v1067
        %1069 = vmatmul.f32.gmra.mxu0 %v622
        %v1070 = vpop.f32.mrf.mxu0
        %v1071 = vadd.f32 0.0, %v1070
        %1072 = vmatmul.f32.gmra.mxu0 %v625
        %v1073 = vpop.f32.mrf.mxu0
        %v1074 = vadd.f32 0.0, %v1073
        %1075 = vmatmul.f32.gmra.mxu0 %v628
        %v1076 = vpop.f32.mrf.mxu0
        %v1077 = vadd.f32 0.0, %v1076
        %1078 = vmatmul.f32.gmra.mxu0 %v631
        %v1079 = vpop.f32.mrf.mxu0
        %v1080 = vadd.f32 0.0, %v1079
        %1081 = vmatmul.f32.gmra.mxu0 %v634
        %v1082 = vpop.f32.mrf.mxu0
        %v1083 = vadd.f32 0.0, %v1082
        %1084 = vmatmul.f32.gmra.mxu0 %v637
        %v1085 = vpop.f32.mrf.mxu0
        %v1086 = vadd.f32 0.0, %v1085
        %1087 = vmatmul.f32.gmra.mxu0 %v640
        %v1088 = vpop.f32.mrf.mxu0
        %v1089 = vadd.f32 0.0, %v1088
        %1090 = vmatmul.f32.gmra.mxu0 %v643
        %v1091 = vpop.f32.mrf.mxu0
        %v1092 = vadd.f32 0.0, %v1091
        %1093 = vmatmul.f32.gmra.mxu0 %v646
        %v1094 = vpop.f32.mrf.mxu0
        %v1095 = vadd.f32 0.0, %v1094
        %1096 = vmatmul.f32.gmra.mxu0 %v649
        %v1097 = vpop.f32.mrf.mxu0
        %v1098 = vadd.f32 0.0, %v1097
        %1099 = vmatmul.f32.gmra.mxu0 %v652
        %v1100 = vpop.f32.mrf.mxu0
        %v1101 = vadd.f32 0.0, %v1100
        %1102 = vmatmul.f32.gmra.mxu0 %v655
        %v1103 = vpop.f32.mrf.mxu0
        %v1104 = vadd.f32 0.0, %v1103
        %1105 = vmatmul.f32.gmra.mxu0 %v658
        %v1106 = vpop.f32.mrf.mxu0
        %v1107 = vadd.f32 0.0, %v1106
        %1108 = vmatmul.f32.gmra.mxu0 %v661
        %v1109 = vpop.f32.mrf.mxu0
        %v1110 = vadd.f32 0.0, %v1109
        %1111 = vmatmul.f32.gmra.mxu0 %v664
        %v1112 = vpop.f32.mrf.mxu0
        %v1113 = vadd.f32 0.0, %v1112
        %1114 = vmatmul.f32.gmra.mxu0 %v667
        %v1115 = vpop.f32.mrf.mxu0
        %v1116 = vadd.f32 0.0, %v1115
        %1117 = vmatmul.f32.gmra.mxu0 %v670
        %v1118 = vpop.f32.mrf.mxu0
        %v1119 = vadd.f32 0.0, %v1118
        %1120 = vmatmul.f32.gmra.mxu0 %v673
        %v1121 = vpop.f32.mrf.mxu0
        %v1122 = vadd.f32 0.0, %v1121
        %1123 = vmatmul.f32.gmra.mxu0 %v676
        %v1124 = vpop.f32.mrf.mxu0
        %v1125 = vadd.f32 0.0, %v1124
        %1126 = vmatmul.f32.gmra.mxu0 %v679
        %v1127 = vpop.f32.mrf.mxu0
        %v1128 = vadd.f32 0.0, %v1127
        %1129 = vmatmul.f32.gmra.mxu0 %v682
        %v1130 = vpop.f32.mrf.mxu0
        %v1131 = vadd.f32 0.0, %v1130
        %1132 = vmatmul.f32.gmra.mxu0 %v685
        %v1133 = vpop.f32.mrf.mxu0
        %v1134 = vadd.f32 0.0, %v1133
        %1135 = vmatmul.f32.gmra.mxu0 %v688
        %v1136 = vpop.f32.mrf.mxu0
        %v1137 = vadd.f32 0.0, %v1136
        %1138 = vmatmul.f32.gmra.mxu0 %v691
        %v1139 = vpop.f32.mrf.mxu0
        %v1140 = vadd.f32 0.0, %v1139
        %1141 = vmatmul.f32.gmra.mxu0 %v694
        %v1142 = vpop.f32.mrf.mxu0
        %v1143 = vadd.f32 0.0, %v1142
        %1144 = vmatmul.f32.gmra.mxu0 %v697
        %v1145 = vpop.f32.mrf.mxu0
        %v1146 = vadd.f32 0.0, %v1145
        %1147 = vmatmul.f32.gmra.mxu0 %v700
        %v1148 = vpop.f32.mrf.mxu0
        %v1149 = vadd.f32 0.0, %v1148
        %1150 = vmatmul.f32.gmra.mxu0 %v703
        %v1151 = vpop.f32.mrf.mxu0
        %v1152 = vadd.f32 0.0, %v1151
        %1153 = vmatmul.f32.gmra.mxu0 %v706
        %v1154 = vpop.f32.mrf.mxu0
        %v1155 = vadd.f32 0.0, %v1154
        %1156 = vmatmul.f32.gmra.mxu0 %v709
        %v1157 = vpop.f32.mrf.mxu0
        %v1158 = vadd.f32 0.0, %v1157
        %1159 = vmatmul.f32.gmra.mxu0 %v712
        %v1160 = vpop.f32.mrf.mxu0
        %v1161 = vadd.f32 0.0, %v1160
        %1162 = vmatmul.f32.gmra.mxu0 %v715
        %v1163 = vpop.f32.mrf.mxu0
        %v1164 = vadd.f32 0.0, %v1163
        %1165 = vmatmul.f32.gmra.mxu0 %v718
        %v1166 = vpop.f32.mrf.mxu0
        %v1167 = vadd.f32 0.0, %v1166
        %1168 = vmatmul.f32.gmra.mxu0 %v721
        %v1169 = vpop.f32.mrf.mxu0
        %v1170 = vadd.f32 0.0, %v1169
        %1171 = vmatmul.f32.gmra.mxu0 %v724
        %v1172 = vpop.f32.mrf.mxu0
        %v1173 = vadd.f32 0.0, %v1172
        %1174 = vmatmul.f32.gmra.mxu0 %v727
        %v1175 = vpop.f32.mrf.mxu0
        %v1176 = vadd.f32 0.0, %v1175
        %1177 = vmatmul.f32.gmra.mxu0 %v730
        %v1178 = vpop.f32.mrf.mxu0
        %v1179 = vadd.f32 0.0, %v1178
        %1180 = vmatmul.f32.gmra.mxu0 %v733
        %v1181 = vpop.f32.mrf.mxu0
        %v1182 = vadd.f32 0.0, %v1181
        %1183 = vmatmul.f32.gmra.mxu0 %v736
        %v1184 = vpop.f32.mrf.mxu0
        %v1185 = vadd.f32 0.0, %v1184
        %1186 = vmatmul.f32.gmra.mxu0 %v739
        %v1187 = vpop.f32.mrf.mxu0
        %v1188 = vadd.f32 0.0, %v1187
        %1189 = vmatmul.f32.gmra.mxu0 %v742
        %v1190 = vpop.f32.mrf.mxu0
        %v1191 = vadd.f32 0.0, %v1190
        %1192 = vmatmul.f32.gmra.mxu0 %v745
        %v1193 = vpop.f32.mrf.mxu0
        %v1194 = vadd.f32 0.0, %v1193
        %1195 = vmatmul.f32.gmra.mxu0 %v748
        %v1196 = vpop.f32.mrf.mxu0
        %v1197 = vadd.f32 0.0, %v1196
        %1198 = vmatmul.f32.gmra.mxu0 %v751
        %v1199 = vpop.f32.mrf.mxu0
        %v1200 = vadd.f32 0.0, %v1199
        %1201 = vmatmul.f32.gmra.mxu0 %v754
        %v1202 = vpop.f32.mrf.mxu0
        %v1203 = vadd.f32 0.0, %v1202
        %1204 = vmatmul.f32.gmra.mxu0 %v757
        %v1205 = vpop.f32.mrf.mxu0
        %v1206 = vadd.f32 0.0, %v1205
        %1207 = vmatmul.f32.gmra.mxu0 %v760
        %v1208 = vpop.f32.mrf.mxu0
        %v1209 = vadd.f32 0.0, %v1208
        %1210 = vmatmul.f32.gmra.mxu0 %v763
        %v1211 = vpop.f32.mrf.mxu0
        %v1212 = vadd.f32 0.0, %v1211
        %1213 = vmatmul.f32.gmra.mxu0 %v766
        %v1214 = vpop.f32.mrf.mxu0
        %v1215 = vadd.f32 0.0, %v1214
        %1216 = vmatmul.f32.gmra.mxu0 %v769
        %v1217 = vpop.f32.mrf.mxu0
        %v1218 = vadd.f32 0.0, %v1217
        %1219 = vmatmul.f32.gmra.mxu0 %v772
        %v1220 = vpop.f32.mrf.mxu0
        %v1221 = vadd.f32 0.0, %v1220
        %1222 = vmatmul.f32.gmra.mxu0 %v775
        %v1223 = vpop.f32.mrf.mxu0
        %v1224 = vadd.f32 0.0, %v1223
        %1225 = vmatmul.f32.gmra.mxu0 %v778
        %v1226 = vpop.f32.mrf.mxu0
        %v1227 = vadd.f32 0.0, %v1226
        %1228 = vmatmul.f32.gmra.mxu0 %v781
        %v1229 = vpop.f32.mrf.mxu0
        %v1230 = vadd.f32 0.0, %v1229
        %1231 = vmatmul.f32.gmra.mxu0 %v784
        %v1232 = vpop.f32.mrf.mxu0
        %v1233 = vadd.f32 0.0, %v1232
        %1234 = vmatmul.f32.gmra.mxu0 %v787
        %v1235 = vpop.f32.mrf.mxu0
        %v1236 = vadd.f32 0.0, %v1235
        %1237 = vmatmul.f32.gmra.mxu0 %v790
        %v1238 = vpop.f32.mrf.mxu0
        %v1239 = vadd.f32 0.0, %v1238
        %1240 = vmatmul.f32.gmra.mxu0 %v793
        %v1241 = vpop.f32.mrf.mxu0
        %v1242 = vadd.f32 0.0, %v1241
        %1243 = vmatmul.f32.gmra.mxu0 %v796
        %v1244 = vpop.f32.mrf.mxu0
        %v1245 = vadd.f32 0.0, %v1244
        %1246 = vmatmul.f32.gmra.mxu0 %v799
        %v1247 = vpop.f32.mrf.mxu0
        %v1248 = vadd.f32 0.0, %v1247
        %1249 = vdwg.mxu0
        %v1250 = vsub.f32 0.0, %v819
        %v1251 = vsub.f32 0.0, %v822
        %v1252 = vsub.f32 0.0, %v825
        %v1253 = vsub.f32 0.0, %v828
        %v1254 = vsub.f32 0.0, %v831
        %v1255 = vsub.f32 0.0, %v834
        %v1256 = vsub.f32 0.0, %v837
        %v1257 = vsub.f32 0.0, %v840
        %v1258 = vsub.f32 0.0, %v843
        %v1259 = vsub.f32 0.0, %v846
        %v1260 = vsub.f32 0.0, %v849
        %v1261 = vsub.f32 0.0, %v852
        %v1262 = vsub.f32 0.0, %v855
        %v1263 = vsub.f32 0.0, %v858
        %v1264 = vsub.f32 0.0, %v861
        %v1265 = vsub.f32 0.0, %v864
        %v1266 = vsub.f32 0.0, %v867
        %v1267 = vsub.f32 0.0, %v870
        %v1268 = vsub.f32 0.0, %v873
        %v1269 = vsub.f32 0.0, %v876
        %v1270 = vsub.f32 0.0, %v879
        %v1271 = vsub.f32 0.0, %v882
        %v1272 = vsub.f32 0.0, %v885
        %v1273 = vsub.f32 0.0, %v888
        %v1274 = vsub.f32 0.0, %v891
        %v1275 = vsub.f32 0.0, %v894
        %v1276 = vsub.f32 0.0, %v897
        %v1277 = vsub.f32 0.0, %v900
        %v1278 = vsub.f32 0.0, %v903
        %v1279 = vsub.f32 0.0, %v906
        %v1280 = vsub.f32 0.0, %v909
        %v1281 = vsub.f32 0.0, %v912
        %v1282 = vsub.f32 0.0, %v915
        %v1283 = vsub.f32 0.0, %v918
        %v1284 = vsub.f32 0.0, %v921
        %v1285 = vsub.f32 0.0, %v924
        %v1286 = vsub.f32 0.0, %v927
        %v1287 = vsub.f32 0.0, %v930
        %v1288 = vsub.f32 0.0, %v933
        %v1289 = vsub.f32 0.0, %v936
        %v1290 = vsub.f32 0.0, %v939
        %v1291 = vsub.f32 0.0, %v942
        %v1292 = vsub.f32 0.0, %v945
        %v1293 = vsub.f32 0.0, %v948
        %v1294 = vsub.f32 0.0, %v951
        %v1295 = vsub.f32 0.0, %v954
        %v1296 = vsub.f32 0.0, %v957
        %v1297 = vsub.f32 0.0, %v960
        %v1298 = vsub.f32 0.0, %v963
        %v1299 = vsub.f32 0.0, %v966
        %v1300 = vsub.f32 0.0, %v969
        %v1301 = vsub.f32 0.0, %v972
        %v1302 = vsub.f32 0.0, %v975
        %v1303 = vsub.f32 0.0, %v978
        %v1304 = vsub.f32 0.0, %v981
        %v1305 = vsub.f32 0.0, %v984
        %v1306 = vsub.f32 0.0, %v987
        %v1307 = vsub.f32 0.0, %v990
        %v1308 = vsub.f32 0.0, %v993
        %v1309 = vsub.f32 0.0, %v996
        %v1310 = vsub.f32 0.0, %v999
        %v1311 = vsub.f32 0.0, %v1002
        %v1312 = vsub.f32 0.0, %v1005
        %v1313 = vsub.f32 0.0, %v1008
        %v1314 = vsub.f32 0.0, %v1011
        %v1315 = vsub.f32 0.0, %v1014
        %v1316 = vsub.f32 0.0, %v1017
        %v1317 = vsub.f32 0.0, %v1020
        %v1318 = vsub.f32 0.0, %v1023
        %v1319 = vsub.f32 0.0, %v1026
        %v1320 = vsub.f32 0.0, %v1029
        %v1321 = vsub.f32 0.0, %v1032
        %v1322 = vsub.f32 0.0, %v1035
        %v1323 = vsub.f32 0.0, %v1038
        %v1324 = vsub.f32 0.0, %v1041
        %v1325 = vsub.f32 0.0, %v1044
        %v1326 = vsub.f32 0.0, %v1047
        %v1327 = vsub.f32 0.0, %v1050
        %v1328 = vsub.f32 0.0, %v1053
        %v1329 = vsub.f32 0.0, %v1056
        %v1330 = vsub.f32 0.0, %v1059
        %v1331 = vsub.f32 0.0, %v1062
        %v1332 = vsub.f32 0.0, %v1065
        %v1333 = vsub.f32 0.0, %v1068
        %v1334 = vsub.f32 0.0, %v1071
        %v1335 = vsub.f32 0.0, %v1074
        %v1336 = vsub.f32 0.0, %v1077
        %v1337 = vsub.f32 0.0, %v1080
        %v1338 = vsub.f32 0.0, %v1083
        %v1339 = vsub.f32 0.0, %v1086
        %v1340 = vsub.f32 0.0, %v1089
        %v1341 = vsub.f32 0.0, %v1092
        %v1342 = vsub.f32 0.0, %v1095
        %v1343 = vsub.f32 0.0, %v1098
        %v1344 = vsub.f32 0.0, %v1101
        %v1345 = vsub.f32 0.0, %v1104
        %v1346 = vsub.f32 0.0, %v1107
        %v1347 = vsub.f32 0.0, %v1110
        %v1348 = vsub.f32 0.0, %v1113
        %v1349 = vsub.f32 0.0, %v1116
        %v1350 = vsub.f32 0.0, %v1119
        %v1351 = vsub.f32 0.0, %v1122
        %v1352 = vsub.f32 0.0, %v1125
        %v1353 = vsub.f32 0.0, %v1128
        %v1354 = vsub.f32 0.0, %v1131
        %v1355 = vsub.f32 0.0, %v1134
        %v1356 = vsub.f32 0.0, %v1137
        %v1357 = vsub.f32 0.0, %v1140
        %v1358 = vsub.f32 0.0, %v1143
        %v1359 = vsub.f32 0.0, %v1146
        %v1360 = vsub.f32 0.0, %v1149
        %v1361 = vsub.f32 0.0, %v1152
        %v1362 = vsub.f32 0.0, %v1155
        %v1363 = vsub.f32 0.0, %v1158
        %v1364 = vsub.f32 0.0, %v1161
        %v1365 = vsub.f32 0.0, %v1164
        %v1366 = vsub.f32 0.0, %v1167
        %v1367 = vsub.f32 0.0, %v1170
        %v1368 = vsub.f32 0.0, %v1173
        %v1369 = vsub.f32 0.0, %v1176
        %v1370 = vsub.f32 0.0, %v1179
        %v1371 = vsub.f32 0.0, %v1182
        %v1372 = vsub.f32 0.0, %v1185
        %v1373 = vsub.f32 0.0, %v1188
        %v1374 = vsub.f32 0.0, %v1191
        %v1375 = vsub.f32 0.0, %v1194
        %v1376 = vsub.f32 0.0, %v1197
        %v1377 = vsub.f32 0.0, %v1200
        %v1378 = vsub.f32 0.0, %v1203
        %v1379 = vsub.f32 0.0, %v1206
        %v1380 = vsub.f32 0.0, %v1209
        %v1381 = vsub.f32 0.0, %v1212
        %v1382 = vsub.f32 0.0, %v1215
        %v1383 = vsub.f32 0.0, %v1218
        %v1384 = vsub.f32 0.0, %v1221
        %v1385 = vsub.f32 0.0, %v1224
        %v1386 = vsub.f32 0.0, %v1227
        %v1387 = vsub.f32 0.0, %v1230
        %v1388 = vsub.f32 0.0, %v1233
        %v1389 = vsub.f32 0.0, %v1236
        %v1390 = vsub.f32 0.0, %v1239
        %v1391 = vsub.f32 0.0, %v1242
        %v1392 = vsub.f32 0.0, %v1245
        %v1393 = vsub.f32 0.0, %v1248
        %v1394 = vmul.f32 %v1250, 1.442695
        %v1395 = vpow.pop %v1394
        %v1396 = vmul.f32 %v1251, 1.442695
        %v1397 = vpow.pop %v1396
        %v1398 = vmul.f32 %v1252, 1.442695
        %v1399 = vpow.pop %v1398
        %v1400 = vmul.f32 %v1253, 1.442695
        %v1401 = vpow.pop %v1400
        %v1402 = vmul.f32 %v1254, 1.442695
        %v1403 = vpow.pop %v1402
        %v1404 = vmul.f32 %v1255, 1.442695
        %v1405 = vpow.pop %v1404
        %v1406 = vmul.f32 %v1256, 1.442695
        %v1407 = vpow.pop %v1406
        %v1408 = vmul.f32 %v1257, 1.442695
        %v1409 = vpow.pop %v1408
        %v1410 = vmul.f32 %v1258, 1.442695
        %v1411 = vpow.pop %v1410
        %v1412 = vmul.f32 %v1259, 1.442695
        %v1413 = vpow.pop %v1412
        %v1414 = vmul.f32 %v1260, 1.442695
        %v1415 = vpow.pop %v1414
        %v1416 = vmul.f32 %v1261, 1.442695
        %v1417 = vpow.pop %v1416
        %v1418 = vmul.f32 %v1262, 1.442695
        %v1419 = vpow.pop %v1418
        %v1420 = vmul.f32 %v1263, 1.442695
        %v1421 = vpow.pop %v1420
        %v1422 = vmul.f32 %v1264, 1.442695
        %v1423 = vpow.pop %v1422
        %v1424 = vmul.f32 %v1265, 1.442695
        %v1425 = vpow.pop %v1424
        %v1426 = vmul.f32 %v1266, 1.442695
        %v1427 = vpow.pop %v1426
        %v1428 = vmul.f32 %v1267, 1.442695
        %v1429 = vpow.pop %v1428
        %v1430 = vmul.f32 %v1268, 1.442695
        %v1431 = vpow.pop %v1430
        %v1432 = vmul.f32 %v1269, 1.442695
        %v1433 = vpow.pop %v1432
        %v1434 = vmul.f32 %v1270, 1.442695
        %v1435 = vpow.pop %v1434
        %v1436 = vmul.f32 %v1271, 1.442695
        %v1437 = vpow.pop %v1436
        %v1438 = vmul.f32 %v1272, 1.442695
        %v1439 = vpow.pop %v1438
        %v1440 = vmul.f32 %v1273, 1.442695
        %v1441 = vpow.pop %v1440
        %v1442 = vmul.f32 %v1274, 1.442695
        %v1443 = vpow.pop %v1442
        %v1444 = vmul.f32 %v1275, 1.442695
        %v1445 = vpow.pop %v1444
        %v1446 = vmul.f32 %v1276, 1.442695
        %v1447 = vpow.pop %v1446
        %v1448 = vmul.f32 %v1277, 1.442695
        %v1449 = vpow.pop %v1448
        %v1450 = vmul.f32 %v1278, 1.442695
        %v1451 = vpow.pop %v1450
        %v1452 = vmul.f32 %v1279, 1.442695
        %v1453 = vpow.pop %v1452
        %v1454 = vmul.f32 %v1280, 1.442695
        %v1455 = vpow.pop %v1454
        %v1456 = vmul.f32 %v1281, 1.442695
        %v1457 = vpow.pop %v1456
        %v1458 = vmul.f32 %v1282, 1.442695
        %v1459 = vpow.pop %v1458
        %v1460 = vmul.f32 %v1283, 1.442695
        %v1461 = vpow.pop %v1460
        %v1462 = vmul.f32 %v1284, 1.442695
        %v1463 = vpow.pop %v1462
        %v1464 = vmul.f32 %v1285, 1.442695
        %v1465 = vpow.pop %v1464
        %v1466 = vmul.f32 %v1286, 1.442695
        %v1467 = vpow.pop %v1466
        %v1468 = vmul.f32 %v1287, 1.442695
        %v1469 = vpow.pop %v1468
        %v1470 = vmul.f32 %v1288, 1.442695
        %v1471 = vpow.pop %v1470
        %v1472 = vmul.f32 %v1289, 1.442695
        %v1473 = vpow.pop %v1472
        %v1474 = vmul.f32 %v1290, 1.442695
        %v1475 = vpow.pop %v1474
        %v1476 = vmul.f32 %v1291, 1.442695
        %v1477 = vpow.pop %v1476
        %v1478 = vmul.f32 %v1292, 1.442695
        %v1479 = vpow.pop %v1478
        %v1480 = vmul.f32 %v1293, 1.442695
        %v1481 = vpow.pop %v1480
        %v1482 = vmul.f32 %v1294, 1.442695
        %v1483 = vpow.pop %v1482
        %v1484 = vmul.f32 %v1295, 1.442695
        %v1485 = vpow.pop %v1484
        %v1486 = vmul.f32 %v1296, 1.442695
        %v1487 = vpow.pop %v1486
        %v1488 = vmul.f32 %v1297, 1.442695
        %v1489 = vpow.pop %v1488
        %v1490 = vmul.f32 %v1298, 1.442695
        %v1491 = vpow.pop %v1490
        %v1492 = vmul.f32 %v1299, 1.442695
        %v1493 = vpow.pop %v1492
        %v1494 = vmul.f32 %v1300, 1.442695
        %v1495 = vpow.pop %v1494
        %v1496 = vmul.f32 %v1301, 1.442695
        %v1497 = vpow.pop %v1496
        %v1498 = vmul.f32 %v1302, 1.442695
        %v1499 = vpow.pop %v1498
        %v1500 = vmul.f32 %v1303, 1.442695
        %v1501 = vpow.pop %v1500
        %v1502 = vmul.f32 %v1304, 1.442695
        %v1503 = vpow.pop %v1502
        %v1504 = vmul.f32 %v1305, 1.442695
        %v1505 = vpow.pop %v1504
        %v1506 = vmul.f32 %v1306, 1.442695
        %v1507 = vpow.pop %v1506
        %v1508 = vmul.f32 %v1307, 1.442695
        %v1509 = vpow.pop %v1508
        %v1510 = vmul.f32 %v1308, 1.442695
        %v1511 = vpow.pop %v1510
        %v1512 = vmul.f32 %v1309, 1.442695
        %v1513 = vpow.pop %v1512
        %v1514 = vmul.f32 %v1310, 1.442695
        %v1515 = vpow.pop %v1514
        %v1516 = vmul.f32 %v1311, 1.442695
        %v1517 = vpow.pop %v1516
        %v1518 = vmul.f32 %v1312, 1.442695
        %v1519 = vpow.pop %v1518
        %v1520 = vmul.f32 %v1313, 1.442695
        %v1521 = vpow.pop %v1520
        %v1522 = vmul.f32 %v1314, 1.442695
        %v1523 = vpow.pop %v1522
        %v1524 = vmul.f32 %v1315, 1.442695
        %v1525 = vpow.pop %v1524
        %v1526 = vmul.f32 %v1316, 1.442695
        %v1527 = vpow.pop %v1526
        %v1528 = vmul.f32 %v1317, 1.442695
        %v1529 = vpow.pop %v1528
        %v1530 = vmul.f32 %v1318, 1.442695
        %v1531 = vpow.pop %v1530
        %v1532 = vmul.f32 %v1319, 1.442695
        %v1533 = vpow.pop %v1532
        %v1534 = vmul.f32 %v1320, 1.442695
        %v1535 = vpow.pop %v1534
        %v1536 = vmul.f32 %v1321, 1.442695
        %v1537 = vpow.pop %v1536
        %v1538 = vmul.f32 %v1322, 1.442695
        %v1539 = vpow.pop %v1538
        %v1540 = vmul.f32 %v1323, 1.442695
        %v1541 = vpow.pop %v1540
        %v1542 = vmul.f32 %v1324, 1.442695
        %v1543 = vpow.pop %v1542
        %v1544 = vmul.f32 %v1325, 1.442695
        %v1545 = vpow.pop %v1544
        %v1546 = vmul.f32 %v1326, 1.442695
        %v1547 = vpow.pop %v1546
        %v1548 = vmul.f32 %v1327, 1.442695
        %v1549 = vpow.pop %v1548
        %v1550 = vmul.f32 %v1328, 1.442695
        %v1551 = vpow.pop %v1550
        %v1552 = vmul.f32 %v1329, 1.442695
        %v1553 = vpow.pop %v1552
        %v1554 = vmul.f32 %v1330, 1.442695
        %v1555 = vpow.pop %v1554
        %v1556 = vmul.f32 %v1331, 1.442695
        %v1557 = vpow.pop %v1556
        %v1558 = vmul.f32 %v1332, 1.442695
        %v1559 = vpow.pop %v1558
        %v1560 = vmul.f32 %v1333, 1.442695
        %v1561 = vpow.pop %v1560
        %v1562 = vmul.f32 %v1334, 1.442695
        %v1563 = vpow.pop %v1562
        %v1564 = vmul.f32 %v1335, 1.442695
        %v1565 = vpow.pop %v1564
        %v1566 = vmul.f32 %v1336, 1.442695
        %v1567 = vpow.pop %v1566
        %v1568 = vmul.f32 %v1337, 1.442695
        %v1569 = vpow.pop %v1568
        %v1570 = vmul.f32 %v1338, 1.442695
        %v1571 = vpow.pop %v1570
        %v1572 = vmul.f32 %v1339, 1.442695
        %v1573 = vpow.pop %v1572
        %v1574 = vmul.f32 %v1340, 1.442695
        %v1575 = vpow.pop %v1574
        %v1576 = vmul.f32 %v1341, 1.442695
        %v1577 = vpow.pop %v1576
        %v1578 = vmul.f32 %v1342, 1.442695
        %v1579 = vpow.pop %v1578
        %v1580 = vmul.f32 %v1343, 1.442695
        %v1581 = vpow.pop %v1580
        %v1582 = vmul.f32 %v1344, 1.442695
        %v1583 = vpow.pop %v1582
        %v1584 = vmul.f32 %v1345, 1.442695
        %v1585 = vpow.pop %v1584
        %v1586 = vmul.f32 %v1346, 1.442695
        %v1587 = vpow.pop %v1586
        %v1588 = vmul.f32 %v1347, 1.442695
        %v1589 = vpow.pop %v1588
        %v1590 = vmul.f32 %v1348, 1.442695
        %v1591 = vpow.pop %v1590
        %v1592 = vmul.f32 %v1349, 1.442695
        %v1593 = vpow.pop %v1592
        %v1594 = vmul.f32 %v1350, 1.442695
        %v1595 = vpow.pop %v1594
        %v1596 = vmul.f32 %v1351, 1.442695
        %v1597 = vpow.pop %v1596
        %v1598 = vmul.f32 %v1352, 1.442695
        %v1599 = vpow.pop %v1598
        %v1600 = vmul.f32 %v1353, 1.442695
        %v1601 = vpow.pop %v1600
        %v1602 = vmul.f32 %v1354, 1.442695
        %v1603 = vpow.pop %v1602
        %v1604 = vmul.f32 %v1355, 1.442695
        %v1605 = vpow.pop %v1604
        %v1606 = vmul.f32 %v1356, 1.442695
        %v1607 = vpow.pop %v1606
        %v1608 = vmul.f32 %v1357, 1.442695
        %v1609 = vpow.pop %v1608
        %v1610 = vmul.f32 %v1358, 1.442695
        %v1611 = vpow.pop %v1610
        %v1612 = vmul.f32 %v1359, 1.442695
        %v1613 = vpow.pop %v1612
        %v1614 = vmul.f32 %v1360, 1.442695
        %v1615 = vpow.pop %v1614
        %v1616 = vmul.f32 %v1361, 1.442695
        %v1617 = vpow.pop %v1616
        %v1618 = vmul.f32 %v1362, 1.442695
        %v1619 = vpow.pop %v1618
        %v1620 = vmul.f32 %v1363, 1.442695
        %v1621 = vpow.pop %v1620
        %v1622 = vmul.f32 %v1364, 1.442695
        %v1623 = vpow.pop %v1622
        %v1624 = vmul.f32 %v1365, 1.442695
        %v1625 = vpow.pop %v1624
        %v1626 = vmul.f32 %v1366, 1.442695
        %v1627 = vpow.pop %v1626
        %v1628 = vmul.f32 %v1367, 1.442695
        %v1629 = vpow.pop %v1628
        %v1630 = vmul.f32 %v1368, 1.442695
        %v1631 = vpow.pop %v1630
        %v1632 = vmul.f32 %v1369, 1.442695
        %v1633 = vpow.pop %v1632
        %v1634 = vmul.f32 %v1370, 1.442695
        %v1635 = vpow.pop %v1634
        %v1636 = vmul.f32 %v1371, 1.442695
        %v1637 = vpow.pop %v1636
        %v1638 = vmul.f32 %v1372, 1.442695
        %v1639 = vpow.pop %v1638
        %v1640 = vmul.f32 %v1373, 1.442695
        %v1641 = vpow.pop %v1640
        %v1642 = vmul.f32 %v1374, 1.442695
        %v1643 = vpow.pop %v1642
        %v1644 = vmul.f32 %v1375, 1.442695
        %v1645 = vpow.pop %v1644
        %v1646 = vmul.f32 %v1376, 1.442695
        %v1647 = vpow.pop %v1646
        %v1648 = vmul.f32 %v1377, 1.442695
        %v1649 = vpow.pop %v1648
        %v1650 = vmul.f32 %v1378, 1.442695
        %v1651 = vpow.pop %v1650
        %v1652 = vmul.f32 %v1379, 1.442695
        %v1653 = vpow.pop %v1652
        %v1654 = vmul.f32 %v1380, 1.442695
        %v1655 = vpow.pop %v1654
        %v1656 = vmul.f32 %v1381, 1.442695
        %v1657 = vpow.pop %v1656
        %v1658 = vmul.f32 %v1382, 1.442695
        %v1659 = vpow.pop %v1658
        %v1660 = vmul.f32 %v1383, 1.442695
        %v1661 = vpow.pop %v1660
        %v1662 = vmul.f32 %v1384, 1.442695
        %v1663 = vpow.pop %v1662
        %v1664 = vmul.f32 %v1385, 1.442695
        %v1665 = vpow.pop %v1664
        %v1666 = vmul.f32 %v1386, 1.442695
        %v1667 = vpow.pop %v1666
        %v1668 = vmul.f32 %v1387, 1.442695
        %v1669 = vpow.pop %v1668
        %v1670 = vmul.f32 %v1388, 1.442695
        %v1671 = vpow.pop %v1670
        %v1672 = vmul.f32 %v1389, 1.442695
        %v1673 = vpow.pop %v1672
        %v1674 = vmul.f32 %v1390, 1.442695
        %v1675 = vpow.pop %v1674
        %v1676 = vmul.f32 %v1391, 1.442695
        %v1677 = vpow.pop %v1676
        %v1678 = vmul.f32 %v1392, 1.442695
        %v1679 = vpow.pop %v1678
        %v1680 = vmul.f32 %v1393, 1.442695
        %v1681 = vpow.pop %v1680
        %v1682 = vadd.f32 %v1395, 1.0
        %v1683 = vadd.f32 %v1397, 1.0
        %v1684 = vadd.f32 %v1399, 1.0
        %v1685 = vadd.f32 %v1401, 1.0
        %v1686 = vadd.f32 %v1403, 1.0
        %v1687 = vadd.f32 %v1405, 1.0
        %v1688 = vadd.f32 %v1407, 1.0
        %v1689 = vadd.f32 %v1409, 1.0
        %v1690 = vadd.f32 %v1411, 1.0
        %v1691 = vadd.f32 %v1413, 1.0
        %v1692 = vadd.f32 %v1415, 1.0
        %v1693 = vadd.f32 %v1417, 1.0
        %v1694 = vadd.f32 %v1419, 1.0
        %v1695 = vadd.f32 %v1421, 1.0
        %v1696 = vadd.f32 %v1423, 1.0
        %v1697 = vadd.f32 %v1425, 1.0
        %v1698 = vadd.f32 %v1427, 1.0
        %v1699 = vadd.f32 %v1429, 1.0
        %v1700 = vadd.f32 %v1431, 1.0
        %v1701 = vadd.f32 %v1433, 1.0
        %v1702 = vadd.f32 %v1435, 1.0
        %v1703 = vadd.f32 %v1437, 1.0
        %v1704 = vadd.f32 %v1439, 1.0
        %v1705 = vadd.f32 %v1441, 1.0
        %v1706 = vadd.f32 %v1443, 1.0
        %v1707 = vadd.f32 %v1445, 1.0
        %v1708 = vadd.f32 %v1447, 1.0
        %v1709 = vadd.f32 %v1449, 1.0
        %v1710 = vadd.f32 %v1451, 1.0
        %v1711 = vadd.f32 %v1453, 1.0
        %v1712 = vadd.f32 %v1455, 1.0
        %v1713 = vadd.f32 %v1457, 1.0
        %v1714 = vadd.f32 %v1459, 1.0
        %v1715 = vadd.f32 %v1461, 1.0
        %v1716 = vadd.f32 %v1463, 1.0
        %v1717 = vadd.f32 %v1465, 1.0
        %v1718 = vadd.f32 %v1467, 1.0
        %v1719 = vadd.f32 %v1469, 1.0
        %v1720 = vadd.f32 %v1471, 1.0
        %v1721 = vadd.f32 %v1473, 1.0
        %v1722 = vadd.f32 %v1475, 1.0
        %v1723 = vadd.f32 %v1477, 1.0
        %v1724 = vadd.f32 %v1479, 1.0
        %v1725 = vadd.f32 %v1481, 1.0
        %v1726 = vadd.f32 %v1483, 1.0
        %v1727 = vadd.f32 %v1485, 1.0
        %v1728 = vadd.f32 %v1487, 1.0
        %v1729 = vadd.f32 %v1489, 1.0
        %v1730 = vadd.f32 %v1491, 1.0
        %v1731 = vadd.f32 %v1493, 1.0
        %v1732 = vadd.f32 %v1495, 1.0
        %v1733 = vadd.f32 %v1497, 1.0
        %v1734 = vadd.f32 %v1499, 1.0
        %v1735 = vadd.f32 %v1501, 1.0
        %v1736 = vadd.f32 %v1503, 1.0
        %v1737 = vadd.f32 %v1505, 1.0
        %v1738 = vadd.f32 %v1507, 1.0
        %v1739 = vadd.f32 %v1509, 1.0
        %v1740 = vadd.f32 %v1511, 1.0
        %v1741 = vadd.f32 %v1513, 1.0
        %v1742 = vadd.f32 %v1515, 1.0
        %v1743 = vadd.f32 %v1517, 1.0
        %v1744 = vadd.f32 %v1519, 1.0
        %v1745 = vadd.f32 %v1521, 1.0
        %v1746 = vadd.f32 %v1523, 1.0
        %v1747 = vadd.f32 %v1525, 1.0
        %v1748 = vadd.f32 %v1527, 1.0
        %v1749 = vadd.f32 %v1529, 1.0
        %v1750 = vadd.f32 %v1531, 1.0
        %v1751 = vadd.f32 %v1533, 1.0
        %v1752 = vadd.f32 %v1535, 1.0
        %v1753 = vadd.f32 %v1537, 1.0
        %v1754 = vadd.f32 %v1539, 1.0
        %v1755 = vadd.f32 %v1541, 1.0
        %v1756 = vadd.f32 %v1543, 1.0
        %v1757 = vadd.f32 %v1545, 1.0
        %v1758 = vadd.f32 %v1547, 1.0
        %v1759 = vadd.f32 %v1549, 1.0
        %v1760 = vadd.f32 %v1551, 1.0
        %v1761 = vadd.f32 %v1553, 1.0
        %v1762 = vadd.f32 %v1555, 1.0
        %v1763 = vadd.f32 %v1557, 1.0
        %v1764 = vadd.f32 %v1559, 1.0
        %v1765 = vadd.f32 %v1561, 1.0
        %v1766 = vadd.f32 %v1563, 1.0
        %v1767 = vadd.f32 %v1565, 1.0
        %v1768 = vadd.f32 %v1567, 1.0
        %v1769 = vadd.f32 %v1569, 1.0
        %v1770 = vadd.f32 %v1571, 1.0
        %v1771 = vadd.f32 %v1573, 1.0
        %v1772 = vadd.f32 %v1575, 1.0
        %v1773 = vadd.f32 %v1577, 1.0
        %v1774 = vadd.f32 %v1579, 1.0
        %v1775 = vadd.f32 %v1581, 1.0
        %v1776 = vadd.f32 %v1583, 1.0
        %v1777 = vadd.f32 %v1585, 1.0
        %v1778 = vadd.f32 %v1587, 1.0
        %v1779 = vadd.f32 %v1589, 1.0
        %v1780 = vadd.f32 %v1591, 1.0
        %v1781 = vadd.f32 %v1593, 1.0
        %v1782 = vadd.f32 %v1595, 1.0
        %v1783 = vadd.f32 %v1597, 1.0
        %v1784 = vadd.f32 %v1599, 1.0
        %v1785 = vadd.f32 %v1601, 1.0
        %v1786 = vadd.f32 %v1603, 1.0
        %v1787 = vadd.f32 %v1605, 1.0
        %v1788 = vadd.f32 %v1607, 1.0
        %v1789 = vadd.f32 %v1609, 1.0
        %v1790 = vadd.f32 %v1611, 1.0
        %v1791 = vadd.f32 %v1613, 1.0
        %v1792 = vadd.f32 %v1615, 1.0
        %v1793 = vadd.f32 %v1617, 1.0
        %v1794 = vadd.f32 %v1619, 1.0
        %v1795 = vadd.f32 %v1621, 1.0
        %v1796 = vadd.f32 %v1623, 1.0
        %v1797 = vadd.f32 %v1625, 1.0
        %v1798 = vadd.f32 %v1627, 1.0
        %v1799 = vadd.f32 %v1629, 1.0
        %v1800 = vadd.f32 %v1631, 1.0
        %v1801 = vadd.f32 %v1633, 1.0
        %v1802 = vadd.f32 %v1635, 1.0
        %v1803 = vadd.f32 %v1637, 1.0
        %v1804 = vadd.f32 %v1639, 1.0
        %v1805 = vadd.f32 %v1641, 1.0
        %v1806 = vadd.f32 %v1643, 1.0
        %v1807 = vadd.f32 %v1645, 1.0
        %v1808 = vadd.f32 %v1647, 1.0
        %v1809 = vadd.f32 %v1649, 1.0
        %v1810 = vadd.f32 %v1651, 1.0
        %v1811 = vadd.f32 %v1653, 1.0
        %v1812 = vadd.f32 %v1655, 1.0
        %v1813 = vadd.f32 %v1657, 1.0
        %v1814 = vadd.f32 %v1659, 1.0
        %v1815 = vadd.f32 %v1661, 1.0
        %v1816 = vadd.f32 %v1663, 1.0
        %v1817 = vadd.f32 %v1665, 1.0
        %v1818 = vadd.f32 %v1667, 1.0
        %v1819 = vadd.f32 %v1669, 1.0
        %v1820 = vadd.f32 %v1671, 1.0
        %v1821 = vadd.f32 %v1673, 1.0
        %v1822 = vadd.f32 %v1675, 1.0
        %v1823 = vadd.f32 %v1677, 1.0
        %v1824 = vadd.f32 %v1679, 1.0
        %v1825 = vadd.f32 %v1681, 1.0
        %v1826 = vrcp.pop %v1682
        %v1827 = vrcp.pop %v1683
        %v1828 = vrcp.pop %v1684
        %v1829 = vrcp.pop %v1685
        %v1830 = vrcp.pop %v1686
        %v1831 = vrcp.pop %v1687
        %v1832 = vrcp.pop %v1688
        %v1833 = vrcp.pop %v1689
        %v1834 = vrcp.pop %v1690
        %v1835 = vrcp.pop %v1691
        %v1836 = vrcp.pop %v1692
        %v1837 = vrcp.pop %v1693
        %v1838 = vrcp.pop %v1694
        %v1839 = vrcp.pop %v1695
        %v1840 = vrcp.pop %v1696
        %v1841 = vrcp.pop %v1697
        %v1842 = vrcp.pop %v1698
        %v1843 = vrcp.pop %v1699
        %v1844 = vrcp.pop %v1700
        %v1845 = vrcp.pop %v1701
        %v1846 = vrcp.pop %v1702
        %v1847 = vrcp.pop %v1703
        %v1848 = vrcp.pop %v1704
        %v1849 = vrcp.pop %v1705
        %v1850 = vrcp.pop %v1706
        %v1851 = vrcp.pop %v1707
        %v1852 = vrcp.pop %v1708
        %v1853 = vrcp.pop %v1709
        %v1854 = vrcp.pop %v1710
        %v1855 = vrcp.pop %v1711
        %v1856 = vrcp.pop %v1712
        %v1857 = vrcp.pop %v1713
        %v1858 = vrcp.pop %v1714
        %v1859 = vrcp.pop %v1715
        %v1860 = vrcp.pop %v1716
        %v1861 = vrcp.pop %v1717
        %v1862 = vrcp.pop %v1718
        %v1863 = vrcp.pop %v1719
        %v1864 = vrcp.pop %v1720
        %v1865 = vrcp.pop %v1721
        %v1866 = vrcp.pop %v1722
        %v1867 = vrcp.pop %v1723
        %v1868 = vrcp.pop %v1724
        %v1869 = vrcp.pop %v1725
        %v1870 = vrcp.pop %v1726
        %v1871 = vrcp.pop %v1727
        %v1872 = vrcp.pop %v1728
        %v1873 = vrcp.pop %v1729
        %v1874 = vrcp.pop %v1730
        %v1875 = vrcp.pop %v1731
        %v1876 = vrcp.pop %v1732
        %v1877 = vrcp.pop %v1733
        %v1878 = vrcp.pop %v1734
        %v1879 = vrcp.pop %v1735
        %v1880 = vrcp.pop %v1736
        %v1881 = vrcp.pop %v1737
        %v1882 = vrcp.pop %v1738
        %v1883 = vrcp.pop %v1739
        %v1884 = vrcp.pop %v1740
        %v1885 = vrcp.pop %v1741
        %v1886 = vrcp.pop %v1742
        %v1887 = vrcp.pop %v1743
        %v1888 = vrcp.pop %v1744
        %v1889 = vrcp.pop %v1745
        %v1890 = vrcp.pop %v1746
        %v1891 = vrcp.pop %v1747
        %v1892 = vrcp.pop %v1748
        %v1893 = vrcp.pop %v1749
        %v1894 = vrcp.pop %v1750
        %v1895 = vrcp.pop %v1751
        %v1896 = vrcp.pop %v1752
        %v1897 = vrcp.pop %v1753
        %v1898 = vrcp.pop %v1754
        %v1899 = vrcp.pop %v1755
        %v1900 = vrcp.pop %v1756
        %v1901 = vrcp.pop %v1757
        %v1902 = vrcp.pop %v1758
        %v1903 = vrcp.pop %v1759
        %v1904 = vrcp.pop %v1760
        %v1905 = vrcp.pop %v1761
        %v1906 = vrcp.pop %v1762
        %v1907 = vrcp.pop %v1763
        %v1908 = vrcp.pop %v1764
        %v1909 = vrcp.pop %v1765
        %v1910 = vrcp.pop %v1766
        %v1911 = vrcp.pop %v1767
        %v1912 = vrcp.pop %v1768
        %v1913 = vrcp.pop %v1769
        %v1914 = vrcp.pop %v1770
        %v1915 = vrcp.pop %v1771
        %v1916 = vrcp.pop %v1772
        %v1917 = vrcp.pop %v1773
        %v1918 = vrcp.pop %v1774
        %v1919 = vrcp.pop %v1775
        %v1920 = vrcp.pop %v1776
        %v1921 = vrcp.pop %v1777
        %v1922 = vrcp.pop %v1778
        %v1923 = vrcp.pop %v1779
        %v1924 = vrcp.pop %v1780
        %v1925 = vrcp.pop %v1781
        %v1926 = vrcp.pop %v1782
        %v1927 = vrcp.pop %v1783
        %v1928 = vrcp.pop %v1784
        %v1929 = vrcp.pop %v1785
        %v1930 = vrcp.pop %v1786
        %v1931 = vrcp.pop %v1787
        %v1932 = vrcp.pop %v1788
        %v1933 = vrcp.pop %v1789
        %v1934 = vrcp.pop %v1790
        %v1935 = vrcp.pop %v1791
        %v1936 = vrcp.pop %v1792
        %v1937 = vrcp.pop %v1793
        %v1938 = vrcp.pop %v1794
        %v1939 = vrcp.pop %v1795
        %v1940 = vrcp.pop %v1796
        %v1941 = vrcp.pop %v1797
        %v1942 = vrcp.pop %v1798
        %v1943 = vrcp.pop %v1799
        %v1944 = vrcp.pop %v1800
        %v1945 = vrcp.pop %v1801
        %v1946 = vrcp.pop %v1802
        %v1947 = vrcp.pop %v1803
        %v1948 = vrcp.pop %v1804
        %v1949 = vrcp.pop %v1805
        %v1950 = vrcp.pop %v1806
        %v1951 = vrcp.pop %v1807
        %v1952 = vrcp.pop %v1808
        %v1953 = vrcp.pop %v1809
        %v1954 = vrcp.pop %v1810
        %v1955 = vrcp.pop %v1811
        %v1956 = vrcp.pop %v1812
        %v1957 = vrcp.pop %v1813
        %v1958 = vrcp.pop %v1814
        %v1959 = vrcp.pop %v1815
        %v1960 = vrcp.pop %v1816
        %v1961 = vrcp.pop %v1817
        %v1962 = vrcp.pop %v1818
        %v1963 = vrcp.pop %v1819
        %v1964 = vrcp.pop %v1820
        %v1965 = vrcp.pop %v1821
        %v1966 = vrcp.pop %v1822
        %v1967 = vrcp.pop %v1823
        %v1968 = vrcp.pop %v1824
        %v1969 = vrcp.pop %v1825
        %v1970 = vtanh.pop %v819
        %v1971 = vtanh.pop %v822
        %v1972 = vtanh.pop %v825
        %v1973 = vtanh.pop %v828
        %v1974 = vtanh.pop %v831
        %v1975 = vtanh.pop %v834
        %v1976 = vtanh.pop %v837
        %v1977 = vtanh.pop %v840
        %v1978 = vtanh.pop %v843
        %v1979 = vtanh.pop %v846
        %v1980 = vtanh.pop %v849
        %v1981 = vtanh.pop %v852
        %v1982 = vtanh.pop %v855
        %v1983 = vtanh.pop %v858
        %v1984 = vtanh.pop %v861
        %v1985 = vtanh.pop %v864
        %v1986 = vtanh.pop %v867
        %v1987 = vtanh.pop %v870
        %v1988 = vtanh.pop %v873
        %v1989 = vtanh.pop %v876
        %v1990 = vtanh.pop %v879
        %v1991 = vtanh.pop %v882
        %v1992 = vtanh.pop %v885
        %v1993 = vtanh.pop %v888
        %v1994 = vtanh.pop %v891
        %v1995 = vtanh.pop %v894
        %v1996 = vtanh.pop %v897
        %v1997 = vtanh.pop %v900
        %v1998 = vtanh.pop %v903
        %v1999 = vtanh.pop %v906
        %v2000 = vtanh.pop %v909
        %v2001 = vtanh.pop %v912
        %v2002 = vtanh.pop %v915
        %v2003 = vtanh.pop %v918
        %v2004 = vtanh.pop %v921
        %v2005 = vtanh.pop %v924
        %v2006 = vtanh.pop %v927
        %v2007 = vtanh.pop %v930
        %v2008 = vtanh.pop %v933
        %v2009 = vtanh.pop %v936
        %v2010 = vtanh.pop %v939
        %v2011 = vtanh.pop %v942
        %v2012 = vtanh.pop %v945
        %v2013 = vtanh.pop %v948
        %v2014 = vtanh.pop %v951
        %v2015 = vtanh.pop %v954
        %v2016 = vtanh.pop %v957
        %v2017 = vtanh.pop %v960
        %v2018 = vtanh.pop %v963
        %v2019 = vtanh.pop %v966
        %v2020 = vtanh.pop %v969
        %v2021 = vtanh.pop %v972
        %v2022 = vtanh.pop %v975
        %v2023 = vtanh.pop %v978
        %v2024 = vtanh.pop %v981
        %v2025 = vtanh.pop %v984
        %v2026 = vtanh.pop %v987
        %v2027 = vtanh.pop %v990
        %v2028 = vtanh.pop %v993
        %v2029 = vtanh.pop %v996
        %v2030 = vtanh.pop %v999
        %v2031 = vtanh.pop %v1002
        %v2032 = vtanh.pop %v1005
        %v2033 = vtanh.pop %v1008
        %v2034 = vtanh.pop %v1011
        %v2035 = vtanh.pop %v1014
        %v2036 = vtanh.pop %v1017
        %v2037 = vtanh.pop %v1020
        %v2038 = vtanh.pop %v1023
        %v2039 = vtanh.pop %v1026
        %v2040 = vtanh.pop %v1029
        %v2041 = vtanh.pop %v1032
        %v2042 = vtanh.pop %v1035
        %v2043 = vtanh.pop %v1038
        %v2044 = vtanh.pop %v1041
        %v2045 = vtanh.pop %v1044
        %v2046 = vtanh.pop %v1047
        %v2047 = vtanh.pop %v1050
        %v2048 = vtanh.pop %v1053
        %v2049 = vtanh.pop %v1056
        %v2050 = vtanh.pop %v1059
        %v2051 = vtanh.pop %v1062
        %v2052 = vtanh.pop %v1065
        %v2053 = vtanh.pop %v1068
        %v2054 = vtanh.pop %v1071
        %v2055 = vtanh.pop %v1074
        %v2056 = vtanh.pop %v1077
        %v2057 = vtanh.pop %v1080
        %v2058 = vtanh.pop %v1083
        %v2059 = vtanh.pop %v1086
        %v2060 = vtanh.pop %v1089
        %v2061 = vtanh.pop %v1092
        %v2062 = vtanh.pop %v1095
        %v2063 = vtanh.pop %v1098
        %v2064 = vtanh.pop %v1101
        %v2065 = vtanh.pop %v1104
        %v2066 = vtanh.pop %v1107
        %v2067 = vtanh.pop %v1110
        %v2068 = vtanh.pop %v1113
        %v2069 = vtanh.pop %v1116
        %v2070 = vtanh.pop %v1119
        %v2071 = vtanh.pop %v1122
        %v2072 = vtanh.pop %v1125
        %v2073 = vtanh.pop %v1128
        %v2074 = vtanh.pop %v1131
        %v2075 = vtanh.pop %v1134
        %v2076 = vtanh.pop %v1137
        %v2077 = vtanh.pop %v1140
        %v2078 = vtanh.pop %v1143
        %v2079 = vtanh.pop %v1146
        %v2080 = vtanh.pop %v1149
        %v2081 = vtanh.pop %v1152
        %v2082 = vtanh.pop %v1155
        %v2083 = vtanh.pop %v1158
        %v2084 = vtanh.pop %v1161
        %v2085 = vtanh.pop %v1164
        %v2086 = vtanh.pop %v1167
        %v2087 = vtanh.pop %v1170
        %v2088 = vtanh.pop %v1173
        %v2089 = vtanh.pop %v1176
        %v2090 = vtanh.pop %v1179
        %v2091 = vtanh.pop %v1182
        %v2092 = vtanh.pop %v1185
        %v2093 = vtanh.pop %v1188
        %v2094 = vtanh.pop %v1191
        %v2095 = vtanh.pop %v1194
        %v2096 = vtanh.pop %v1197
        %v2097 = vtanh.pop %v1200
        %v2098 = vtanh.pop %v1203
        %v2099 = vtanh.pop %v1206
        %v2100 = vtanh.pop %v1209
        %v2101 = vtanh.pop %v1212
        %v2102 = vtanh.pop %v1215
        %v2103 = vtanh.pop %v1218
        %v2104 = vtanh.pop %v1221
        %v2105 = vtanh.pop %v1224
        %v2106 = vtanh.pop %v1227
        %v2107 = vtanh.pop %v1230
        %v2108 = vtanh.pop %v1233
        %v2109 = vtanh.pop %v1236
        %v2110 = vtanh.pop %v1239
        %v2111 = vtanh.pop %v1242
        %v2112 = vtanh.pop %v1245
        %v2113 = vtanh.pop %v1248
        %2258 = vrot.lane.b32.xlu0 %v1970, 32
        %v2259 = vpop.permute.xlu0 %2258
        %2260 = vrot.lane.b32.xlu0 %v1971, 32
        %v2261 = vpop.permute.xlu0 %2260
        %2262 = vrot.lane.b32.xlu0 %v1972, 32
        %v2263 = vpop.permute.xlu0 %2262
        %2264 = vrot.lane.b32.xlu0 %v1973, 32
        %v2265 = vpop.permute.xlu0 %2264
        %2266 = vrot.lane.b32.xlu0 %v1974, 32
        %v2267 = vpop.permute.xlu0 %2266
        %2268 = vrot.lane.b32.xlu0 %v1975, 32
        %v2269 = vpop.permute.xlu0 %2268
        %2270 = vrot.lane.b32.xlu0 %v1976, 32
        %v2271 = vpop.permute.xlu0 %2270
        %2272 = vrot.lane.b32.xlu0 %v1977, 32
        %v2273 = vpop.permute.xlu0 %2272
        %2274 = vrot.lane.b32.xlu0 %v1978, 32
        %v2275 = vpop.permute.xlu0 %2274
        %2276 = vrot.lane.b32.xlu0 %v1979, 32
        %v2277 = vpop.permute.xlu0 %2276
        %2278 = vrot.lane.b32.xlu0 %v1980, 32
        %v2279 = vpop.permute.xlu0 %2278
        %2280 = vrot.lane.b32.xlu0 %v1981, 32
        %v2281 = vpop.permute.xlu0 %2280
        %2282 = vrot.lane.b32.xlu0 %v1982, 32
        %v2283 = vpop.permute.xlu0 %2282
        %2284 = vrot.lane.b32.xlu0 %v1983, 32
        %v2285 = vpop.permute.xlu0 %2284
        %2286 = vrot.lane.b32.xlu0 %v1984, 32
        %v2287 = vpop.permute.xlu0 %2286
        %2288 = vrot.lane.b32.xlu0 %v1985, 32
        %v2289 = vpop.permute.xlu0 %2288
        %2290 = vrot.lane.b32.xlu0 %v1986, 32
        %v2291 = vpop.permute.xlu0 %2290
        %2292 = vrot.lane.b32.xlu0 %v1987, 32
        %v2293 = vpop.permute.xlu0 %2292
        %2294 = vrot.lane.b32.xlu0 %v1988, 32
        %v2295 = vpop.permute.xlu0 %2294
        %2296 = vrot.lane.b32.xlu0 %v1989, 32
        %v2297 = vpop.permute.xlu0 %2296
        %2298 = vrot.lane.b32.xlu0 %v1990, 32
        %v2299 = vpop.permute.xlu0 %2298
        %2300 = vrot.lane.b32.xlu0 %v1991, 32
        %v2301 = vpop.permute.xlu0 %2300
        %2302 = vrot.lane.b32.xlu0 %v1992, 32
        %v2303 = vpop.permute.xlu0 %2302
        %2304 = vrot.lane.b32.xlu0 %v1993, 32
        %v2305 = vpop.permute.xlu0 %2304
        %2306 = vrot.lane.b32.xlu0 %v1994, 32
        %v2307 = vpop.permute.xlu0 %2306
        %2308 = vrot.lane.b32.xlu0 %v1995, 32
        %v2309 = vpop.permute.xlu0 %2308
        %2310 = vrot.lane.b32.xlu0 %v1996, 32
        %v2311 = vpop.permute.xlu0 %2310
        %2312 = vrot.lane.b32.xlu0 %v1997, 32
        %v2313 = vpop.permute.xlu0 %2312
        %2314 = vrot.lane.b32.xlu0 %v1998, 32
        %v2315 = vpop.permute.xlu0 %2314
        %2316 = vrot.lane.b32.xlu0 %v1999, 32
        %v2317 = vpop.permute.xlu0 %2316
        %2318 = vrot.lane.b32.xlu0 %v2000, 32
        %v2319 = vpop.permute.xlu0 %2318
        %2320 = vrot.lane.b32.xlu0 %v2001, 32
        %v2321 = vpop.permute.xlu0 %2320
        %2322 = vrot.lane.b32.xlu0 %v2002, 32
        %v2323 = vpop.permute.xlu0 %2322
        %2324 = vrot.lane.b32.xlu0 %v2003, 32
        %v2325 = vpop.permute.xlu0 %2324
        %2326 = vrot.lane.b32.xlu0 %v2004, 32
        %v2327 = vpop.permute.xlu0 %2326
        %2328 = vrot.lane.b32.xlu0 %v2005, 32
        %v2329 = vpop.permute.xlu0 %2328
        %2330 = vrot.lane.b32.xlu0 %v2006, 32
        %v2331 = vpop.permute.xlu0 %2330
        %2332 = vrot.lane.b32.xlu0 %v2007, 32
        %v2333 = vpop.permute.xlu0 %2332
        %2334 = vrot.lane.b32.xlu0 %v2008, 32
        %v2335 = vpop.permute.xlu0 %2334
        %2336 = vrot.lane.b32.xlu0 %v2009, 32
        %v2337 = vpop.permute.xlu0 %2336
        %2338 = vrot.lane.b32.xlu0 %v2010, 32
        %v2339 = vpop.permute.xlu0 %2338
        %2340 = vrot.lane.b32.xlu0 %v2011, 32
        %v2341 = vpop.permute.xlu0 %2340
        %2342 = vrot.lane.b32.xlu0 %v2012, 32
        %v2343 = vpop.permute.xlu0 %2342
        %2344 = vrot.lane.b32.xlu0 %v2013, 32
        %v2345 = vpop.permute.xlu0 %2344
        %2346 = vrot.lane.b32.xlu0 %v2014, 32
        %v2347 = vpop.permute.xlu0 %2346
        %2348 = vrot.lane.b32.xlu0 %v2015, 32
        %v2349 = vpop.permute.xlu0 %2348
        %2350 = vrot.lane.b32.xlu0 %v2016, 32
        %v2351 = vpop.permute.xlu0 %2350
        %2352 = vrot.lane.b32.xlu0 %v2017, 32
        %v2353 = vpop.permute.xlu0 %2352
        %2354 = vrot.lane.b32.xlu0 %v2018, 32
        %v2355 = vpop.permute.xlu0 %2354
        %2356 = vrot.lane.b32.xlu0 %v2019, 32
        %v2357 = vpop.permute.xlu0 %2356
        %2358 = vrot.lane.b32.xlu0 %v2020, 32
        %v2359 = vpop.permute.xlu0 %2358
        %2360 = vrot.lane.b32.xlu0 %v2021, 32
        %v2361 = vpop.permute.xlu0 %2360
        %2362 = vrot.lane.b32.xlu0 %v2022, 32
        %v2363 = vpop.permute.xlu0 %2362
        %2364 = vrot.lane.b32.xlu0 %v2023, 32
        %v2365 = vpop.permute.xlu0 %2364
        %2366 = vrot.lane.b32.xlu0 %v2024, 32
        %v2367 = vpop.permute.xlu0 %2366
        %2368 = vrot.lane.b32.xlu0 %v2025, 32
        %v2369 = vpop.permute.xlu0 %2368
        %2370 = vrot.lane.b32.xlu0 %v2026, 32
        %v2371 = vpop.permute.xlu0 %2370
        %2372 = vrot.lane.b32.xlu0 %v2027, 32
        %v2373 = vpop.permute.xlu0 %2372
        %2374 = vrot.lane.b32.xlu0 %v2028, 32
        %v2375 = vpop.permute.xlu0 %2374
        %2376 = vrot.lane.b32.xlu0 %v2029, 32
        %v2377 = vpop.permute.xlu0 %2376
        %2378 = vrot.lane.b32.xlu0 %v2030, 32
        %v2379 = vpop.permute.xlu0 %2378
        %2380 = vrot.lane.b32.xlu0 %v2031, 32
        %v2381 = vpop.permute.xlu0 %2380
        %2382 = vrot.lane.b32.xlu0 %v2032, 32
        %v2383 = vpop.permute.xlu0 %2382
        %2384 = vrot.lane.b32.xlu0 %v2033, 32
        %v2385 = vpop.permute.xlu0 %2384
        %2386 = vrot.lane.b32.xlu0 %v2034, 32
        %v2387 = vpop.permute.xlu0 %2386
        %2388 = vrot.lane.b32.xlu0 %v2035, 32
        %v2389 = vpop.permute.xlu0 %2388
        %2390 = vrot.lane.b32.xlu0 %v2036, 32
        %v2391 = vpop.permute.xlu0 %2390
        %2392 = vrot.lane.b32.xlu0 %v2037, 32
        %v2393 = vpop.permute.xlu0 %2392
        %2394 = vrot.lane.b32.xlu0 %v2038, 32
        %v2395 = vpop.permute.xlu0 %2394
        %2396 = vrot.lane.b32.xlu0 %v2039, 32
        %v2397 = vpop.permute.xlu0 %2396
        %2398 = vrot.lane.b32.xlu0 %v2040, 32
        %v2399 = vpop.permute.xlu0 %2398
        %2400 = vrot.lane.b32.xlu0 %v2041, 32
        %v2401 = vpop.permute.xlu0 %2400
        %2402 = vrot.lane.b32.xlu0 %v2042, 32
        %v2403 = vpop.permute.xlu0 %2402
        %2404 = vrot.lane.b32.xlu0 %v2043, 32
        %v2405 = vpop.permute.xlu0 %2404
        %2406 = vrot.lane.b32.xlu0 %v2044, 32
        %v2407 = vpop.permute.xlu0 %2406
        %2408 = vrot.lane.b32.xlu0 %v2045, 32
        %v2409 = vpop.permute.xlu0 %2408
        %2410 = vrot.lane.b32.xlu0 %v2046, 32
        %v2411 = vpop.permute.xlu0 %2410
        %2412 = vrot.lane.b32.xlu0 %v2047, 32
        %v2413 = vpop.permute.xlu0 %2412
        %2414 = vrot.lane.b32.xlu0 %v2048, 32
        %v2415 = vpop.permute.xlu0 %2414
        %2416 = vrot.lane.b32.xlu0 %v2049, 32
        %v2417 = vpop.permute.xlu0 %2416
        %2418 = vrot.lane.b32.xlu0 %v2050, 32
        %v2419 = vpop.permute.xlu0 %2418
        %2420 = vrot.lane.b32.xlu0 %v2051, 32
        %v2421 = vpop.permute.xlu0 %2420
        %2422 = vrot.lane.b32.xlu0 %v2052, 32
        %v2423 = vpop.permute.xlu0 %2422
        %2424 = vrot.lane.b32.xlu0 %v2053, 32
        %v2425 = vpop.permute.xlu0 %2424
        %2426 = vrot.lane.b32.xlu0 %v2054, 32
        %v2427 = vpop.permute.xlu0 %2426
        %2428 = vrot.lane.b32.xlu0 %v2055, 32
        %v2429 = vpop.permute.xlu0 %2428
        %2430 = vrot.lane.b32.xlu0 %v2056, 32
        %v2431 = vpop.permute.xlu0 %2430
        %2432 = vrot.lane.b32.xlu0 %v2057, 32
        %v2433 = vpop.permute.xlu0 %2432
        %2434 = vrot.lane.b32.xlu0 %v2058, 32
        %v2435 = vpop.permute.xlu0 %2434
        %2436 = vrot.lane.b32.xlu0 %v2059, 32
        %v2437 = vpop.permute.xlu0 %2436
        %2438 = vrot.lane.b32.xlu0 %v2060, 32
        %v2439 = vpop.permute.xlu0 %2438
        %2440 = vrot.lane.b32.xlu0 %v2061, 32
        %v2441 = vpop.permute.xlu0 %2440
        %2442 = vrot.lane.b32.xlu0 %v2062, 32
        %v2443 = vpop.permute.xlu0 %2442
        %2444 = vrot.lane.b32.xlu0 %v2063, 32
        %v2445 = vpop.permute.xlu0 %2444
        %2446 = vrot.lane.b32.xlu0 %v2064, 32
        %v2447 = vpop.permute.xlu0 %2446
        %2448 = vrot.lane.b32.xlu0 %v2065, 32
        %v2449 = vpop.permute.xlu0 %2448
        %2450 = vrot.lane.b32.xlu0 %v2066, 32
        %v2451 = vpop.permute.xlu0 %2450
        %2452 = vrot.lane.b32.xlu0 %v2067, 32
        %v2453 = vpop.permute.xlu0 %2452
        %2454 = vrot.lane.b32.xlu0 %v2068, 32
        %v2455 = vpop.permute.xlu0 %2454
        %2456 = vrot.lane.b32.xlu0 %v2069, 32
        %v2457 = vpop.permute.xlu0 %2456
        %2458 = vrot.lane.b32.xlu0 %v2070, 32
        %v2459 = vpop.permute.xlu0 %2458
        %2460 = vrot.lane.b32.xlu0 %v2071, 32
        %v2461 = vpop.permute.xlu0 %2460
        %2462 = vrot.lane.b32.xlu0 %v2072, 32
        %v2463 = vpop.permute.xlu0 %2462
        %2464 = vrot.lane.b32.xlu0 %v2073, 32
        %v2465 = vpop.permute.xlu0 %2464
        %2466 = vrot.lane.b32.xlu0 %v2074, 32
        %v2467 = vpop.permute.xlu0 %2466
        %2468 = vrot.lane.b32.xlu0 %v2075, 32
        %v2469 = vpop.permute.xlu0 %2468
        %2470 = vrot.lane.b32.xlu0 %v2076, 32
        %v2471 = vpop.permute.xlu0 %2470
        %2472 = vrot.lane.b32.xlu0 %v2077, 32
        %v2473 = vpop.permute.xlu0 %2472
        %2474 = vrot.lane.b32.xlu0 %v2078, 32
        %v2475 = vpop.permute.xlu0 %2474
        %2476 = vrot.lane.b32.xlu0 %v2079, 32
        %v2477 = vpop.permute.xlu0 %2476
        %2478 = vrot.lane.b32.xlu0 %v2080, 32
        %v2479 = vpop.permute.xlu0 %2478
        %2480 = vrot.lane.b32.xlu0 %v2081, 32
        %v2481 = vpop.permute.xlu0 %2480
        %2482 = vrot.lane.b32.xlu0 %v2082, 32
        %v2483 = vpop.permute.xlu0 %2482
        %2484 = vrot.lane.b32.xlu0 %v2083, 32
        %v2485 = vpop.permute.xlu0 %2484
        %2486 = vrot.lane.b32.xlu0 %v2084, 32
        %v2487 = vpop.permute.xlu0 %2486
        %2488 = vrot.lane.b32.xlu0 %v2085, 32
        %v2489 = vpop.permute.xlu0 %2488
        %2490 = vrot.lane.b32.xlu0 %v2086, 32
        %v2491 = vpop.permute.xlu0 %2490
        %2492 = vrot.lane.b32.xlu0 %v2087, 32
        %v2493 = vpop.permute.xlu0 %2492
        %2494 = vrot.lane.b32.xlu0 %v2088, 32
        %v2495 = vpop.permute.xlu0 %2494
        %2496 = vrot.lane.b32.xlu0 %v2089, 32
        %v2497 = vpop.permute.xlu0 %2496
        %2498 = vrot.lane.b32.xlu0 %v2090, 32
        %v2499 = vpop.permute.xlu0 %2498
        %2500 = vrot.lane.b32.xlu0 %v2091, 32
        %v2501 = vpop.permute.xlu0 %2500
        %2502 = vrot.lane.b32.xlu0 %v2092, 32
        %v2503 = vpop.permute.xlu0 %2502
        %2504 = vrot.lane.b32.xlu0 %v2093, 32
        %v2505 = vpop.permute.xlu0 %2504
        %2506 = vrot.lane.b32.xlu0 %v2094, 32
        %v2507 = vpop.permute.xlu0 %2506
        %2508 = vrot.lane.b32.xlu0 %v2095, 32
        %v2509 = vpop.permute.xlu0 %2508
        %2510 = vrot.lane.b32.xlu0 %v2096, 32
        %v2511 = vpop.permute.xlu0 %2510
        %2512 = vrot.lane.b32.xlu0 %v2097, 32
        %v2513 = vpop.permute.xlu0 %2512
        %2514 = vrot.lane.b32.xlu0 %v2098, 32
        %v2515 = vpop.permute.xlu0 %2514
        %2516 = vrot.lane.b32.xlu0 %v2099, 32
        %v2517 = vpop.permute.xlu0 %2516
        %2518 = vrot.lane.b32.xlu0 %v2100, 32
        %v2519 = vpop.permute.xlu0 %2518
        %2520 = vrot.lane.b32.xlu0 %v2101, 32
        %v2521 = vpop.permute.xlu0 %2520
        %2522 = vrot.lane.b32.xlu0 %v2102, 32
        %v2523 = vpop.permute.xlu0 %2522
        %2524 = vrot.lane.b32.xlu0 %v2103, 32
        %v2525 = vpop.permute.xlu0 %2524
        %2526 = vrot.lane.b32.xlu0 %v2104, 32
        %v2527 = vpop.permute.xlu0 %2526
        %2528 = vrot.lane.b32.xlu0 %v2105, 32
        %v2529 = vpop.permute.xlu0 %2528
        %2530 = vrot.lane.b32.xlu0 %v2106, 32
        %v2531 = vpop.permute.xlu0 %2530
        %2532 = vrot.lane.b32.xlu0 %v2107, 32
        %v2533 = vpop.permute.xlu0 %2532
        %2534 = vrot.lane.b32.xlu0 %v2108, 32
        %v2535 = vpop.permute.xlu0 %2534
        %2536 = vrot.lane.b32.xlu0 %v2109, 32
        %v2537 = vpop.permute.xlu0 %2536
        %2538 = vrot.lane.b32.xlu0 %v2110, 32
        %v2539 = vpop.permute.xlu0 %2538
        %2540 = vrot.lane.b32.xlu0 %v2111, 32
        %v2541 = vpop.permute.xlu0 %2540
        %2542 = vrot.lane.b32.xlu0 %v2112, 32
        %v2543 = vpop.permute.xlu0 %2542
        %2544 = vrot.lane.b32.xlu0 %v2113, 32
        %v2545 = vpop.permute.xlu0 %2544
        %v2690 = vmul.f32 %v1826, %v2259
        %v2691 = vmul.f32 %v1827, %v2261
        %v2692 = vmul.f32 %v1828, %v2263
        %v2693 = vmul.f32 %v1829, %v2265
        %v2694 = vmul.f32 %v1830, %v2267
        %v2695 = vmul.f32 %v1831, %v2269
        %v2696 = vmul.f32 %v1832, %v2271
        %v2697 = vmul.f32 %v1833, %v2273
        %v2698 = vmul.f32 %v1834, %v2275
        %v2699 = vmul.f32 %v1835, %v2277
        %v2700 = vmul.f32 %v1836, %v2279
        %v2701 = vmul.f32 %v1837, %v2281
        %v2702 = vmul.f32 %v1838, %v2283
        %v2703 = vmul.f32 %v1839, %v2285
        %v2704 = vmul.f32 %v1840, %v2287
        %v2705 = vmul.f32 %v1841, %v2289
        %v2706 = vmul.f32 %v1842, %v2291
        %v2707 = vmul.f32 %v1843, %v2293
        %v2708 = vmul.f32 %v1844, %v2295
        %v2709 = vmul.f32 %v1845, %v2297
        %v2710 = vmul.f32 %v1846, %v2299
        %v2711 = vmul.f32 %v1847, %v2301
        %v2712 = vmul.f32 %v1848, %v2303
        %v2713 = vmul.f32 %v1849, %v2305
        %v2714 = vmul.f32 %v1850, %v2307
        %v2715 = vmul.f32 %v1851, %v2309
        %v2716 = vmul.f32 %v1852, %v2311
        %v2717 = vmul.f32 %v1853, %v2313
        %v2718 = vmul.f32 %v1854, %v2315
        %v2719 = vmul.f32 %v1855, %v2317
        %v2720 = vmul.f32 %v1856, %v2319
        %v2721 = vmul.f32 %v1857, %v2321
        %v2722 = vmul.f32 %v1858, %v2323
        %v2723 = vmul.f32 %v1859, %v2325
        %v2724 = vmul.f32 %v1860, %v2327
        %v2725 = vmul.f32 %v1861, %v2329
        %v2726 = vmul.f32 %v1862, %v2331
        %v2727 = vmul.f32 %v1863, %v2333
        %v2728 = vmul.f32 %v1864, %v2335
        %v2729 = vmul.f32 %v1865, %v2337
        %v2730 = vmul.f32 %v1866, %v2339
        %v2731 = vmul.f32 %v1867, %v2341
        %v2732 = vmul.f32 %v1868, %v2343
        %v2733 = vmul.f32 %v1869, %v2345
        %v2734 = vmul.f32 %v1870, %v2347
        %v2735 = vmul.f32 %v1871, %v2349
        %v2736 = vmul.f32 %v1872, %v2351
        %v2737 = vmul.f32 %v1873, %v2353
        %v2738 = vmul.f32 %v1874, %v2355
        %v2739 = vmul.f32 %v1875, %v2357
        %v2740 = vmul.f32 %v1876, %v2359
        %v2741 = vmul.f32 %v1877, %v2361
        %v2742 = vmul.f32 %v1878, %v2363
        %v2743 = vmul.f32 %v1879, %v2365
        %v2744 = vmul.f32 %v1880, %v2367
        %v2745 = vmul.f32 %v1881, %v2369
        %v2746 = vmul.f32 %v1882, %v2371
        %v2747 = vmul.f32 %v1883, %v2373
        %v2748 = vmul.f32 %v1884, %v2375
        %v2749 = vmul.f32 %v1885, %v2377
        %v2750 = vmul.f32 %v1886, %v2379
        %v2751 = vmul.f32 %v1887, %v2381
        %v2752 = vmul.f32 %v1888, %v2383
        %v2753 = vmul.f32 %v1889, %v2385
        %v2754 = vmul.f32 %v1890, %v2387
        %v2755 = vmul.f32 %v1891, %v2389
        %v2756 = vmul.f32 %v1892, %v2391
        %v2757 = vmul.f32 %v1893, %v2393
        %v2758 = vmul.f32 %v1894, %v2395
        %v2759 = vmul.f32 %v1895, %v2397
        %v2760 = vmul.f32 %v1896, %v2399
        %v2761 = vmul.f32 %v1897, %v2401
        %v2762 = vmul.f32 %v1898, %v2403
        %v2763 = vmul.f32 %v1899, %v2405
        %v2764 = vmul.f32 %v1900, %v2407
        %v2765 = vmul.f32 %v1901, %v2409
        %v2766 = vmul.f32 %v1902, %v2411
        %v2767 = vmul.f32 %v1903, %v2413
        %v2768 = vmul.f32 %v1904, %v2415
        %v2769 = vmul.f32 %v1905, %v2417
        %v2770 = vmul.f32 %v1906, %v2419
        %v2771 = vmul.f32 %v1907, %v2421
        %v2772 = vmul.f32 %v1908, %v2423
        %v2773 = vmul.f32 %v1909, %v2425
        %v2774 = vmul.f32 %v1910, %v2427
        %v2775 = vmul.f32 %v1911, %v2429
        %v2776 = vmul.f32 %v1912, %v2431
        %v2777 = vmul.f32 %v1913, %v2433
        %v2778 = vmul.f32 %v1914, %v2435
        %v2779 = vmul.f32 %v1915, %v2437
        %v2780 = vmul.f32 %v1916, %v2439
        %v2781 = vmul.f32 %v1917, %v2441
        %v2782 = vmul.f32 %v1918, %v2443
        %v2783 = vmul.f32 %v1919, %v2445
        %v2784 = vmul.f32 %v1920, %v2447
        %v2785 = vmul.f32 %v1921, %v2449
        %v2786 = vmul.f32 %v1922, %v2451
        %v2787 = vmul.f32 %v1923, %v2453
        %v2788 = vmul.f32 %v1924, %v2455
        %v2789 = vmul.f32 %v1925, %v2457
        %v2790 = vmul.f32 %v1926, %v2459
        %v2791 = vmul.f32 %v1927, %v2461
        %v2792 = vmul.f32 %v1928, %v2463
        %v2793 = vmul.f32 %v1929, %v2465
        %v2794 = vmul.f32 %v1930, %v2467
        %v2795 = vmul.f32 %v1931, %v2469
        %v2796 = vmul.f32 %v1932, %v2471
        %v2797 = vmul.f32 %v1933, %v2473
        %v2798 = vmul.f32 %v1934, %v2475
        %v2799 = vmul.f32 %v1935, %v2477
        %v2800 = vmul.f32 %v1936, %v2479
        %v2801 = vmul.f32 %v1937, %v2481
        %v2802 = vmul.f32 %v1938, %v2483
        %v2803 = vmul.f32 %v1939, %v2485
        %v2804 = vmul.f32 %v1940, %v2487
        %v2805 = vmul.f32 %v1941, %v2489
        %v2806 = vmul.f32 %v1942, %v2491
        %v2807 = vmul.f32 %v1943, %v2493
        %v2808 = vmul.f32 %v1944, %v2495
        %v2809 = vmul.f32 %v1945, %v2497
        %v2810 = vmul.f32 %v1946, %v2499
        %v2811 = vmul.f32 %v1947, %v2501
        %v2812 = vmul.f32 %v1948, %v2503
        %v2813 = vmul.f32 %v1949, %v2505
        %v2814 = vmul.f32 %v1950, %v2507
        %v2815 = vmul.f32 %v1951, %v2509
        %v2816 = vmul.f32 %v1952, %v2511
        %v2817 = vmul.f32 %v1953, %v2513
        %v2818 = vmul.f32 %v1954, %v2515
        %v2819 = vmul.f32 %v1955, %v2517
        %v2820 = vmul.f32 %v1956, %v2519
        %v2821 = vmul.f32 %v1957, %v2521
        %v2822 = vmul.f32 %v1958, %v2523
        %v2823 = vmul.f32 %v1959, %v2525
        %v2824 = vmul.f32 %v1960, %v2527
        %v2825 = vmul.f32 %v1961, %v2529
        %v2826 = vmul.f32 %v1962, %v2531
        %v2827 = vmul.f32 %v1963, %v2533
        %v2828 = vmul.f32 %v1964, %v2535
        %v2829 = vmul.f32 %v1965, %v2537
        %v2830 = vmul.f32 %v1966, %v2539
        %v2831 = vmul.f32 %v1967, %v2541
        %v2832 = vmul.f32 %v1968, %v2543
        %v2833 = vmul.f32 %v1969, %v2545
        %v2834 = vtanh.pop %v2690
        %v2835 = vtanh.pop %v2691
        %v2836 = vtanh.pop %v2692
        %v2837 = vtanh.pop %v2693
        %v2838 = vtanh.pop %v2694
        %v2839 = vtanh.pop %v2695
        %v2840 = vtanh.pop %v2696
        %v2841 = vtanh.pop %v2697
        %v2842 = vtanh.pop %v2698
        %v2843 = vtanh.pop %v2699
        %v2844 = vtanh.pop %v2700
        %v2845 = vtanh.pop %v2701
        %v2846 = vtanh.pop %v2702
        %v2847 = vtanh.pop %v2703
        %v2848 = vtanh.pop %v2704
        %v2849 = vtanh.pop %v2705
        %v2850 = vtanh.pop %v2706
        %v2851 = vtanh.pop %v2707
        %v2852 = vtanh.pop %v2708
        %v2853 = vtanh.pop %v2709
        %v2854 = vtanh.pop %v2710
        %v2855 = vtanh.pop %v2711
        %v2856 = vtanh.pop %v2712
        %v2857 = vtanh.pop %v2713
        %v2858 = vtanh.pop %v2714
        %v2859 = vtanh.pop %v2715
        %v2860 = vtanh.pop %v2716
        %v2861 = vtanh.pop %v2717
        %v2862 = vtanh.pop %v2718
        %v2863 = vtanh.pop %v2719
        %v2864 = vtanh.pop %v2720
        %v2865 = vtanh.pop %v2721
        %v2866 = vtanh.pop %v2722
        %v2867 = vtanh.pop %v2723
        %v2868 = vtanh.pop %v2724
        %v2869 = vtanh.pop %v2725
        %v2870 = vtanh.pop %v2726
        %v2871 = vtanh.pop %v2727
        %v2872 = vtanh.pop %v2728
        %v2873 = vtanh.pop %v2729
        %v2874 = vtanh.pop %v2730
        %v2875 = vtanh.pop %v2731
        %v2876 = vtanh.pop %v2732
        %v2877 = vtanh.pop %v2733
        %v2878 = vtanh.pop %v2734
        %v2879 = vtanh.pop %v2735
        %v2880 = vtanh.pop %v2736
        %v2881 = vtanh.pop %v2737
        %v2882 = vtanh.pop %v2738
        %v2883 = vtanh.pop %v2739
        %v2884 = vtanh.pop %v2740
        %v2885 = vtanh.pop %v2741
        %v2886 = vtanh.pop %v2742
        %v2887 = vtanh.pop %v2743
        %v2888 = vtanh.pop %v2744
        %v2889 = vtanh.pop %v2745
        %v2890 = vtanh.pop %v2746
        %v2891 = vtanh.pop %v2747
        %v2892 = vtanh.pop %v2748
        %v2893 = vtanh.pop %v2749
        %v2894 = vtanh.pop %v2750
        %v2895 = vtanh.pop %v2751
        %v2896 = vtanh.pop %v2752
        %v2897 = vtanh.pop %v2753
        %v2898 = vtanh.pop %v2754
        %v2899 = vtanh.pop %v2755
        %v2900 = vtanh.pop %v2756
        %v2901 = vtanh.pop %v2757
        %v2902 = vtanh.pop %v2758
        %v2903 = vtanh.pop %v2759
        %v2904 = vtanh.pop %v2760
        %v2905 = vtanh.pop %v2761
        %v2906 = vtanh.pop %v2762
        %v2907 = vtanh.pop %v2763
        %v2908 = vtanh.pop %v2764
        %v2909 = vtanh.pop %v2765
        %v2910 = vtanh.pop %v2766
        %v2911 = vtanh.pop %v2767
        %v2912 = vtanh.pop %v2768
        %v2913 = vtanh.pop %v2769
        %v2914 = vtanh.pop %v2770
        %v2915 = vtanh.pop %v2771
        %v2916 = vtanh.pop %v2772
        %v2917 = vtanh.pop %v2773
        %v2918 = vtanh.pop %v2774
        %v2919 = vtanh.pop %v2775
        %v2920 = vtanh.pop %v2776
        %v2921 = vtanh.pop %v2777
        %v2922 = vtanh.pop %v2778
        %v2923 = vtanh.pop %v2779
        %v2924 = vtanh.pop %v2780
        %v2925 = vtanh.pop %v2781
        %v2926 = vtanh.pop %v2782
        %v2927 = vtanh.pop %v2783
        %v2928 = vtanh.pop %v2784
        %v2929 = vtanh.pop %v2785
        %v2930 = vtanh.pop %v2786
        %v2931 = vtanh.pop %v2787
        %v2932 = vtanh.pop %v2788
        %v2933 = vtanh.pop %v2789
        %v2934 = vtanh.pop %v2790
        %v2935 = vtanh.pop %v2791
        %v2936 = vtanh.pop %v2792
        %v2937 = vtanh.pop %v2793
        %v2938 = vtanh.pop %v2794
        %v2939 = vtanh.pop %v2795
        %v2940 = vtanh.pop %v2796
        %v2941 = vtanh.pop %v2797
        %v2942 = vtanh.pop %v2798
        %v2943 = vtanh.pop %v2799
        %v2944 = vtanh.pop %v2800
        %v2945 = vtanh.pop %v2801
        %v2946 = vtanh.pop %v2802
        %v2947 = vtanh.pop %v2803
        %v2948 = vtanh.pop %v2804
        %v2949 = vtanh.pop %v2805
        %v2950 = vtanh.pop %v2806
        %v2951 = vtanh.pop %v2807
        %v2952 = vtanh.pop %v2808
        %v2953 = vtanh.pop %v2809
        %v2954 = vtanh.pop %v2810
        %v2955 = vtanh.pop %v2811
        %v2956 = vtanh.pop %v2812
        %v2957 = vtanh.pop %v2813
        %v2958 = vtanh.pop %v2814
        %v2959 = vtanh.pop %v2815
        %v2960 = vtanh.pop %v2816
        %v2961 = vtanh.pop %v2817
        %v2962 = vtanh.pop %v2818
        %v2963 = vtanh.pop %v2819
        %v2964 = vtanh.pop %v2820
        %v2965 = vtanh.pop %v2821
        %v2966 = vtanh.pop %v2822
        %v2967 = vtanh.pop %v2823
        %v2968 = vtanh.pop %v2824
        %v2969 = vtanh.pop %v2825
        %v2970 = vtanh.pop %v2826
        %v2971 = vtanh.pop %v2827
        %v2972 = vtanh.pop %v2828
        %v2973 = vtanh.pop %v2829
        %v2974 = vtanh.pop %v2830
        %v2975 = vtanh.pop %v2831
        %v2976 = vtanh.pop %v2832
        %v2977 = vtanh.pop %v2833
        %3122 = vrot.lane.b32.xlu0 %v2834, 64
        %v3123 = vpop.permute.xlu0 %3122
        %3124 = vrot.lane.b32.xlu0 %v2835, 64
        %v3125 = vpop.permute.xlu0 %3124
        %3126 = vrot.lane.b32.xlu0 %v2836, 64
        %v3127 = vpop.permute.xlu0 %3126
        %3128 = vrot.lane.b32.xlu0 %v2837, 64
        %v3129 = vpop.permute.xlu0 %3128
        %3130 = vrot.lane.b32.xlu0 %v2838, 64
        %v3131 = vpop.permute.xlu0 %3130
        %3132 = vrot.lane.b32.xlu0 %v2839, 64
        %v3133 = vpop.permute.xlu0 %3132
        %3134 = vrot.lane.b32.xlu0 %v2840, 64
        %v3135 = vpop.permute.xlu0 %3134
        %3136 = vrot.lane.b32.xlu0 %v2841, 64
        %v3137 = vpop.permute.xlu0 %3136
        %3138 = vrot.lane.b32.xlu0 %v2842, 64
        %v3139 = vpop.permute.xlu0 %3138
        %3140 = vrot.lane.b32.xlu0 %v2843, 64
        %v3141 = vpop.permute.xlu0 %3140
        %3142 = vrot.lane.b32.xlu0 %v2844, 64
        %v3143 = vpop.permute.xlu0 %3142
        %3144 = vrot.lane.b32.xlu0 %v2845, 64
        %v3145 = vpop.permute.xlu0 %3144
        %3146 = vrot.lane.b32.xlu0 %v2846, 64
        %v3147 = vpop.permute.xlu0 %3146
        %3148 = vrot.lane.b32.xlu0 %v2847, 64
        %v3149 = vpop.permute.xlu0 %3148
        %3150 = vrot.lane.b32.xlu0 %v2848, 64
        %v3151 = vpop.permute.xlu0 %3150
        %3152 = vrot.lane.b32.xlu0 %v2849, 64
        %v3153 = vpop.permute.xlu0 %3152
        %3154 = vrot.lane.b32.xlu0 %v2850, 64
        %v3155 = vpop.permute.xlu0 %3154
        %3156 = vrot.lane.b32.xlu0 %v2851, 64
        %v3157 = vpop.permute.xlu0 %3156
        %3158 = vrot.lane.b32.xlu0 %v2852, 64
        %v3159 = vpop.permute.xlu0 %3158
        %3160 = vrot.lane.b32.xlu0 %v2853, 64
        %v3161 = vpop.permute.xlu0 %3160
        %3162 = vrot.lane.b32.xlu0 %v2854, 64
        %v3163 = vpop.permute.xlu0 %3162
        %3164 = vrot.lane.b32.xlu0 %v2855, 64
        %v3165 = vpop.permute.xlu0 %3164
        %3166 = vrot.lane.b32.xlu0 %v2856, 64
        %v3167 = vpop.permute.xlu0 %3166
        %3168 = vrot.lane.b32.xlu0 %v2857, 64
        %v3169 = vpop.permute.xlu0 %3168
        %3170 = vrot.lane.b32.xlu0 %v2858, 64
        %v3171 = vpop.permute.xlu0 %3170
        %3172 = vrot.lane.b32.xlu0 %v2859, 64
        %v3173 = vpop.permute.xlu0 %3172
        %3174 = vrot.lane.b32.xlu0 %v2860, 64
        %v3175 = vpop.permute.xlu0 %3174
        %3176 = vrot.lane.b32.xlu0 %v2861, 64
        %v3177 = vpop.permute.xlu0 %3176
        %3178 = vrot.lane.b32.xlu0 %v2862, 64
        %v3179 = vpop.permute.xlu0 %3178
        %3180 = vrot.lane.b32.xlu0 %v2863, 64
        %v3181 = vpop.permute.xlu0 %3180
        %3182 = vrot.lane.b32.xlu0 %v2864, 64
        %v3183 = vpop.permute.xlu0 %3182
        %3184 = vrot.lane.b32.xlu0 %v2865, 64
        %v3185 = vpop.permute.xlu0 %3184
        %3186 = vrot.lane.b32.xlu0 %v2866, 64
        %v3187 = vpop.permute.xlu0 %3186
        %3188 = vrot.lane.b32.xlu0 %v2867, 64
        %v3189 = vpop.permute.xlu0 %3188
        %3190 = vrot.lane.b32.xlu0 %v2868, 64
        %v3191 = vpop.permute.xlu0 %3190
        %3192 = vrot.lane.b32.xlu0 %v2869, 64
        %v3193 = vpop.permute.xlu0 %3192
        %3194 = vrot.lane.b32.xlu0 %v2870, 64
        %v3195 = vpop.permute.xlu0 %3194
        %3196 = vrot.lane.b32.xlu0 %v2871, 64
        %v3197 = vpop.permute.xlu0 %3196
        %3198 = vrot.lane.b32.xlu0 %v2872, 64
        %v3199 = vpop.permute.xlu0 %3198
        %3200 = vrot.lane.b32.xlu0 %v2873, 64
        %v3201 = vpop.permute.xlu0 %3200
        %3202 = vrot.lane.b32.xlu0 %v2874, 64
        %v3203 = vpop.permute.xlu0 %3202
        %3204 = vrot.lane.b32.xlu0 %v2875, 64
        %v3205 = vpop.permute.xlu0 %3204
        %3206 = vrot.lane.b32.xlu0 %v2876, 64
        %v3207 = vpop.permute.xlu0 %3206
        %3208 = vrot.lane.b32.xlu0 %v2877, 64
        %v3209 = vpop.permute.xlu0 %3208
        %3210 = vrot.lane.b32.xlu0 %v2878, 64
        %v3211 = vpop.permute.xlu0 %3210
        %3212 = vrot.lane.b32.xlu0 %v2879, 64
        %v3213 = vpop.permute.xlu0 %3212
        %3214 = vrot.lane.b32.xlu0 %v2880, 64
        %v3215 = vpop.permute.xlu0 %3214
        %3216 = vrot.lane.b32.xlu0 %v2881, 64
        %v3217 = vpop.permute.xlu0 %3216
        %3218 = vrot.lane.b32.xlu0 %v2882, 64
        %v3219 = vpop.permute.xlu0 %3218
        %3220 = vrot.lane.b32.xlu0 %v2883, 64
        %v3221 = vpop.permute.xlu0 %3220
        %3222 = vrot.lane.b32.xlu0 %v2884, 64
        %v3223 = vpop.permute.xlu0 %3222
        %3224 = vrot.lane.b32.xlu0 %v2885, 64
        %v3225 = vpop.permute.xlu0 %3224
        %3226 = vrot.lane.b32.xlu0 %v2886, 64
        %v3227 = vpop.permute.xlu0 %3226
        %3228 = vrot.lane.b32.xlu0 %v2887, 64
        %v3229 = vpop.permute.xlu0 %3228
        %3230 = vrot.lane.b32.xlu0 %v2888, 64
        %v3231 = vpop.permute.xlu0 %3230
        %3232 = vrot.lane.b32.xlu0 %v2889, 64
        %v3233 = vpop.permute.xlu0 %3232
        %3234 = vrot.lane.b32.xlu0 %v2890, 64
        %v3235 = vpop.permute.xlu0 %3234
        %3236 = vrot.lane.b32.xlu0 %v2891, 64
        %v3237 = vpop.permute.xlu0 %3236
        %3238 = vrot.lane.b32.xlu0 %v2892, 64
        %v3239 = vpop.permute.xlu0 %3238
        %3240 = vrot.lane.b32.xlu0 %v2893, 64
        %v3241 = vpop.permute.xlu0 %3240
        %3242 = vrot.lane.b32.xlu0 %v2894, 64
        %v3243 = vpop.permute.xlu0 %3242
        %3244 = vrot.lane.b32.xlu0 %v2895, 64
        %v3245 = vpop.permute.xlu0 %3244
        %3246 = vrot.lane.b32.xlu0 %v2896, 64
        %v3247 = vpop.permute.xlu0 %3246
        %3248 = vrot.lane.b32.xlu0 %v2897, 64
        %v3249 = vpop.permute.xlu0 %3248
        %3250 = vrot.lane.b32.xlu0 %v2898, 64
        %v3251 = vpop.permute.xlu0 %3250
        %3252 = vrot.lane.b32.xlu0 %v2899, 64
        %v3253 = vpop.permute.xlu0 %3252
        %3254 = vrot.lane.b32.xlu0 %v2900, 64
        %v3255 = vpop.permute.xlu0 %3254
        %3256 = vrot.lane.b32.xlu0 %v2901, 64
        %v3257 = vpop.permute.xlu0 %3256
        %3258 = vrot.lane.b32.xlu0 %v2902, 64
        %v3259 = vpop.permute.xlu0 %3258
        %3260 = vrot.lane.b32.xlu0 %v2903, 64
        %v3261 = vpop.permute.xlu0 %3260
        %3262 = vrot.lane.b32.xlu0 %v2904, 64
        %v3263 = vpop.permute.xlu0 %3262
        %3264 = vrot.lane.b32.xlu0 %v2905, 64
        %v3265 = vpop.permute.xlu0 %3264
        %3266 = vrot.lane.b32.xlu0 %v2906, 64
        %v3267 = vpop.permute.xlu0 %3266
        %3268 = vrot.lane.b32.xlu0 %v2907, 64
        %v3269 = vpop.permute.xlu0 %3268
        %3270 = vrot.lane.b32.xlu0 %v2908, 64
        %v3271 = vpop.permute.xlu0 %3270
        %3272 = vrot.lane.b32.xlu0 %v2909, 64
        %v3273 = vpop.permute.xlu0 %3272
        %3274 = vrot.lane.b32.xlu0 %v2910, 64
        %v3275 = vpop.permute.xlu0 %3274
        %3276 = vrot.lane.b32.xlu0 %v2911, 64
        %v3277 = vpop.permute.xlu0 %3276
        %3278 = vrot.lane.b32.xlu0 %v2912, 64
        %v3279 = vpop.permute.xlu0 %3278
        %3280 = vrot.lane.b32.xlu0 %v2913, 64
        %v3281 = vpop.permute.xlu0 %3280
        %3282 = vrot.lane.b32.xlu0 %v2914, 64
        %v3283 = vpop.permute.xlu0 %3282
        %3284 = vrot.lane.b32.xlu0 %v2915, 64
        %v3285 = vpop.permute.xlu0 %3284
        %3286 = vrot.lane.b32.xlu0 %v2916, 64
        %v3287 = vpop.permute.xlu0 %3286
        %3288 = vrot.lane.b32.xlu0 %v2917, 64
        %v3289 = vpop.permute.xlu0 %3288
        %3290 = vrot.lane.b32.xlu0 %v2918, 64
        %v3291 = vpop.permute.xlu0 %3290
        %3292 = vrot.lane.b32.xlu0 %v2919, 64
        %v3293 = vpop.permute.xlu0 %3292
        %3294 = vrot.lane.b32.xlu0 %v2920, 64
        %v3295 = vpop.permute.xlu0 %3294
        %3296 = vrot.lane.b32.xlu0 %v2921, 64
        %v3297 = vpop.permute.xlu0 %3296
        %3298 = vrot.lane.b32.xlu0 %v2922, 64
        %v3299 = vpop.permute.xlu0 %3298
        %3300 = vrot.lane.b32.xlu0 %v2923, 64
        %v3301 = vpop.permute.xlu0 %3300
        %3302 = vrot.lane.b32.xlu0 %v2924, 64
        %v3303 = vpop.permute.xlu0 %3302
        %3304 = vrot.lane.b32.xlu0 %v2925, 64
        %v3305 = vpop.permute.xlu0 %3304
        %3306 = vrot.lane.b32.xlu0 %v2926, 64
        %v3307 = vpop.permute.xlu0 %3306
        %3308 = vrot.lane.b32.xlu0 %v2927, 64
        %v3309 = vpop.permute.xlu0 %3308
        %3310 = vrot.lane.b32.xlu0 %v2928, 64
        %v3311 = vpop.permute.xlu0 %3310
        %3312 = vrot.lane.b32.xlu0 %v2929, 64
        %v3313 = vpop.permute.xlu0 %3312
        %3314 = vrot.lane.b32.xlu0 %v2930, 64
        %v3315 = vpop.permute.xlu0 %3314
        %3316 = vrot.lane.b32.xlu0 %v2931, 64
        %v3317 = vpop.permute.xlu0 %3316
        %3318 = vrot.lane.b32.xlu0 %v2932, 64
        %v3319 = vpop.permute.xlu0 %3318
        %3320 = vrot.lane.b32.xlu0 %v2933, 64
        %v3321 = vpop.permute.xlu0 %3320
        %3322 = vrot.lane.b32.xlu0 %v2934, 64
        %v3323 = vpop.permute.xlu0 %3322
        %3324 = vrot.lane.b32.xlu0 %v2935, 64
        %v3325 = vpop.permute.xlu0 %3324
        %3326 = vrot.lane.b32.xlu0 %v2936, 64
        %v3327 = vpop.permute.xlu0 %3326
        %3328 = vrot.lane.b32.xlu0 %v2937, 64
        %v3329 = vpop.permute.xlu0 %3328
        %3330 = vrot.lane.b32.xlu0 %v2938, 64
        %v3331 = vpop.permute.xlu0 %3330
        %3332 = vrot.lane.b32.xlu0 %v2939, 64
        %v3333 = vpop.permute.xlu0 %3332
        %3334 = vrot.lane.b32.xlu0 %v2940, 64
        %v3335 = vpop.permute.xlu0 %3334
        %3336 = vrot.lane.b32.xlu0 %v2941, 64
        %v3337 = vpop.permute.xlu0 %3336
        %3338 = vrot.lane.b32.xlu0 %v2942, 64
        %v3339 = vpop.permute.xlu0 %3338
        %3340 = vrot.lane.b32.xlu0 %v2943, 64
        %v3341 = vpop.permute.xlu0 %3340
        %3342 = vrot.lane.b32.xlu0 %v2944, 64
        %v3343 = vpop.permute.xlu0 %3342
        %3344 = vrot.lane.b32.xlu0 %v2945, 64
        %v3345 = vpop.permute.xlu0 %3344
        %3346 = vrot.lane.b32.xlu0 %v2946, 64
        %v3347 = vpop.permute.xlu0 %3346
        %3348 = vrot.lane.b32.xlu0 %v2947, 64
        %v3349 = vpop.permute.xlu0 %3348
        %3350 = vrot.lane.b32.xlu0 %v2948, 64
        %v3351 = vpop.permute.xlu0 %3350
        %3352 = vrot.lane.b32.xlu0 %v2949, 64
        %v3353 = vpop.permute.xlu0 %3352
        %3354 = vrot.lane.b32.xlu0 %v2950, 64
        %v3355 = vpop.permute.xlu0 %3354
        %3356 = vrot.lane.b32.xlu0 %v2951, 64
        %v3357 = vpop.permute.xlu0 %3356
        %3358 = vrot.lane.b32.xlu0 %v2952, 64
        %v3359 = vpop.permute.xlu0 %3358
        %3360 = vrot.lane.b32.xlu0 %v2953, 64
        %v3361 = vpop.permute.xlu0 %3360
        %3362 = vrot.lane.b32.xlu0 %v2954, 64
        %v3363 = vpop.permute.xlu0 %3362
        %3364 = vrot.lane.b32.xlu0 %v2955, 64
        %v3365 = vpop.permute.xlu0 %3364
        %3366 = vrot.lane.b32.xlu0 %v2956, 64
        %v3367 = vpop.permute.xlu0 %3366
        %3368 = vrot.lane.b32.xlu0 %v2957, 64
        %v3369 = vpop.permute.xlu0 %3368
        %3370 = vrot.lane.b32.xlu0 %v2958, 64
        %v3371 = vpop.permute.xlu0 %3370
        %3372 = vrot.lane.b32.xlu0 %v2959, 64
        %v3373 = vpop.permute.xlu0 %3372
        %3374 = vrot.lane.b32.xlu0 %v2960, 64
        %v3375 = vpop.permute.xlu0 %3374
        %3376 = vrot.lane.b32.xlu0 %v2961, 64
        %v3377 = vpop.permute.xlu0 %3376
        %3378 = vrot.lane.b32.xlu0 %v2962, 64
        %v3379 = vpop.permute.xlu0 %3378
        %3380 = vrot.lane.b32.xlu0 %v2963, 64
        %v3381 = vpop.permute.xlu0 %3380
        %3382 = vrot.lane.b32.xlu0 %v2964, 64
        %v3383 = vpop.permute.xlu0 %3382
        %3384 = vrot.lane.b32.xlu0 %v2965, 64
        %v3385 = vpop.permute.xlu0 %3384
        %3386 = vrot.lane.b32.xlu0 %v2966, 64
        %v3387 = vpop.permute.xlu0 %3386
        %3388 = vrot.lane.b32.xlu0 %v2967, 64
        %v3389 = vpop.permute.xlu0 %3388
        %3390 = vrot.lane.b32.xlu0 %v2968, 64
        %v3391 = vpop.permute.xlu0 %3390
        %3392 = vrot.lane.b32.xlu0 %v2969, 64
        %v3393 = vpop.permute.xlu0 %3392
        %3394 = vrot.lane.b32.xlu0 %v2970, 64
        %v3395 = vpop.permute.xlu0 %3394
        %3396 = vrot.lane.b32.xlu0 %v2971, 64
        %v3397 = vpop.permute.xlu0 %3396
        %3398 = vrot.lane.b32.xlu0 %v2972, 64
        %v3399 = vpop.permute.xlu0 %3398
        %3400 = vrot.lane.b32.xlu0 %v2973, 64
        %v3401 = vpop.permute.xlu0 %3400
        %3402 = vrot.lane.b32.xlu0 %v2974, 64
        %v3403 = vpop.permute.xlu0 %3402
        %3404 = vrot.lane.b32.xlu0 %v2975, 64
        %v3405 = vpop.permute.xlu0 %3404
        %3406 = vrot.lane.b32.xlu0 %v2976, 64
        %v3407 = vpop.permute.xlu0 %3406
        %3408 = vrot.lane.b32.xlu0 %v2977, 64
        %v3409 = vpop.permute.xlu0 %3408
        %v3554 = vmul.f32 %v1826, %v3123
        %v3555 = vmul.f32 %v1827, %v3125
        %v3556 = vmul.f32 %v1828, %v3127
        %v3557 = vmul.f32 %v1829, %v3129
        %v3558 = vmul.f32 %v1830, %v3131
        %v3559 = vmul.f32 %v1831, %v3133
        %v3560 = vmul.f32 %v1832, %v3135
        %v3561 = vmul.f32 %v1833, %v3137
        %v3562 = vmul.f32 %v1834, %v3139
        %v3563 = vmul.f32 %v1835, %v3141
        %v3564 = vmul.f32 %v1836, %v3143
        %v3565 = vmul.f32 %v1837, %v3145
        %v3566 = vmul.f32 %v1838, %v3147
        %v3567 = vmul.f32 %v1839, %v3149
        %v3568 = vmul.f32 %v1840, %v3151
        %v3569 = vmul.f32 %v1841, %v3153
        %v3570 = vmul.f32 %v1842, %v3155
        %v3571 = vmul.f32 %v1843, %v3157
        %v3572 = vmul.f32 %v1844, %v3159
        %v3573 = vmul.f32 %v1845, %v3161
        %v3574 = vmul.f32 %v1846, %v3163
        %v3575 = vmul.f32 %v1847, %v3165
        %v3576 = vmul.f32 %v1848, %v3167
        %v3577 = vmul.f32 %v1849, %v3169
        %v3578 = vmul.f32 %v1850, %v3171
        %v3579 = vmul.f32 %v1851, %v3173
        %v3580 = vmul.f32 %v1852, %v3175
        %v3581 = vmul.f32 %v1853, %v3177
        %v3582 = vmul.f32 %v1854, %v3179
        %v3583 = vmul.f32 %v1855, %v3181
        %v3584 = vmul.f32 %v1856, %v3183
        %v3585 = vmul.f32 %v1857, %v3185
        %v3586 = vmul.f32 %v1858, %v3187
        %v3587 = vmul.f32 %v1859, %v3189
        %v3588 = vmul.f32 %v1860, %v3191
        %v3589 = vmul.f32 %v1861, %v3193
        %v3590 = vmul.f32 %v1862, %v3195
        %v3591 = vmul.f32 %v1863, %v3197
        %v3592 = vmul.f32 %v1864, %v3199
        %v3593 = vmul.f32 %v1865, %v3201
        %v3594 = vmul.f32 %v1866, %v3203
        %v3595 = vmul.f32 %v1867, %v3205
        %v3596 = vmul.f32 %v1868, %v3207
        %v3597 = vmul.f32 %v1869, %v3209
        %v3598 = vmul.f32 %v1870, %v3211
        %v3599 = vmul.f32 %v1871, %v3213
        %v3600 = vmul.f32 %v1872, %v3215
        %v3601 = vmul.f32 %v1873, %v3217
        %v3602 = vmul.f32 %v1874, %v3219
        %v3603 = vmul.f32 %v1875, %v3221
        %v3604 = vmul.f32 %v1876, %v3223
        %v3605 = vmul.f32 %v1877, %v3225
        %v3606 = vmul.f32 %v1878, %v3227
        %v3607 = vmul.f32 %v1879, %v3229
        %v3608 = vmul.f32 %v1880, %v3231
        %v3609 = vmul.f32 %v1881, %v3233
        %v3610 = vmul.f32 %v1882, %v3235
        %v3611 = vmul.f32 %v1883, %v3237
        %v3612 = vmul.f32 %v1884, %v3239
        %v3613 = vmul.f32 %v1885, %v3241
        %v3614 = vmul.f32 %v1886, %v3243
        %v3615 = vmul.f32 %v1887, %v3245
        %v3616 = vmul.f32 %v1888, %v3247
        %v3617 = vmul.f32 %v1889, %v3249
        %v3618 = vmul.f32 %v1890, %v3251
        %v3619 = vmul.f32 %v1891, %v3253
        %v3620 = vmul.f32 %v1892, %v3255
        %v3621 = vmul.f32 %v1893, %v3257
        %v3622 = vmul.f32 %v1894, %v3259
        %v3623 = vmul.f32 %v1895, %v3261
        %v3624 = vmul.f32 %v1896, %v3263
        %v3625 = vmul.f32 %v1897, %v3265
        %v3626 = vmul.f32 %v1898, %v3267
        %v3627 = vmul.f32 %v1899, %v3269
        %v3628 = vmul.f32 %v1900, %v3271
        %v3629 = vmul.f32 %v1901, %v3273
        %v3630 = vmul.f32 %v1902, %v3275
        %v3631 = vmul.f32 %v1903, %v3277
        %v3632 = vmul.f32 %v1904, %v3279
        %v3633 = vmul.f32 %v1905, %v3281
        %v3634 = vmul.f32 %v1906, %v3283
        %v3635 = vmul.f32 %v1907, %v3285
        %v3636 = vmul.f32 %v1908, %v3287
        %v3637 = vmul.f32 %v1909, %v3289
        %v3638 = vmul.f32 %v1910, %v3291
        %v3639 = vmul.f32 %v1911, %v3293
        %v3640 = vmul.f32 %v1912, %v3295
        %v3641 = vmul.f32 %v1913, %v3297
        %v3642 = vmul.f32 %v1914, %v3299
        %v3643 = vmul.f32 %v1915, %v3301
        %v3644 = vmul.f32 %v1916, %v3303
        %v3645 = vmul.f32 %v1917, %v3305
        %v3646 = vmul.f32 %v1918, %v3307
        %v3647 = vmul.f32 %v1919, %v3309
        %v3648 = vmul.f32 %v1920, %v3311
        %v3649 = vmul.f32 %v1921, %v3313
        %v3650 = vmul.f32 %v1922, %v3315
        %v3651 = vmul.f32 %v1923, %v3317
        %v3652 = vmul.f32 %v1924, %v3319
        %v3653 = vmul.f32 %v1925, %v3321
        %v3654 = vmul.f32 %v1926, %v3323
        %v3655 = vmul.f32 %v1927, %v3325
        %v3656 = vmul.f32 %v1928, %v3327
        %v3657 = vmul.f32 %v1929, %v3329
        %v3658 = vmul.f32 %v1930, %v3331
        %v3659 = vmul.f32 %v1931, %v3333
        %v3660 = vmul.f32 %v1932, %v3335
        %v3661 = vmul.f32 %v1933, %v3337
        %v3662 = vmul.f32 %v1934, %v3339
        %v3663 = vmul.f32 %v1935, %v3341
        %v3664 = vmul.f32 %v1936, %v3343
        %v3665 = vmul.f32 %v1937, %v3345
        %v3666 = vmul.f32 %v1938, %v3347
        %v3667 = vmul.f32 %v1939, %v3349
        %v3668 = vmul.f32 %v1940, %v3351
        %v3669 = vmul.f32 %v1941, %v3353
        %v3670 = vmul.f32 %v1942, %v3355
        %v3671 = vmul.f32 %v1943, %v3357
        %v3672 = vmul.f32 %v1944, %v3359
        %v3673 = vmul.f32 %v1945, %v3361
        %v3674 = vmul.f32 %v1946, %v3363
        %v3675 = vmul.f32 %v1947, %v3365
        %v3676 = vmul.f32 %v1948, %v3367
        %v3677 = vmul.f32 %v1949, %v3369
        %v3678 = vmul.f32 %v1950, %v3371
        %v3679 = vmul.f32 %v1951, %v3373
        %v3680 = vmul.f32 %v1952, %v3375
        %v3681 = vmul.f32 %v1953, %v3377
        %v3682 = vmul.f32 %v1954, %v3379
        %v3683 = vmul.f32 %v1955, %v3381
        %v3684 = vmul.f32 %v1956, %v3383
        %v3685 = vmul.f32 %v1957, %v3385
        %v3686 = vmul.f32 %v1958, %v3387
        %v3687 = vmul.f32 %v1959, %v3389
        %v3688 = vmul.f32 %v1960, %v3391
        %v3689 = vmul.f32 %v1961, %v3393
        %v3690 = vmul.f32 %v1962, %v3395
        %v3691 = vmul.f32 %v1963, %v3397
        %v3692 = vmul.f32 %v1964, %v3399
        %v3693 = vmul.f32 %v1965, %v3401
        %v3694 = vmul.f32 %v1966, %v3403
        %v3695 = vmul.f32 %v1967, %v3405
        %v3696 = vmul.f32 %v1968, %v3407
        %v3697 = vmul.f32 %v1969, %v3409
        %3714 = vrot.lane.b32.xlu0 %v3554, 64
        %v3715 = vpop.permute.xlu0 %3714
        %3716 = vrot.lane.b32.xlu0 %v3555, 64
        %v3717 = vpop.permute.xlu0 %3716
        %3718 = vrot.lane.b32.xlu0 %v3556, 64
        %v3719 = vpop.permute.xlu0 %3718
        %3720 = vrot.lane.b32.xlu0 %v3557, 64
        %v3721 = vpop.permute.xlu0 %3720
        %3722 = vrot.lane.b32.xlu0 %v3558, 64
        %v3723 = vpop.permute.xlu0 %3722
        %3724 = vrot.lane.b32.xlu0 %v3559, 64
        %v3725 = vpop.permute.xlu0 %3724
        %3726 = vrot.lane.b32.xlu0 %v3560, 64
        %v3727 = vpop.permute.xlu0 %3726
        %3728 = vrot.lane.b32.xlu0 %v3561, 64
        %v3729 = vpop.permute.xlu0 %3728
        %3730 = vrot.lane.b32.xlu0 %v3562, 64
        %v3731 = vpop.permute.xlu0 %3730
        %3732 = vrot.lane.b32.xlu0 %v3563, 64
        %v3733 = vpop.permute.xlu0 %3732
        %3734 = vrot.lane.b32.xlu0 %v3564, 64
        %v3735 = vpop.permute.xlu0 %3734
        %3736 = vrot.lane.b32.xlu0 %v3565, 64
        %v3737 = vpop.permute.xlu0 %3736
        %3738 = vrot.lane.b32.xlu0 %v3566, 64
        %v3739 = vpop.permute.xlu0 %3738
        %3740 = vrot.lane.b32.xlu0 %v3567, 64
        %v3741 = vpop.permute.xlu0 %3740
        %3742 = vrot.lane.b32.xlu0 %v3568, 64
        %v3743 = vpop.permute.xlu0 %3742
        %3744 = vrot.lane.b32.xlu0 %v3569, 64
        %v3745 = vpop.permute.xlu0 %3744
        %vm3762 = vcmask 261120
        %3763 = vst.msk [vmem:[#allocation2] sm:$0xff] %vm3762, %v3715
        %3764 = vst.msk [vmem:[#allocation2 + $0x18] sm:$0xff] %vm3762, %v3717
        %3765 = vst.msk [vmem:[#allocation2 + $0x30] sm:$0xff] %vm3762, %v3719
        %3766 = vst.msk [vmem:[#allocation2 + $0x48] sm:$0xff] %vm3762, %v3721
        %3767 = vst.msk [vmem:[#allocation2 + $0x60] sm:$0xff] %vm3762, %v3723
        %3768 = vst.msk [vmem:[#allocation2 + $0x78] sm:$0xff] %vm3762, %v3725
        %3769 = vst.msk [vmem:[#allocation2 + $0x90] sm:$0xff] %vm3762, %v3727
        %3770 = vst.msk [vmem:[#allocation2 + $0xa8] sm:$0xff] %vm3762, %v3729
        %3771 = vst.msk [vmem:[#allocation2 + $0xc0] sm:$0xff] %vm3762, %v3731
        %3772 = vst.msk [vmem:[#allocation2 + $0xd8] sm:$0xff] %vm3762, %v3733
        %3773 = vst.msk [vmem:[#allocation2 + $0xf0] sm:$0xff] %vm3762, %v3735
        %3774 = vst.msk [vmem:[#allocation2 + $0x108] sm:$0xff] %vm3762, %v3737
        %3775 = vst.msk [vmem:[#allocation2 + $0x120] sm:$0xff] %vm3762, %v3739
        %3776 = vst.msk [vmem:[#allocation2 + $0x138] sm:$0xff] %vm3762, %v3741
        %3777 = vst.msk [vmem:[#allocation2 + $0x150] sm:$0xff] %vm3762, %v3743
        %3778 = vst.msk [vmem:[#allocation2 + $0x168] sm:$0xff] %vm3762, %v3745
        %3795 = vrot.lane.b32.xlu0 %v3570, 96
        %v3796 = vpop.permute.xlu0 %3795
        %3797 = vrot.lane.b32.xlu0 %v3571, 96
        %v3798 = vpop.permute.xlu0 %3797
        %3799 = vrot.lane.b32.xlu0 %v3572, 96
        %v3800 = vpop.permute.xlu0 %3799
        %3801 = vrot.lane.b32.xlu0 %v3573, 96
        %v3802 = vpop.permute.xlu0 %3801
        %3803 = vrot.lane.b32.xlu0 %v3574, 96
        %v3804 = vpop.permute.xlu0 %3803
        %3805 = vrot.lane.b32.xlu0 %v3575, 96
        %v3806 = vpop.permute.xlu0 %3805
        %3807 = vrot.lane.b32.xlu0 %v3576, 96
        %v3808 = vpop.permute.xlu0 %3807
        %3809 = vrot.lane.b32.xlu0 %v3577, 96
        %v3810 = vpop.permute.xlu0 %3809
        %3811 = vrot.lane.b32.xlu0 %v3578, 96
        %v3812 = vpop.permute.xlu0 %3811
        %3813 = vrot.lane.b32.xlu0 %v3579, 96
        %v3814 = vpop.permute.xlu0 %3813
        %3815 = vrot.lane.b32.xlu0 %v3580, 96
        %v3816 = vpop.permute.xlu0 %3815
        %3817 = vrot.lane.b32.xlu0 %v3581, 96
        %v3818 = vpop.permute.xlu0 %3817
        %3819 = vrot.lane.b32.xlu0 %v3582, 96
        %v3820 = vpop.permute.xlu0 %3819
        %3821 = vrot.lane.b32.xlu0 %v3583, 96
        %v3822 = vpop.permute.xlu0 %3821
        %3823 = vrot.lane.b32.xlu0 %v3584, 96
        %v3824 = vpop.permute.xlu0 %3823
        %3825 = vrot.lane.b32.xlu0 %v3585, 96
        %v3826 = vpop.permute.xlu0 %3825
        %vm3843 = vcmask 523520
        %3844 = vst.msk [vmem:[#allocation2] sm:$0xff] %vm3843, %v3796
        %3845 = vst.msk [vmem:[#allocation2 + $0x18] sm:$0xff] %vm3843, %v3798
        %3846 = vst.msk [vmem:[#allocation2 + $0x30] sm:$0xff] %vm3843, %v3800
        %3847 = vst.msk [vmem:[#allocation2 + $0x48] sm:$0xff] %vm3843, %v3802
        %3848 = vst.msk [vmem:[#allocation2 + $0x60] sm:$0xff] %vm3843, %v3804
        %3849 = vst.msk [vmem:[#allocation2 + $0x78] sm:$0xff] %vm3843, %v3806
        %3850 = vst.msk [vmem:[#allocation2 + $0x90] sm:$0xff] %vm3843, %v3808
        %3851 = vst.msk [vmem:[#allocation2 + $0xa8] sm:$0xff] %vm3843, %v3810
        %3852 = vst.msk [vmem:[#allocation2 + $0xc0] sm:$0xff] %vm3843, %v3812
        %3853 = vst.msk [vmem:[#allocation2 + $0xd8] sm:$0xff] %vm3843, %v3814
        %3854 = vst.msk [vmem:[#allocation2 + $0xf0] sm:$0xff] %vm3843, %v3816
        %3855 = vst.msk [vmem:[#allocation2 + $0x108] sm:$0xff] %vm3843, %v3818
        %3856 = vst.msk [vmem:[#allocation2 + $0x120] sm:$0xff] %vm3843, %v3820
        %3857 = vst.msk [vmem:[#allocation2 + $0x138] sm:$0xff] %vm3843, %v3822
        %3858 = vst.msk [vmem:[#allocation2 + $0x150] sm:$0xff] %vm3843, %v3824
        %3859 = vst.msk [vmem:[#allocation2 + $0x168] sm:$0xff] %vm3843, %v3826
        %vm3860 = vcmask 785920
        %3861 = vst.msk [vmem:[#allocation2] sm:$0xff] %vm3860, %v3586
        %3862 = vst.msk [vmem:[#allocation2 + $0x18] sm:$0xff] %vm3860, %v3587
        %3863 = vst.msk [vmem:[#allocation2 + $0x30] sm:$0xff] %vm3860, %v3588
        %3864 = vst.msk [vmem:[#allocation2 + $0x48] sm:$0xff] %vm3860, %v3589
        %3865 = vst.msk [vmem:[#allocation2 + $0x60] sm:$0xff] %vm3860, %v3590
        %3866 = vst.msk [vmem:[#allocation2 + $0x78] sm:$0xff] %vm3860, %v3591
        %3867 = vst.msk [vmem:[#allocation2 + $0x90] sm:$0xff] %vm3860, %v3592
        %3868 = vst.msk [vmem:[#allocation2 + $0xa8] sm:$0xff] %vm3860, %v3593
        %3869 = vst.msk [vmem:[#allocation2 + $0xc0] sm:$0xff] %vm3860, %v3594
        %3870 = vst.msk [vmem:[#allocation2 + $0xd8] sm:$0xff] %vm3860, %v3595
        %3871 = vst.msk [vmem:[#allocation2 + $0xf0] sm:$0xff] %vm3860, %v3596
        %3872 = vst.msk [vmem:[#allocation2 + $0x108] sm:$0xff] %vm3860, %v3597
        %3873 = vst.msk [vmem:[#allocation2 + $0x120] sm:$0xff] %vm3860, %v3598
        %3874 = vst.msk [vmem:[#allocation2 + $0x138] sm:$0xff] %vm3860, %v3599
        %3875 = vst.msk [vmem:[#allocation2 + $0x150] sm:$0xff] %vm3860, %v3600
        %3876 = vst.msk [vmem:[#allocation2 + $0x168] sm:$0xff] %vm3860, %v3601
        %3893 = vrot.lane.b32.xlu0 %v3602, 32
        %v3894 = vpop.permute.xlu0 %3893
        %3895 = vrot.lane.b32.xlu0 %v3603, 32
        %v3896 = vpop.permute.xlu0 %3895
        %3897 = vrot.lane.b32.xlu0 %v3604, 32
        %v3898 = vpop.permute.xlu0 %3897
        %3899 = vrot.lane.b32.xlu0 %v3605, 32
        %v3900 = vpop.permute.xlu0 %3899
        %3901 = vrot.lane.b32.xlu0 %v3606, 32
        %v3902 = vpop.permute.xlu0 %3901
        %3903 = vrot.lane.b32.xlu0 %v3607, 32
        %v3904 = vpop.permute.xlu0 %3903
        %3905 = vrot.lane.b32.xlu0 %v3608, 32
        %v3906 = vpop.permute.xlu0 %3905
        %3907 = vrot.lane.b32.xlu0 %v3609, 32
        %v3908 = vpop.permute.xlu0 %3907
        %3909 = vrot.lane.b32.xlu0 %v3610, 32
        %v3910 = vpop.permute.xlu0 %3909
        %3911 = vrot.lane.b32.xlu0 %v3611, 32
        %v3912 = vpop.permute.xlu0 %3911
        %3913 = vrot.lane.b32.xlu0 %v3612, 32
        %v3914 = vpop.permute.xlu0 %3913
        %3915 = vrot.lane.b32.xlu0 %v3613, 32
        %v3916 = vpop.permute.xlu0 %3915
        %3917 = vrot.lane.b32.xlu0 %v3614, 32
        %v3918 = vpop.permute.xlu0 %3917
        %3919 = vrot.lane.b32.xlu0 %v3615, 32
        %v3920 = vpop.permute.xlu0 %3919
        %3921 = vrot.lane.b32.xlu0 %v3616, 32
        %v3922 = vpop.permute.xlu0 %3921
        %3923 = vrot.lane.b32.xlu0 %v3617, 32
        %v3924 = vpop.permute.xlu0 %3923
        %vm3941 = vcmask 1048320
        %3942 = vst.msk [vmem:[#allocation2] sm:$0xff] %vm3941, %v3894
        %3943 = vst.msk [vmem:[#allocation2 + $0x18] sm:$0xff] %vm3941, %v3896
        %3944 = vst.msk [vmem:[#allocation2 + $0x30] sm:$0xff] %vm3941, %v3898
        %3945 = vst.msk [vmem:[#allocation2 + $0x48] sm:$0xff] %vm3941, %v3900
        %3946 = vst.msk [vmem:[#allocation2 + $0x60] sm:$0xff] %vm3941, %v3902
        %3947 = vst.msk [vmem:[#allocation2 + $0x78] sm:$0xff] %vm3941, %v3904
        %3948 = vst.msk [vmem:[#allocation2 + $0x90] sm:$0xff] %vm3941, %v3906
        %3949 = vst.msk [vmem:[#allocation2 + $0xa8] sm:$0xff] %vm3941, %v3908
        %3950 = vst.msk [vmem:[#allocation2 + $0xc0] sm:$0xff] %vm3941, %v3910
        %3951 = vst.msk [vmem:[#allocation2 + $0xd8] sm:$0xff] %vm3941, %v3912
        %3952 = vst.msk [vmem:[#allocation2 + $0xf0] sm:$0xff] %vm3941, %v3914
        %3953 = vst.msk [vmem:[#allocation2 + $0x108] sm:$0xff] %vm3941, %v3916
        %3954 = vst.msk [vmem:[#allocation2 + $0x120] sm:$0xff] %vm3941, %v3918
        %3955 = vst.msk [vmem:[#allocation2 + $0x138] sm:$0xff] %vm3941, %v3920
        %3956 = vst.msk [vmem:[#allocation2 + $0x150] sm:$0xff] %vm3941, %v3922
        %3957 = vst.msk [vmem:[#allocation2 + $0x168] sm:$0xff] %vm3941, %v3924
        %3974 = vrot.lane.b32.xlu0 %v3618, 64
        %v3975 = vpop.permute.xlu0 %3974
        %3976 = vrot.lane.b32.xlu0 %v3619, 64
        %v3977 = vpop.permute.xlu0 %3976
        %3978 = vrot.lane.b32.xlu0 %v3620, 64
        %v3979 = vpop.permute.xlu0 %3978
        %3980 = vrot.lane.b32.xlu0 %v3621, 64
        %v3981 = vpop.permute.xlu0 %3980
        %3982 = vrot.lane.b32.xlu0 %v3622, 64
        %v3983 = vpop.permute.xlu0 %3982
        %3984 = vrot.lane.b32.xlu0 %v3623, 64
        %v3985 = vpop.permute.xlu0 %3984
        %3986 = vrot.lane.b32.xlu0 %v3624, 64
        %v3987 = vpop.permute.xlu0 %3986
        %3988 = vrot.lane.b32.xlu0 %v3625, 64
        %v3989 = vpop.permute.xlu0 %3988
        %3990 = vrot.lane.b32.xlu0 %v3626, 64
        %v3991 = vpop.permute.xlu0 %3990
        %3992 = vrot.lane.b32.xlu0 %v3627, 64
        %v3993 = vpop.permute.xlu0 %3992
        %3994 = vrot.lane.b32.xlu0 %v3628, 64
        %v3995 = vpop.permute.xlu0 %3994
        %3996 = vrot.lane.b32.xlu0 %v3629, 64
        %v3997 = vpop.permute.xlu0 %3996
        %3998 = vrot.lane.b32.xlu0 %v3630, 64
        %v3999 = vpop.permute.xlu0 %3998
        %4000 = vrot.lane.b32.xlu0 %v3631, 64
        %v4001 = vpop.permute.xlu0 %4000
        %4002 = vrot.lane.b32.xlu0 %v3632, 64
        %v4003 = vpop.permute.xlu0 %4002
        %4004 = vrot.lane.b32.xlu0 %v3633, 64
        %v4005 = vpop.permute.xlu0 %4004
        %4022 = vst.msk [vmem:[#allocation2 + $0x8] sm:$0xff] %vm3762, %v3975
        %4023 = vst.msk [vmem:[#allocation2 + $0x20] sm:$0xff] %vm3762, %v3977
        %4024 = vst.msk [vmem:[#allocation2 + $0x38] sm:$0xff] %vm3762, %v3979
        %4025 = vst.msk [vmem:[#allocation2 + $0x50] sm:$0xff] %vm3762, %v3981
        %4026 = vst.msk [vmem:[#allocation2 + $0x68] sm:$0xff] %vm3762, %v3983
        %4027 = vst.msk [vmem:[#allocation2 + $0x80] sm:$0xff] %vm3762, %v3985
        %4028 = vst.msk [vmem:[#allocation2 + $0x98] sm:$0xff] %vm3762, %v3987
        %4029 = vst.msk [vmem:[#allocation2 + $0xb0] sm:$0xff] %vm3762, %v3989
        %4030 = vst.msk [vmem:[#allocation2 + $0xc8] sm:$0xff] %vm3762, %v3991
        %4031 = vst.msk [vmem:[#allocation2 + $0xe0] sm:$0xff] %vm3762, %v3993
        %4032 = vst.msk [vmem:[#allocation2 + $0xf8] sm:$0xff] %vm3762, %v3995
        %4033 = vst.msk [vmem:[#allocation2 + $0x110] sm:$0xff] %vm3762, %v3997
        %4034 = vst.msk [vmem:[#allocation2 + $0x128] sm:$0xff] %vm3762, %v3999
        %4035 = vst.msk [vmem:[#allocation2 + $0x140] sm:$0xff] %vm3762, %v4001
        %4036 = vst.msk [vmem:[#allocation2 + $0x158] sm:$0xff] %vm3762, %v4003
        %4037 = vst.msk [vmem:[#allocation2 + $0x170] sm:$0xff] %vm3762, %v4005
        %4054 = vrot.lane.b32.xlu0 %v3634, 96
        %v4055 = vpop.permute.xlu0 %4054
        %4056 = vrot.lane.b32.xlu0 %v3635, 96
        %v4057 = vpop.permute.xlu0 %4056
        %4058 = vrot.lane.b32.xlu0 %v3636, 96
        %v4059 = vpop.permute.xlu0 %4058
        %4060 = vrot.lane.b32.xlu0 %v3637, 96
        %v4061 = vpop.permute.xlu0 %4060
        %4062 = vrot.lane.b32.xlu0 %v3638, 96
        %v4063 = vpop.permute.xlu0 %4062
        %4064 = vrot.lane.b32.xlu0 %v3639, 96
        %v4065 = vpop.permute.xlu0 %4064
        %4066 = vrot.lane.b32.xlu0 %v3640, 96
        %v4067 = vpop.permute.xlu0 %4066
        %4068 = vrot.lane.b32.xlu0 %v3641, 96
        %v4069 = vpop.permute.xlu0 %4068
        %4070 = vrot.lane.b32.xlu0 %v3642, 96
        %v4071 = vpop.permute.xlu0 %4070
        %4072 = vrot.lane.b32.xlu0 %v3643, 96
        %v4073 = vpop.permute.xlu0 %4072
        %4074 = vrot.lane.b32.xlu0 %v3644, 96
        %v4075 = vpop.permute.xlu0 %4074
        %4076 = vrot.lane.b32.xlu0 %v3645, 96
        %v4077 = vpop.permute.xlu0 %4076
        %4078 = vrot.lane.b32.xlu0 %v3646, 96
        %v4079 = vpop.permute.xlu0 %4078
        %4080 = vrot.lane.b32.xlu0 %v3647, 96
        %v4081 = vpop.permute.xlu0 %4080
        %4082 = vrot.lane.b32.xlu0 %v3648, 96
        %v4083 = vpop.permute.xlu0 %4082
        %4084 = vrot.lane.b32.xlu0 %v3649, 96
        %v4085 = vpop.permute.xlu0 %4084
        %4102 = vst.msk [vmem:[#allocation2 + $0x8] sm:$0xff] %vm3843, %v4055
        %4103 = vst.msk [vmem:[#allocation2 + $0x20] sm:$0xff] %vm3843, %v4057
        %4104 = vst.msk [vmem:[#allocation2 + $0x38] sm:$0xff] %vm3843, %v4059
        %4105 = vst.msk [vmem:[#allocation2 + $0x50] sm:$0xff] %vm3843, %v4061
        %4106 = vst.msk [vmem:[#allocation2 + $0x68] sm:$0xff] %vm3843, %v4063
        %4107 = vst.msk [vmem:[#allocation2 + $0x80] sm:$0xff] %vm3843, %v4065
        %4108 = vst.msk [vmem:[#allocation2 + $0x98] sm:$0xff] %vm3843, %v4067
        %4109 = vst.msk [vmem:[#allocation2 + $0xb0] sm:$0xff] %vm3843, %v4069
        %4110 = vst.msk [vmem:[#allocation2 + $0xc8] sm:$0xff] %vm3843, %v4071
        %4111 = vst.msk [vmem:[#allocation2 + $0xe0] sm:$0xff] %vm3843, %v4073
        %4112 = vst.msk [vmem:[#allocation2 + $0xf8] sm:$0xff] %vm3843, %v4075
        %4113 = vst.msk [vmem:[#allocation2 + $0x110] sm:$0xff] %vm3843, %v4077
        %4114 = vst.msk [vmem:[#allocation2 + $0x128] sm:$0xff] %vm3843, %v4079
        %4115 = vst.msk [vmem:[#allocation2 + $0x140] sm:$0xff] %vm3843, %v4081
        %4116 = vst.msk [vmem:[#allocation2 + $0x158] sm:$0xff] %vm3843, %v4083
        %4117 = vst.msk [vmem:[#allocation2 + $0x170] sm:$0xff] %vm3843, %v4085
        %4118 = vst.msk [vmem:[#allocation2 + $0x8] sm:$0xff] %vm3860, %v3650
        %4119 = vst.msk [vmem:[#allocation2 + $0x20] sm:$0xff] %vm3860, %v3651
        %4120 = vst.msk [vmem:[#allocation2 + $0x38] sm:$0xff] %vm3860, %v3652
        %4121 = vst.msk [vmem:[#allocation2 + $0x50] sm:$0xff] %vm3860, %v3653
        %4122 = vst.msk [vmem:[#allocation2 + $0x68] sm:$0xff] %vm3860, %v3654
        %4123 = vst.msk [vmem:[#allocation2 + $0x80] sm:$0xff] %vm3860, %v3655
        %4124 = vst.msk [vmem:[#allocation2 + $0x98] sm:$0xff] %vm3860, %v3656
        %4125 = vst.msk [vmem:[#allocation2 + $0xb0] sm:$0xff] %vm3860, %v3657
        %4126 = vst.msk [vmem:[#allocation2 + $0xc8] sm:$0xff] %vm3860, %v3658
        %4127 = vst.msk [vmem:[#allocation2 + $0xe0] sm:$0xff] %vm3860, %v3659
        %4128 = vst.msk [vmem:[#allocation2 + $0xf8] sm:$0xff] %vm3860, %v3660
        %4129 = vst.msk [vmem:[#allocation2 + $0x110] sm:$0xff] %vm3860, %v3661
        %4130 = vst.msk [vmem:[#allocation2 + $0x128] sm:$0xff] %vm3860, %v3662
        %4131 = vst.msk [vmem:[#allocation2 + $0x140] sm:$0xff] %vm3860, %v3663
        %4132 = vst.msk [vmem:[#allocation2 + $0x158] sm:$0xff] %vm3860, %v3664
        %4133 = vst.msk [vmem:[#allocation2 + $0x170] sm:$0xff] %vm3860, %v3665
        %4150 = vrot.lane.b32.xlu0 %v3666, 32
        %v4151 = vpop.permute.xlu0 %4150
        %4152 = vrot.lane.b32.xlu0 %v3667, 32
        %v4153 = vpop.permute.xlu0 %4152
        %4154 = vrot.lane.b32.xlu0 %v3668, 32
        %v4155 = vpop.permute.xlu0 %4154
        %4156 = vrot.lane.b32.xlu0 %v3669, 32
        %v4157 = vpop.permute.xlu0 %4156
        %4158 = vrot.lane.b32.xlu0 %v3670, 32
        %v4159 = vpop.permute.xlu0 %4158
        %4160 = vrot.lane.b32.xlu0 %v3671, 32
        %v4161 = vpop.permute.xlu0 %4160
        %4162 = vrot.lane.b32.xlu0 %v3672, 32
        %v4163 = vpop.permute.xlu0 %4162
        %4164 = vrot.lane.b32.xlu0 %v3673, 32
        %v4165 = vpop.permute.xlu0 %4164
        %4166 = vrot.lane.b32.xlu0 %v3674, 32
        %v4167 = vpop.permute.xlu0 %4166
        %4168 = vrot.lane.b32.xlu0 %v3675, 32
        %v4169 = vpop.permute.xlu0 %4168
        %4170 = vrot.lane.b32.xlu0 %v3676, 32
        %v4171 = vpop.permute.xlu0 %4170
        %4172 = vrot.lane.b32.xlu0 %v3677, 32
        %v4173 = vpop.permute.xlu0 %4172
        %4174 = vrot.lane.b32.xlu0 %v3678, 32
        %v4175 = vpop.permute.xlu0 %4174
        %4176 = vrot.lane.b32.xlu0 %v3679, 32
        %v4177 = vpop.permute.xlu0 %4176
        %4178 = vrot.lane.b32.xlu0 %v3680, 32
        %v4179 = vpop.permute.xlu0 %4178
        %4180 = vrot.lane.b32.xlu0 %v3681, 32
        %v4181 = vpop.permute.xlu0 %4180
        %4198 = vst.msk [vmem:[#allocation2 + $0x8] sm:$0xff] %vm3941, %v4151
        %4199 = vst.msk [vmem:[#allocation2 + $0x20] sm:$0xff] %vm3941, %v4153
        %4200 = vst.msk [vmem:[#allocation2 + $0x38] sm:$0xff] %vm3941, %v4155
        %4201 = vst.msk [vmem:[#allocation2 + $0x50] sm:$0xff] %vm3941, %v4157
        %4202 = vst.msk [vmem:[#allocation2 + $0x68] sm:$0xff] %vm3941, %v4159
        %4203 = vst.msk [vmem:[#allocation2 + $0x80] sm:$0xff] %vm3941, %v4161
        %4204 = vst.msk [vmem:[#allocation2 + $0x98] sm:$0xff] %vm3941, %v4163
        %4205 = vst.msk [vmem:[#allocation2 + $0xb0] sm:$0xff] %vm3941, %v4165
        %4206 = vst.msk [vmem:[#allocation2 + $0xc8] sm:$0xff] %vm3941, %v4167
        %4207 = vst.msk [vmem:[#allocation2 + $0xe0] sm:$0xff] %vm3941, %v4169
        %4208 = vst.msk [vmem:[#allocation2 + $0xf8] sm:$0xff] %vm3941, %v4171
        %4209 = vst.msk [vmem:[#allocation2 + $0x110] sm:$0xff] %vm3941, %v4173
        %4210 = vst.msk [vmem:[#allocation2 + $0x128] sm:$0xff] %vm3941, %v4175
        %4211 = vst.msk [vmem:[#allocation2 + $0x140] sm:$0xff] %vm3941, %v4177
        %4212 = vst.msk [vmem:[#allocation2 + $0x158] sm:$0xff] %vm3941, %v4179
        %4213 = vst.msk [vmem:[#allocation2 + $0x170] sm:$0xff] %vm3941, %v4181
        %4230 = vrot.lane.b32.xlu0 %v3682, 64
        %v4231 = vpop.permute.xlu0 %4230
        %4232 = vrot.lane.b32.xlu0 %v3683, 64
        %v4233 = vpop.permute.xlu0 %4232
        %4234 = vrot.lane.b32.xlu0 %v3684, 64
        %v4235 = vpop.permute.xlu0 %4234
        %4236 = vrot.lane.b32.xlu0 %v3685, 64
        %v4237 = vpop.permute.xlu0 %4236
        %4238 = vrot.lane.b32.xlu0 %v3686, 64
        %v4239 = vpop.permute.xlu0 %4238
        %4240 = vrot.lane.b32.xlu0 %v3687, 64
        %v4241 = vpop.permute.xlu0 %4240
        %4242 = vrot.lane.b32.xlu0 %v3688, 64
        %v4243 = vpop.permute.xlu0 %4242
        %4244 = vrot.lane.b32.xlu0 %v3689, 64
        %v4245 = vpop.permute.xlu0 %4244
        %4246 = vrot.lane.b32.xlu0 %v3690, 64
        %v4247 = vpop.permute.xlu0 %4246
        %4248 = vrot.lane.b32.xlu0 %v3691, 64
        %v4249 = vpop.permute.xlu0 %4248
        %4250 = vrot.lane.b32.xlu0 %v3692, 64
        %v4251 = vpop.permute.xlu0 %4250
        %4252 = vrot.lane.b32.xlu0 %v3693, 64
        %v4253 = vpop.permute.xlu0 %4252
        %4254 = vrot.lane.b32.xlu0 %v3694, 64
        %v4255 = vpop.permute.xlu0 %4254
        %4256 = vrot.lane.b32.xlu0 %v3695, 64
        %v4257 = vpop.permute.xlu0 %4256
        %4258 = vrot.lane.b32.xlu0 %v3696, 64
        %v4259 = vpop.permute.xlu0 %4258
        %4260 = vrot.lane.b32.xlu0 %v3697, 64
        %v4261 = vpop.permute.xlu0 %4260
        %4278 = vst.msk [vmem:[#allocation2 + $0x10] sm:$0xff] %vm3762, %v4231
        %4279 = vst.msk [vmem:[#allocation2 + $0x28] sm:$0xff] %vm3762, %v4233
        %4280 = vst.msk [vmem:[#allocation2 + $0x40] sm:$0xff] %vm3762, %v4235
        %4281 = vst.msk [vmem:[#allocation2 + $0x58] sm:$0xff] %vm3762, %v4237
        %4282 = vst.msk [vmem:[#allocation2 + $0x70] sm:$0xff] %vm3762, %v4239
        %4283 = vst.msk [vmem:[#allocation2 + $0x88] sm:$0xff] %vm3762, %v4241
        %4284 = vst.msk [vmem:[#allocation2 + $0xa0] sm:$0xff] %vm3762, %v4243
        %4285 = vst.msk [vmem:[#allocation2 + $0xb8] sm:$0xff] %vm3762, %v4245
        %4286 = vst.msk [vmem:[#allocation2 + $0xd0] sm:$0xff] %vm3762, %v4247
        %4287 = vst.msk [vmem:[#allocation2 + $0xe8] sm:$0xff] %vm3762, %v4249
        %4288 = vst.msk [vmem:[#allocation2 + $0x100] sm:$0xff] %vm3762, %v4251
        %4289 = vst.msk [vmem:[#allocation2 + $0x118] sm:$0xff] %vm3762, %v4253
        %4290 = vst.msk [vmem:[#allocation2 + $0x130] sm:$0xff] %vm3762, %v4255
        %4291 = vst.msk [vmem:[#allocation2 + $0x148] sm:$0xff] %vm3762, %v4257
        %4292 = vst.msk [vmem:[#allocation2 + $0x160] sm:$0xff] %vm3762, %v4259
        %4293 = vst.msk [vmem:[#allocation2 + $0x178] sm:$0xff] %vm3762, %v4261
        %v4294 = vld [vmem:[#allocation2] sm:$0xff]
        %v4295 = vld [vmem:[#allocation2 + $0x8] sm:$0xff]
        %v4296 = vld [vmem:[#allocation2 + $0x10] sm:$0xff]
        %v4297 = vld [vmem:[#allocation2 + $0x18] sm:$0xff]
        %v4298 = vld [vmem:[#allocation2 + $0x20] sm:$0xff]
        %v4299 = vld [vmem:[#allocation2 + $0x28] sm:$0xff]
        %v4300 = vld [vmem:[#allocation2 + $0x30] sm:$0xff]
        %v4301 = vld [vmem:[#allocation2 + $0x38] sm:$0xff]
        %v4302 = vld [vmem:[#allocation2 + $0x40] sm:$0xff]
        %v4303 = vld [vmem:[#allocation2 + $0x48] sm:$0xff]
        %v4304 = vld [vmem:[#allocation2 + $0x50] sm:$0xff]
        %v4305 = vld [vmem:[#allocation2 + $0x58] sm:$0xff]
        %v4306 = vld [vmem:[#allocation2 + $0x60] sm:$0xff]
        %v4307 = vld [vmem:[#allocation2 + $0x68] sm:$0xff]
        %v4308 = vld [vmem:[#allocation2 + $0x70] sm:$0xff]
        %v4309 = vld [vmem:[#allocation2 + $0x78] sm:$0xff]
        %v4310 = vld [vmem:[#allocation2 + $0x80] sm:$0xff]
        %v4311 = vld [vmem:[#allocation2 + $0x88] sm:$0xff]
        %v4312 = vld [vmem:[#allocation2 + $0x90] sm:$0xff]
        %v4313 = vld [vmem:[#allocation2 + $0x98] sm:$0xff]
        %v4314 = vld [vmem:[#allocation2 + $0xa0] sm:$0xff]
        %v4315 = vld [vmem:[#allocation2 + $0xa8] sm:$0xff]
        %v4316 = vld [vmem:[#allocation2 + $0xb0] sm:$0xff]
        %v4317 = vld [vmem:[#allocation2 + $0xb8] sm:$0xff]
        %v4318 = vld [vmem:[#allocation2 + $0xc0] sm:$0xff]
        %v4319 = vld [vmem:[#allocation2 + $0xc8] sm:$0xff]
        %v4320 = vld [vmem:[#allocation2 + $0xd0] sm:$0xff]
        %v4321 = vld [vmem:[#allocation2 + $0xd8] sm:$0xff]
        %v4322 = vld [vmem:[#allocation2 + $0xe0] sm:$0xff]
        %v4323 = vld [vmem:[#allocation2 + $0xe8] sm:$0xff]
        %v4324 = vld [vmem:[#allocation2 + $0xf0] sm:$0xff]
        %v4325 = vld [vmem:[#allocation2 + $0xf8] sm:$0xff]
        %v4326 = vld [vmem:[#allocation2 + $0x100] sm:$0xff]
        %v4327 = vld [vmem:[#allocation2 + $0x108] sm:$0xff]
        %v4328 = vld [vmem:[#allocation2 + $0x110] sm:$0xff]
        %v4329 = vld [vmem:[#allocation2 + $0x118] sm:$0xff]
        %v4330 = vld [vmem:[#allocation2 + $0x120] sm:$0xff]
        %v4331 = vld [vmem:[#allocation2 + $0x128] sm:$0xff]
        %v4332 = vld [vmem:[#allocation2 + $0x130] sm:$0xff]
        %v4333 = vld [vmem:[#allocation2 + $0x138] sm:$0xff]
        %v4334 = vld [vmem:[#allocation2 + $0x140] sm:$0xff]
        %v4335 = vld [vmem:[#allocation2 + $0x148] sm:$0xff]
        %v4336 = vld [vmem:[#allocation2 + $0x150] sm:$0xff]
        %v4337 = vld [vmem:[#allocation2 + $0x158] sm:$0xff]
        %v4338 = vld [vmem:[#allocation2 + $0x160] sm:$0xff]
        %v4339 = vld [vmem:[#allocation2 + $0x168] sm:$0xff]
        %v4340 = vld [vmem:[#allocation2 + $0x170] sm:$0xff]
        %v4341 = vld [vmem:[#allocation2 + $0x178] sm:$0xff]
        %v4342 = vld [vmem:[%s2] sm:$0xff]
        %v4343 = vld [vmem:[%s2 + $0x8] sm:$0xff]
        %v4344 = vld [vmem:[%s2 + $0x10] sm:$0xff]
        %v4345 = vld [vmem:[%s2 + $0x18] sm:$0xff]
        %v4346 = vld [vmem:[%s2 + $0x20] sm:$0xff]
        %v4347 = vld [vmem:[%s2 + $0x28] sm:$0xff]
        %v4348 = vld [vmem:[%s2 + $0x30] sm:$0xff]
        %v4349 = vld [vmem:[%s2 + $0x38] sm:$0xff]
        %v4350 = vld [vmem:[%s2 + $0x40] sm:$0xff]
        %v4351 = vld [vmem:[%s2 + $0x48] sm:$0xff]
        %v4352 = vld [vmem:[%s2 + $0x50] sm:$0xff]
        %v4353 = vld [vmem:[%s2 + $0x58] sm:$0xff]
        %v4354 = vld [vmem:[%s2 + $0x60] sm:$0xff]
        %v4355 = vld [vmem:[%s2 + $0x68] sm:$0xff]
        %v4356 = vld [vmem:[%s2 + $0x70] sm:$0xff]
        %v4357 = vld [vmem:[%s2 + $0x78] sm:$0xff]
        %v4358 = vld [vmem:[%s2 + $0x80] sm:$0xff]
        %v4359 = vld [vmem:[%s2 + $0x88] sm:$0xff]
        %v4360 = vld [vmem:[%s2 + $0x90] sm:$0xff]
        %v4361 = vld [vmem:[%s2 + $0x98] sm:$0xff]
        %v4362 = vld [vmem:[%s2 + $0xa0] sm:$0xff]
        %v4363 = vld [vmem:[%s2 + $0xa8] sm:$0xff]
        %v4364 = vld [vmem:[%s2 + $0xb0] sm:$0xff]
        %v4365 = vld [vmem:[%s2 + $0xb8] sm:$0xff]
        %v4366 = vld [vmem:[%s2 + $0xc0] sm:$0xff]
        %v4367 = vld [vmem:[%s2 + $0xc8] sm:$0xff]
        %v4368 = vld [vmem:[%s2 + $0xd0] sm:$0xff]
        %v4369 = vld [vmem:[%s2 + $0xd8] sm:$0xff]
        %v4370 = vld [vmem:[%s2 + $0xe0] sm:$0xff]
        %v4371 = vld [vmem:[%s2 + $0xe8] sm:$0xff]
        %v4372 = vld [vmem:[%s2 + $0xf0] sm:$0xff]
        %v4373 = vld [vmem:[%s2 + $0xf8] sm:$0xff]
        %v4374 = vld [vmem:[%s2 + $0x100] sm:$0xff]
        %v4375 = vld [vmem:[%s2 + $0x108] sm:$0xff]
        %v4376 = vld [vmem:[%s2 + $0x110] sm:$0xff]
        %v4377 = vld [vmem:[%s2 + $0x118] sm:$0xff]
        %v4378 = vld [vmem:[%s3] sm:$0x1]
        %v4380 = vperm.slane %v4378, 0
        %v4383 = vsel %vm3762, %v4296, 0
        %v4386 = vsel %vm3762, %v4299, 0
        %v4389 = vsel %vm3762, %v4302, 0
        %v4392 = vsel %vm3762, %v4305, 0
        %v4395 = vsel %vm3762, %v4308, 0
        %v4398 = vsel %vm3762, %v4311, 0
        %v4401 = vsel %vm3762, %v4314, 0
        %v4404 = vsel %vm3762, %v4317, 0
        %v4407 = vsel %vm3762, %v4320, 0
        %v4410 = vsel %vm3762, %v4323, 0
        %v4413 = vsel %vm3762, %v4326, 0
        %v4416 = vsel %vm3762, %v4329, 0
        %v4419 = vsel %vm3762, %v4332, 0
        %v4422 = vsel %vm3762, %v4335, 0
        %v4425 = vsel %vm3762, %v4338, 0
        %v4428 = vsel %vm3762, %v4341, 0
        %4430 = vmatpush.msra.mxu0 %v4357
        %4431 = vmatpush.msra.mxu0 %v4356
        %4432 = vmatpush.msra.mxu0 %v4355
        %4433 = vmatpush.msra.mxu0 %v4354
        %4434 = vmatpush.msra.mxu0 %v4353
        %4435 = vmatpush.msra.mxu0 %v4352
        %4436 = vmatpush.msra.mxu0 %v4351
        %4437 = vmatpush.msra.mxu0 %v4350
        %4438 = vmatpush.msra.mxu0 %v4349
        %4439 = vmatpush.msra.mxu0 %v4348
        %4440 = vmatpush.msra.mxu0 %v4347
        %4441 = vmatpush.msra.mxu0 %v4346
        %4442 = vmatpush.msra.mxu0 %v4345
        %4443 = vmatpush.msra.mxu0 %v4344
        %4444 = vmatpush.msra.mxu0 %v4343
        %4445 = vmatpush.msra.mxu0 %v4342
        %4446 = vmatmul.f32.gmra.mxu0 %v4294
        %v4447 = vpop.f32.mrf.mxu0
        %v4448 = vadd.f32 %v4380, %v4447
        %4449 = vmatmul.f32.gmra.mxu0 %v4297
        %v4450 = vpop.f32.mrf.mxu0
        %v4451 = vadd.f32 %v4380, %v4450
        %4452 = vmatmul.f32.gmra.mxu0 %v4300
        %v4453 = vpop.f32.mrf.mxu0
        %v4454 = vadd.f32 %v4380, %v4453
        %4455 = vmatmul.f32.gmra.mxu0 %v4303
        %v4456 = vpop.f32.mrf.mxu0
        %v4457 = vadd.f32 %v4380, %v4456
        %4458 = vmatmul.f32.gmra.mxu0 %v4306
        %v4459 = vpop.f32.mrf.mxu0
        %v4460 = vadd.f32 %v4380, %v4459
        %4461 = vmatmul.f32.gmra.mxu0 %v4309
        %v4462 = vpop.f32.mrf.mxu0
        %v4463 = vadd.f32 %v4380, %v4462
        %4464 = vmatmul.f32.gmra.mxu0 %v4312
        %v4465 = vpop.f32.mrf.mxu0
        %v4466 = vadd.f32 %v4380, %v4465
        %4467 = vmatmul.f32.gmra.mxu0 %v4315
        %v4468 = vpop.f32.mrf.mxu0
        %v4469 = vadd.f32 %v4380, %v4468
        %4470 = vmatmul.f32.gmra.mxu0 %v4318
        %v4471 = vpop.f32.mrf.mxu0
        %v4472 = vadd.f32 %v4380, %v4471
        %4473 = vmatmul.f32.gmra.mxu0 %v4321
        %v4474 = vpop.f32.mrf.mxu0
        %v4475 = vadd.f32 %v4380, %v4474
        %4476 = vmatmul.f32.gmra.mxu0 %v4324
        %v4477 = vpop.f32.mrf.mxu0
        %v4478 = vadd.f32 %v4380, %v4477
        %4479 = vmatmul.f32.gmra.mxu0 %v4327
        %v4480 = vpop.f32.mrf.mxu0
        %v4481 = vadd.f32 %v4380, %v4480
        %4482 = vmatmul.f32.gmra.mxu0 %v4330
        %v4483 = vpop.f32.mrf.mxu0
        %v4484 = vadd.f32 %v4380, %v4483
        %4485 = vmatmul.f32.gmra.mxu0 %v4333
        %v4486 = vpop.f32.mrf.mxu0
        %v4487 = vadd.f32 %v4380, %v4486
        %4488 = vmatmul.f32.gmra.mxu0 %v4336
        %v4489 = vpop.f32.mrf.mxu0
        %v4490 = vadd.f32 %v4380, %v4489
        %4491 = vmatmul.f32.gmra.mxu0 %v4339
        %v4492 = vpop.f32.mrf.mxu0
        %v4493 = vadd.f32 %v4380, %v4492
        %4494 = vdwg.mxu0
        %4495 = vmatpush.msra.mxu0 %v4373
        %4496 = vmatpush.msra.mxu0 %v4372
        %4497 = vmatpush.msra.mxu0 %v4371
        %4498 = vmatpush.msra.mxu0 %v4370
        %4499 = vmatpush.msra.mxu0 %v4369
        %4500 = vmatpush.msra.mxu0 %v4368
        %4501 = vmatpush.msra.mxu0 %v4367
        %4502 = vmatpush.msra.mxu0 %v4366
        %4503 = vmatpush.msra.mxu0 %v4365
        %4504 = vmatpush.msra.mxu0 %v4364
        %4505 = vmatpush.msra.mxu0 %v4363
        %4506 = vmatpush.msra.mxu0 %v4362
        %4507 = vmatpush.msra.mxu0 %v4361
        %4508 = vmatpush.msra.mxu0 %v4360
        %4509 = vmatpush.msra.mxu0 %v4359
        %4510 = vmatpush.msra.mxu0 %v4358
        %4511 = vmatmul.f32.gmra.mxu0 %v4295
        %v4512 = vpop.f32.mrf.mxu0
        %v4513 = vadd.f32 %v4448, %v4512
        %4514 = vmatmul.f32.gmra.mxu0 %v4298
        %v4515 = vpop.f32.mrf.mxu0
        %v4516 = vadd.f32 %v4451, %v4515
        %4517 = vmatmul.f32.gmra.mxu0 %v4301
        %v4518 = vpop.f32.mrf.mxu0
        %v4519 = vadd.f32 %v4454, %v4518
        %4520 = vmatmul.f32.gmra.mxu0 %v4304
        %v4521 = vpop.f32.mrf.mxu0
        %v4522 = vadd.f32 %v4457, %v4521
        %4523 = vmatmul.f32.gmra.mxu0 %v4307
        %v4524 = vpop.f32.mrf.mxu0
        %v4525 = vadd.f32 %v4460, %v4524
        %4526 = vmatmul.f32.gmra.mxu0 %v4310
        %v4527 = vpop.f32.mrf.mxu0
        %v4528 = vadd.f32 %v4463, %v4527
        %4529 = vmatmul.f32.gmra.mxu0 %v4313
        %v4530 = vpop.f32.mrf.mxu0
        %v4531 = vadd.f32 %v4466, %v4530
        %4532 = vmatmul.f32.gmra.mxu0 %v4316
        %v4533 = vpop.f32.mrf.mxu0
        %v4534 = vadd.f32 %v4469, %v4533
        %4535 = vmatmul.f32.gmra.mxu0 %v4319
        %v4536 = vpop.f32.mrf.mxu0
        %v4537 = vadd.f32 %v4472, %v4536
        %4538 = vmatmul.f32.gmra.mxu0 %v4322
        %v4539 = vpop.f32.mrf.mxu0
        %v4540 = vadd.f32 %v4475, %v4539
        %4541 = vmatmul.f32.gmra.mxu0 %v4325
        %v4542 = vpop.f32.mrf.mxu0
        %v4543 = vadd.f32 %v4478, %v4542
        %4544 = vmatmul.f32.gmra.mxu0 %v4328
        %v4545 = vpop.f32.mrf.mxu0
        %v4546 = vadd.f32 %v4481, %v4545
        %4547 = vmatmul.f32.gmra.mxu0 %v4331
        %v4548 = vpop.f32.mrf.mxu0
        %v4549 = vadd.f32 %v4484, %v4548
        %4550 = vmatmul.f32.gmra.mxu0 %v4334
        %v4551 = vpop.f32.mrf.mxu0
        %v4552 = vadd.f32 %v4487, %v4551
        %4553 = vmatmul.f32.gmra.mxu0 %v4337
        %v4554 = vpop.f32.mrf.mxu0
        %v4555 = vadd.f32 %v4490, %v4554
        %4556 = vmatmul.f32.gmra.mxu0 %v4340
        %v4557 = vpop.f32.mrf.mxu0
        %v4558 = vadd.f32 %v4493, %v4557
        %4559 = vdwg.mxu0
        %4560 = vmatpush.msra.mxu0 0.0
        %4561 = vmatpush.msra.mxu0 0.0
        %4562 = vmatpush.msra.mxu0 0.0
        %4563 = vmatpush.msra.mxu0 0.0
        %4564 = vmatpush.msra.mxu0 0.0
        %4565 = vmatpush.msra.mxu0 0.0
        %4566 = vmatpush.msra.mxu0 0.0
        %4567 = vmatpush.msra.mxu0 0.0
        %4568 = vmatpush.msra.mxu0 0.0
        %4569 = vmatpush.msra.mxu0 0.0
        %4570 = vmatpush.msra.mxu0 0.0
        %4571 = vmatpush.msra.mxu0 0.0
        %4572 = vmatpush.msra.mxu0 %v4377
        %4573 = vmatpush.msra.mxu0 %v4376
        %4574 = vmatpush.msra.mxu0 %v4375
        %4575 = vmatpush.msra.mxu0 %v4374
        %4576 = vmatmul.f32.gmra.mxu0 %v4383
        %v4577 = vpop.f32.mrf.mxu0
        %v4578 = vadd.f32 %v4513, %v4577
        %4579 = vmatmul.f32.gmra.mxu0 %v4386
        %v4580 = vpop.f32.mrf.mxu0
        %v4581 = vadd.f32 %v4516, %v4580
        %4582 = vmatmul.f32.gmra.mxu0 %v4389
        %v4583 = vpop.f32.mrf.mxu0
        %v4584 = vadd.f32 %v4519, %v4583
        %4585 = vmatmul.f32.gmra.mxu0 %v4392
        %v4586 = vpop.f32.mrf.mxu0
        %v4587 = vadd.f32 %v4522, %v4586
        %4588 = vmatmul.f32.gmra.mxu0 %v4395
        %v4589 = vpop.f32.mrf.mxu0
        %v4590 = vadd.f32 %v4525, %v4589
        %4591 = vmatmul.f32.gmra.mxu0 %v4398
        %v4592 = vpop.f32.mrf.mxu0
        %v4593 = vadd.f32 %v4528, %v4592
        %4594 = vmatmul.f32.gmra.mxu0 %v4401
        %v4595 = vpop.f32.mrf.mxu0
        %v4596 = vadd.f32 %v4531, %v4595
        %4597 = vmatmul.f32.gmra.mxu0 %v4404
        %v4598 = vpop.f32.mrf.mxu0
        %v4599 = vadd.f32 %v4534, %v4598
        %4600 = vmatmul.f32.gmra.mxu0 %v4407
        %v4601 = vpop.f32.mrf.mxu0
        %v4602 = vadd.f32 %v4537, %v4601
        %4603 = vmatmul.f32.gmra.mxu0 %v4410
        %v4604 = vpop.f32.mrf.mxu0
        %v4605 = vadd.f32 %v4540, %v4604
        %4606 = vmatmul.f32.gmra.mxu0 %v4413
        %v4607 = vpop.f32.mrf.mxu0
        %v4608 = vadd.f32 %v4543, %v4607
        %4609 = vmatmul.f32.gmra.mxu0 %v4416
        %v4610 = vpop.f32.mrf.mxu0
        %v4611 = vadd.f32 %v4546, %v4610
        %4612 = vmatmul.f32.gmra.mxu0 %v4419
        %v4613 = vpop.f32.mrf.mxu0
        %v4614 = vadd.f32 %v4549, %v4613
        %4615 = vmatmul.f32.gmra.mxu0 %v4422
        %v4616 = vpop.f32.mrf.mxu0
        %v4617 = vadd.f32 %v4552, %v4616
        %4618 = vmatmul.f32.gmra.mxu0 %v4425
        %v4619 = vpop.f32.mrf.mxu0
        %v4620 = vadd.f32 %v4555, %v4619
        %4621 = vmatmul.f32.gmra.mxu0 %v4428
        %v4622 = vpop.f32.mrf.mxu0
        %v4623 = vadd.f32 %v4558, %v4622
        %4624 = vdwg.mxu0
        %vm4625 = vcmp.gt.f32.partialorder %v4578, 0.0
        %vm4626 = vcmp.gt.f32.partialorder %v4581, 0.0
        %vm4627 = vcmp.gt.f32.partialorder %v4584, 0.0
        %vm4628 = vcmp.gt.f32.partialorder %v4587, 0.0
        %vm4629 = vcmp.gt.f32.partialorder %v4590, 0.0
        %vm4630 = vcmp.gt.f32.partialorder %v4593, 0.0
        %vm4631 = vcmp.gt.f32.partialorder %v4596, 0.0
        %vm4632 = vcmp.gt.f32.partialorder %v4599, 0.0
        %vm4633 = vcmp.gt.f32.partialorder %v4602, 0.0
        %vm4634 = vcmp.gt.f32.partialorder %v4605, 0.0
        %vm4635 = vcmp.gt.f32.partialorder %v4608, 0.0
        %vm4636 = vcmp.gt.f32.partialorder %v4611, 0.0
        %vm4637 = vcmp.gt.f32.partialorder %v4614, 0.0
        %vm4638 = vcmp.gt.f32.partialorder %v4617, 0.0
        %vm4639 = vcmp.gt.f32.partialorder %v4620, 0.0
        %vm4640 = vcmp.gt.f32.partialorder %v4623, 0.0
        %v4641 = vmin.f32 %v4578, 0.0
        %v4642 = vmin.f32 %v4581, 0.0
        %v4643 = vmin.f32 %v4584, 0.0
        %v4644 = vmin.f32 %v4587, 0.0
        %v4645 = vmin.f32 %v4590, 0.0
        %v4646 = vmin.f32 %v4593, 0.0
        %v4647 = vmin.f32 %v4596, 0.0
        %v4648 = vmin.f32 %v4599, 0.0
        %v4649 = vmin.f32 %v4602, 0.0
        %v4650 = vmin.f32 %v4605, 0.0
        %v4651 = vmin.f32 %v4608, 0.0
        %v4652 = vmin.f32 %v4611, 0.0
        %v4653 = vmin.f32 %v4614, 0.0
        %v4654 = vmin.f32 %v4617, 0.0
        %v4655 = vmin.f32 %v4620, 0.0
        %v4656 = vmin.f32 %v4623, 0.0
        %v4657 = vmul.f32 %v4641, 1.442695
        %v4658 = vpow.pop %v4657
        %v4659 = vmul.f32 %v4642, 1.442695
        %v4660 = vpow.pop %v4659
        %v4661 = vmul.f32 %v4643, 1.442695
        %v4662 = vpow.pop %v4661
        %v4663 = vmul.f32 %v4644, 1.442695
        %v4664 = vpow.pop %v4663
        %v4665 = vmul.f32 %v4645, 1.442695
        %v4666 = vpow.pop %v4665
        %v4667 = vmul.f32 %v4646, 1.442695
        %v4668 = vpow.pop %v4667
        %v4669 = vmul.f32 %v4647, 1.442695
        %v4670 = vpow.pop %v4669
        %v4671 = vmul.f32 %v4648, 1.442695
        %v4672 = vpow.pop %v4671
        %v4673 = vmul.f32 %v4649, 1.442695
        %v4674 = vpow.pop %v4673
        %v4675 = vmul.f32 %v4650, 1.442695
        %v4676 = vpow.pop %v4675
        %v4677 = vmul.f32 %v4651, 1.442695
        %v4678 = vpow.pop %v4677
        %v4679 = vmul.f32 %v4652, 1.442695
        %v4680 = vpow.pop %v4679
        %v4681 = vmul.f32 %v4653, 1.442695
        %v4682 = vpow.pop %v4681
        %v4683 = vmul.f32 %v4654, 1.442695
        %v4684 = vpow.pop %v4683
        %v4685 = vmul.f32 %v4655, 1.442695
        %v4686 = vpow.pop %v4685
        %v4687 = vmul.f32 %v4656, 1.442695
        %v4688 = vpow.pop %v4687
        %v4689 = vsub.f32 %v4658, 1.0
        %v4690 = vsub.f32 %v4660, 1.0
        %v4691 = vsub.f32 %v4662, 1.0
        %v4692 = vsub.f32 %v4664, 1.0
        %v4693 = vsub.f32 %v4666, 1.0
        %v4694 = vsub.f32 %v4668, 1.0
        %v4695 = vsub.f32 %v4670, 1.0
        %v4696 = vsub.f32 %v4672, 1.0
        %v4697 = vsub.f32 %v4674, 1.0
        %v4698 = vsub.f32 %v4676, 1.0
        %v4699 = vsub.f32 %v4678, 1.0
        %v4700 = vsub.f32 %v4680, 1.0
        %v4701 = vsub.f32 %v4682, 1.0
        %v4702 = vsub.f32 %v4684, 1.0
        %v4703 = vsub.f32 %v4686, 1.0
        %v4704 = vsub.f32 %v4688, 1.0
        %v4705 = vsel %vm4625, %v4578, %v4689
        %v4706 = vsel %vm4626, %v4581, %v4690
        %v4707 = vsel %vm4627, %v4584, %v4691
        %v4708 = vsel %vm4628, %v4587, %v4692
        %v4709 = vsel %vm4629, %v4590, %v4693
        %v4710 = vsel %vm4630, %v4593, %v4694
        %v4711 = vsel %vm4631, %v4596, %v4695
        %v4712 = vsel %vm4632, %v4599, %v4696
        %v4713 = vsel %vm4633, %v4602, %v4697
        %v4714 = vsel %vm4634, %v4605, %v4698
        %v4715 = vsel %vm4635, %v4608, %v4699
        %v4716 = vsel %vm4636, %v4611, %v4700
        %v4717 = vsel %vm4637, %v4614, %v4701
        %v4718 = vsel %vm4638, %v4617, %v4702
        %v4719 = vsel %vm4639, %v4620, %v4703
        %v4720 = vsel %vm4640, %v4623, %v4704
        %v4721 = vld [vmem:[%s4] sm:$0xff]
        %v4722 = vld [vmem:[%s4 + $0x8] sm:$0xff]
        %v4723 = vld [vmem:[%s4 + $0x10] sm:$0xff]
        %v4724 = vld [vmem:[%s4 + $0x18] sm:$0xff]
        %v4725 = vld [vmem:[%s4 + $0x20] sm:$0xff]
        %v4726 = vld [vmem:[%s4 + $0x28] sm:$0xff]
        %v4727 = vld [vmem:[%s4 + $0x30] sm:$0xff]
        %v4728 = vld [vmem:[%s4 + $0x38] sm:$0xff]
        %v4729 = vld [vmem:[%s4 + $0x40] sm:$0xff]
        %v4730 = vld [vmem:[%s4 + $0x48] sm:$0xff]
        %v4731 = vld [vmem:[%s4 + $0x50] sm:$0xff]
        %v4732 = vld [vmem:[%s4 + $0x58] sm:$0xff]
        %v4733 = vld [vmem:[%s4 + $0x60] sm:$0xff]
        %v4734 = vld [vmem:[%s4 + $0x68] sm:$0xff]
        %v4735 = vld [vmem:[%s4 + $0x70] sm:$0xff]
        %v4736 = vld [vmem:[%s4 + $0x78] sm:$0xff]
        %v4737 = vadd.f32 %v4705, %v4721
        %v4738 = vadd.f32 %v4706, %v4722
        %v4739 = vadd.f32 %v4707, %v4723
        %v4740 = vadd.f32 %v4708, %v4724
        %v4741 = vadd.f32 %v4709, %v4725
        %v4742 = vadd.f32 %v4710, %v4726
        %v4743 = vadd.f32 %v4711, %v4727
        %v4744 = vadd.f32 %v4712, %v4728
        %v4745 = vadd.f32 %v4713, %v4729
        %v4746 = vadd.f32 %v4714, %v4730
        %v4747 = vadd.f32 %v4715, %v4731
        %v4748 = vadd.f32 %v4716, %v4732
        %v4749 = vadd.f32 %v4717, %v4733
        %v4750 = vadd.f32 %v4718, %v4734
        %v4751 = vadd.f32 %v4719, %v4735
        %v4752 = vadd.f32 %v4720, %v4736
        %vm4753 = vcmask 523264
        %4754 = vst.msk [vmem:[%s217] sm:$0xff] %vm4753, %v4737
        %4755 = vst.msk [vmem:[%s217 + $0x8] sm:$0xff] %vm4753, %v4738
        %4756 = vst.msk [vmem:[%s217 + $0x10] sm:$0xff] %vm4753, %v4739
        %4757 = vst.msk [vmem:[%s217 + $0x18] sm:$0xff] %vm4753, %v4740
        %4758 = vst.msk [vmem:[%s217 + $0x20] sm:$0xff] %vm4753, %v4741
        %4759 = vst.msk [vmem:[%s217 + $0x28] sm:$0xff] %vm4753, %v4742
        %4760 = vst.msk [vmem:[%s217 + $0x30] sm:$0xff] %vm4753, %v4743
        %4761 = vst.msk [vmem:[%s217 + $0x38] sm:$0xff] %vm4753, %v4744
        %4762 = vst.msk [vmem:[%s217 + $0x40] sm:$0xff] %vm4753, %v4745
        %4763 = vst.msk [vmem:[%s217 + $0x48] sm:$0xff] %vm4753, %v4746
        %4764 = vst.msk [vmem:[%s217 + $0x50] sm:$0xff] %vm4753, %v4747
        %4765 = vst.msk [vmem:[%s217 + $0x58] sm:$0xff] %vm4753, %v4748
        %4766 = vst.msk [vmem:[%s217 + $0x60] sm:$0xff] %vm4753, %v4749
        %4767 = vst.msk [vmem:[%s217 + $0x68] sm:$0xff] %vm4753, %v4750
        %4768 = vst.msk [vmem:[%s217 + $0x70] sm:$0xff] %vm4753, %v4751
        %4769 = vst.msk [vmem:[%s217 + $0x78] sm:$0xff] %vm4753, %v4752
        %s4770 = sand.u32 %s137, 1
        %s4771 = scalar_lea.sflag [#allocation4], %s4770
        %s4772 = sand.u32 %s137, 1
        %s4773 = smul.addr %s4772, 128
        %s4774 = scalar_lea.vmem [#allocation3], %s4773
        // Predicated region
        $region41: #{patch_embedding_forward.1} parent=39 // pred_check
          %p4775 = pneg %p147
        $region42: #{patch_embedding_forward.1} parent=39 // pred_check_branch
          %4777 = sbr.rel (%p4775) target = $region44
        $region43: #{patch_embedding_forward.1} parent=39 // pred_region
          %4779 = vsyncadd %s4771, 0
          %s4780 = smul.addr %s19, 16
          %s4781 = smul.addr %s4780, 8
          %s4782 = scalar_lea.hbm %s5, %s4781
          %s4783 = sshll.u32 %s4774, 4
          %s4784 = int_to_ptr.vmem [resolvable:$true] %s4783
          %s4785 = sshll.u32 %s4782, 4
          %s4786 = int_to_ptr.hbm [resolvable:$true] %s4785
          %4791 = dma.vmem_to_hbm [thread:$0]  %s4784, 2048, %s4786, %s4771, 128, 128, 8
        $region44: #{patch_embedding_forward.1} parent=39 // pred_fallthru
          _
      $region40: #{patch_embedding_forward.1} parent=5 // pred_fallthru
        _
      %p4792 = scmp.le.s32.totalorder 2, %s14
      // Predicated region
      $region45: #{patch_embedding_forward.1} parent=5 // pred_check
        %p4793 = pneg %p4792
      $region46: #{patch_embedding_forward.1} parent=5 // pred_check_branch
        %4795 = sbr.rel (%p4793) target = $region48
      $region47: #{patch_embedding_forward.1} parent=5 // pred_region
        %s4796 = ssub.s32 %s14, 2
        // Predicated region
        $region49: #{patch_embedding_forward.1} parent=47 // pred_check
          %p4797 = pneg %p153
        $region50: #{patch_embedding_forward.1} parent=47 // pred_check_branch
          %4799 = sbr.rel (%p4797) target = $region52
        $region51: #{patch_embedding_forward.1} parent=47 // pred_region
          %s4800 = sand.u32 %s138, 1
          %s4801 = scalar_lea.sflag [#allocation4], %s4800
          %s4802 = sand.u32 %s138, 1
          %s4803 = smul.addr %s4802, 128
          %s4804 = scalar_lea.vmem [#allocation3], %s4803
          %4806 = dma.done %s4801, 2048
        $region52: #{patch_embedding_forward.1} parent=47 // pred_fallthru
          _
      $region48: #{patch_embedding_forward.1} parent=5 // pred_fallthru
        _
    $region6: #{patch_embedding_forward.1} parent=1 // loop_footer
      %s18 = sadd.s32 1, %s14
    $region7: #{patch_embedding_forward.1} parent=1 // loop_footer_branch
      %13 = sbr.rel target = $region3
    $region8: #{patch_embedding_forward.1} parent=1 // loop_exit
      _
    %4807 = vsyncpa [#allocation4], 1
    %s4808 = scalar_lea.sflag [#allocation4], 1
    %4809 = vsyncpa %s4808, 1

</llo_original>
